<compile_context>
chip_gen: v5e
topology: v5e:2x2
jax: 0.10.0
libtpu: 0.0.40
codegen_flags: <defaults>
</compile_context>

<pallas_src>
import functools

import jax
import jax.numpy as jnp
import numpy as np
from jax.experimental import pallas as pl
from jax.experimental.pallas import tpu as pltpu

NEG_SLOPE = 0.01  # F.leaky_relu default negative_slope


# ---------------------------------------------------------------------------
# Fused kernel: 6 x (reflect-pad 3x3 conv) with leaky_relu between them,
# activation kept resident in VMEM as a lane-dense (C, H*W) slab.
# ---------------------------------------------------------------------------
def _fused_multiconv_kernel(x_ref, w_ref, o_ref, padv_ref, cols_ref, *,
                            C, H, W, K, L):
    HW = H * W
    PADX = 1  # one spare lane on each side of the row-padded buffer

    # Per-pixel x-coordinate masks (loop invariant -> hoisted out of the loop).
    lane = jax.lax.broadcasted_iota(jnp.int32, (C, HW), 1)
    xcoord = lane % W
    col_first = xcoord == 0
    col_last = xcoord == (W - 1)

    # Zero once so the two spare edge lanes of padv are defined.
    padv_ref[...] = jnp.zeros(padv_ref.shape, padv_ref.dtype)

    a = x_ref[0]  # (C, HW) f32 activation for this batch element

    for l in range(L):
        # ---- reflect-pad along H (rows) into the flat padded buffer --------
        # padded row r (r = 0..H+1) lives at lanes [PADX + r*W, PADX + (r+1)*W)
        padv_ref[:, PADX + W:PADX + W + HW] = a                        # rows 1..H
        padv_ref[:, PADX:PADX + W] = a[:, W:2 * W]                     # top    = row 1
        padv_ref[:, PADX + (H + 1) * W:PADX + (H + 2) * W] = (
            a[:, (H - 2) * W:(H - 1) * W])                             # bottom = row H-2

        # ---- build im2col cols (C*K*K, HW) from shifted static slices ------
        # Tap (ky, kx) needs pad_row[y + ky][reflect(x + kx - 1)].  The
        # horizontal reflect only differs from a plain +-1 shift in column 0
        # (kx=0) / column W-1 (kx=2); fix those lanes with a select of the
        # opposite shift.
        for ky in range(K):
            base = PADX + ky * W
            s_m = padv_ref[:, base - 1:base - 1 + HW]   # shifted x-1
            s_0 = padv_ref[:, base:base + HW]           # shift  0
            s_p = padv_ref[:, base + 1:base + 1 + HW]   # shifted x+1
            slabs = (jnp.where(col_first, s_p, s_m),    # kx = 0
                     s_0,                               # kx = 1
                     jnp.where(col_last, s_m, s_p))     # kx = 2
            for kx, slab in enumerate(slabs):
                t = ky * K + kx
                cols_ref[t * C:(t + 1) * C, :] = slab

        # ---- one MXU matmul per conv: bf16 x bf16 -> f32 accumulation ------
        y = jnp.dot(w_ref[l], cols_ref[...].astype(jnp.bfloat16),
                    preferred_element_type=jnp.float32)

        # leaky_relu after every conv except the very last one (f32, VPU)
        if l < L - 1:
            y = jnp.where(y > 0, y, NEG_SLOPE * y)
        a = y

    o_ref[0] = a.astype(o_ref.dtype)


# ---------------------------------------------------------------------------
# Host wrapper: pack weights once, flatten spatial dims, one pallas_call.
# ---------------------------------------------------------------------------
def multi_conv_block_forward(x, weights):
    """Forward of MultiConvBlock (reflect padding, no bias, 3x3 kernels).

    x: (N, C, H, W) float32.  weights: list of (C, C, 3, 3) float32.
    """
    N, C, H, W = x.shape
    L = len(weights)
    K = weights[0].shape[-1]
    # TODO(synk): general (odd) kernel sizes and HW tiling for large images;
    # this kernel specializes to the module defaults (3x3, reflect, no bias)
    # and assumes one image's activations fit comfortably in VMEM.
    assert K == 3 and all(w.shape == (C, C, K, K) for w in weights)
    assert H >= 2 and W >= 2

    HW = H * W
    CKK = C * K * K

    # Pre-pack all conv weights once: (L, Cout, K*K*C) bf16, flatten order
    # (ky, kx, ci) to match the in-kernel cols row order t*C + ci.
    w_stack = jnp.stack(
        [w.transpose(0, 2, 3, 1).reshape(C, CKK) for w in weights]
    ).astype(jnp.bfloat16)

    x_flat = x.reshape(N, C, HW)  # free host-side collapse of contiguous dims

    cost = pl.CostEstimate(
        flops=2 * N * HW * CKK * C * L,
        transcendentals=0,
        bytes_accessed=2 * x.nbytes + w_stack.nbytes,
    )

    out_flat = pl.pallas_call(
        functools.partial(_fused_multiconv_kernel, C=C, H=H, W=W, K=K, L=L),
        out_shape=jax.ShapeDtypeStruct((N, C, HW), x.dtype),
        grid_spec=pltpu.PrefetchScalarGridSpec(
            num_scalar_prefetch=0,
            grid=(N,),
            in_specs=[
                pl.BlockSpec((1, C, HW), lambda n: (n, 0, 0)),
                pl.BlockSpec((L, C, CKK), lambda n: (0, 0, 0)),
            ],
            out_specs=pl.BlockSpec((1, C, HW), lambda n: (n, 0, 0)),
            scratch_shapes=[
                pltpu.VMEM((C, HW + 2 * W + 2), jnp.float32),  # row-padded act
                pltpu.VMEM((CKK, HW), jnp.float32),            # im2col cols
            ],
        ),
        compiler_params=pltpu.CompilerParams(
            dimension_semantics=("parallel",)),
        cost_estimate=cost,
    )(x_flat, w_stack)

    return out_flat.reshape(N, C, H, W)


# ---------------------------------------------------------------------------
# Pure-JAX f32 reference (mirrors the PyTorch module).
# ---------------------------------------------------------------------------
def _ref_conv(x, w):
    p = w.shape[-1] // 2
    xp = jnp.pad(x, ((0, 0), (0, 0), (p, p), (p, p)), mode="reflect")
    return jax.lax.conv_general_dilated(
        xp, w, window_strides=(1, 1), padding="VALID",
        dimension_numbers=("NCHW", "OIHW", "NCHW"))


def _ref_forward(x, weights):
    n = len(weights)
    for i, w in enumerate(weights):
        x = _ref_conv(x, w)
        if i < n - 1:
            x = jnp.where(x > 0, x, NEG_SLOPE * x)
    return x


if __name__ == "__main__":
    # MultiConvBlock(num_channels=4, num_conv_blocks=3, kernel_sizes=3,
    #                padding_mode='reflect', use_bias=False)
    N, C, H, W = 2, 4, 16, 16
    K = 3
    num_conv_blocks = 3
    num_convs = 2 * num_conv_blocks  # 2 convs per ConvBlock

    key = jax.random.PRNGKey(0)
    kx, *kws = jax.random.split(key, 1 + num_convs)
    x = jax.random.normal(kx, (N, C, H, W), dtype=jnp.float32)

    # Deterministic weights; bound chosen so activations keep a meaningful
    # magnitude through 6 layers (test stays sensitive to indexing bugs).
    fan_in = C * K * K
    bound = 2.0 / np.sqrt(fan_in)
    weights = [
        jax.random.uniform(k, (C, C, K, K), dtype=jnp.float32,
                           minval=-bound, maxval=bound)
        for k in kws
    ]

    fwd = jax.jit(multi_conv_block_forward)
    out = jax.block_until_ready(fwd(x, weights))

    ref = jax.block_until_ready(_ref_forward(x, weights))
    # Tolerance sized for bf16 MXU operands (f32 accumulation) vs f32 reference.
    np.testing.assert_allclose(np.asarray(out), np.asarray(ref),
                               rtol=2e-2, atol=2e-2)

    print("KERNEL_OK")
</pallas_src>

<mosaic_0001>
module attributes {stable_mosaic.version = 11 : i64} {
  func.func @_fused_multiconv_kernel(%arg0: i32, %arg1: memref<1x4x256xf32, #tpu.memory_space<vmem>>, %arg2: memref<6x4x36xbf16, #tpu.memory_space<vmem>>, %arg3: memref<1x4x256xf32, #tpu.memory_space<vmem>>, %arg4: memref<4x290xf32, #tpu.memory_space<vmem>>, %arg5: memref<36x256xf32, #tpu.memory_space<vmem>>) attributes {dimension_semantics = [#tpu.dimension_semantics<parallel>], iteration_bounds = array<i64: 2>, scalar_prefetch = 0 : i64, scratch_operands = 2 : i64, tpu.core_type = #tpu.core_type<tc>, window_params = [{transform_indices = @transform_0, window_bounds = array<i64: 1, 4, 256>}, {pipeline_mode = #tpu.pipeline_mode<synchronous>, transform_indices = @transform_1, window_bounds = array<i64: 6, 4, 36>}, {transform_indices = @transform_2, window_bounds = array<i64: 1, 4, 256>}]} {
    %0 = tpu.iota {dimensions = array<i32: 1>} : vector<4x256xi32>
    %c16_i32 = arith.constant 16 : i32
    %c0_i32 = arith.constant 0 : i32
    %1 = arith.cmpi eq, %c16_i32, %c0_i32 : i32
    %c1_i32 = arith.constant 1 : i32
    %2 = arith.select %1, %c1_i32, %c16_i32 : i32
    %3 = vector.broadcast %2 : i32 to vector<4x256xi32>
    %4 = arith.remsi %0, %3 : vector<4x256xi32>
    %c0_i32_0 = arith.constant 0 : i32
    %5 = vector.broadcast %c0_i32_0 : i32 to vector<4x256xi32>
    %6 = arith.cmpi ne, %4, %5 : vector<4x256xi32>
    %c0_i32_1 = arith.constant 0 : i32
    %7 = vector.broadcast %c0_i32_1 : i32 to vector<4x256xi32>
    %8 = arith.cmpi slt, %4, %7 : vector<4x256xi32>
    %c0_i32_2 = arith.constant 0 : i32
    %9 = arith.cmpi slt, %2, %c0_i32_2 : i32
    %10 = vector.broadcast %9 : i1 to vector<4x256xi1>
    %11 = vector.broadcast %10 : vector<4x256xi1> to vector<4x256xi1>
    %12 = arith.xori %8, %11 : vector<4x256xi1>
    %13 = arith.andi %12, %6 : vector<4x256xi1>
    %14 = vector.broadcast %2 : i32 to vector<4x256xi32>
    %15 = arith.addi %4, %14 : vector<4x256xi32>
    %16 = arith.select %13, %15, %4 : vector<4x256xi1>, vector<4x256xi32>
    %c0_i32_3 = arith.constant 0 : i32
    %17 = vector.broadcast %c0_i32_3 : i32 to vector<4x256xi32>
    %18 = arith.cmpi eq, %16, %17 : vector<4x256xi32>
    %c15_i32 = arith.constant 15 : i32
    %19 = vector.broadcast %c15_i32 : i32 to vector<4x256xi32>
    %20 = arith.cmpi eq, %16, %19 : vector<4x256xi32>
    %cst = arith.constant 0.000000e+00 : f32
    %21 = vector.broadcast %cst : f32 to vector<4x290xf32>
    %c0 = arith.constant 0 : index
    %c0_4 = arith.constant 0 : index
    %22 = vector.load %arg4[%c0, %c0_4] : memref<4x290xf32, #tpu.memory_space<vmem>>, vector<4x290xf32>
    tpu.vector_store %arg4[%c0, %c0_4], %21 {strides = array<i32>} : memref<4x290xf32, #tpu.memory_space<vmem>>, vector<4x290xf32>,
    %c0_5 = arith.constant 0 : index
    %c0_6 = arith.constant 0 : index
    %c0_7 = arith.constant 0 : index
    %23 = vector.load %arg1[%c0_5, %c0_6, %c0_7] : memref<1x4x256xf32, #tpu.memory_space<vmem>>, vector<1x4x256xf32>
    %24 = vector.shape_cast %23 : vector<1x4x256xf32> to vector<4x256xf32>
    %c0_8 = arith.constant 0 : index
    %c17 = arith.constant 17 : index
    %25 = vector.load %arg4[%c0_8, %c17] : memref<4x290xf32, #tpu.memory_space<vmem>>, vector<4x256xf32>
    tpu.vector_store %arg4[%c0_8, %c17], %24 {strides = array<i32>} : memref<4x290xf32, #tpu.memory_space<vmem>>, vector<4x256xf32>,
    %26 = vector.extract_strided_slice %24 {offsets = [0, 16], sizes = [4, 16], strides = [1, 1]} : vector<4x256xf32> to vector<4x16xf32>
    %c0_9 = arith.constant 0 : index
    %c1 = arith.constant 1 : index
    %27 = vector.load %arg4[%c0_9, %c1] : memref<4x290xf32, #tpu.memory_space<vmem>>, vector<4x16xf32>
    tpu.vector_store %arg4[%c0_9, %c1], %26 {strides = array<i32>} : memref<4x290xf32, #tpu.memory_space<vmem>>, vector<4x16xf32>,
    %28 = vector.extract_strided_slice %24 {offsets = [0, 224], sizes = [4, 16], strides = [1, 1]} : vector<4x256xf32> to vector<4x16xf32>
    %c0_10 = arith.constant 0 : index
    %c273 = arith.constant 273 : index
    %29 = vector.load %arg4[%c0_10, %c273] : memref<4x290xf32, #tpu.memory_space<vmem>>, vector<4x16xf32>
    tpu.vector_store %arg4[%c0_10, %c273], %28 {strides = array<i32>} : memref<4x290xf32, #tpu.memory_space<vmem>>, vector<4x16xf32>,
    %c0_11 = arith.constant 0 : index
    %c0_12 = arith.constant 0 : index
    %30 = vector.load %arg4[%c0_11, %c0_12] : memref<4x290xf32, #tpu.memory_space<vmem>>, vector<4x256xf32>
    %c0_13 = arith.constant 0 : index
    %c1_14 = arith.constant 1 : index
    %31 = vector.load %arg4[%c0_13, %c1_14] : memref<4x290xf32, #tpu.memory_space<vmem>>, vector<4x256xf32>
    %c0_15 = arith.constant 0 : index
    %c2 = arith.constant 2 : index
    %32 = vector.load %arg4[%c0_15, %c2] : memref<4x290xf32, #tpu.memory_space<vmem>>, vector<4x256xf32>
    %33 = arith.select %18, %32, %30 : vector<4x256xi1>, vector<4x256xf32>
    %34 = arith.select %20, %30, %32 : vector<4x256xi1>, vector<4x256xf32>
    %c0_16 = arith.constant 0 : index
    %c0_17 = arith.constant 0 : index
    %35 = vector.load %arg5[%c0_16, %c0_17] : memref<36x256xf32, #tpu.memory_space<vmem>>, vector<4x256xf32>
    tpu.vector_store %arg5[%c0_16, %c0_17], %33 {strides = array<i32>} : memref<36x256xf32, #tpu.memory_space<vmem>>, vector<4x256xf32>,
    %c4 = arith.constant 4 : index
    %c0_18 = arith.constant 0 : index
    %36 = vector.load %arg5[%c4, %c0_18] : memref<36x256xf32, #tpu.memory_space<vmem>>, vector<4x256xf32>
    tpu.vector_store %arg5[%c4, %c0_18], %31 {strides = array<i32>} : memref<36x256xf32, #tpu.memory_space<vmem>>, vector<4x256xf32>,
    %c8 = arith.constant 8 : index
    %c0_19 = arith.constant 0 : index
    %37 = vector.load %arg5[%c8, %c0_19] : memref<36x256xf32, #tpu.memory_space<vmem>>, vector<4x256xf32>
    tpu.vector_store %arg5[%c8, %c0_19], %34 {strides = array<i32>} : memref<36x256xf32, #tpu.memory_space<vmem>>, vector<4x256xf32>,
    %c0_20 = arith.constant 0 : index
    %c16 = arith.constant 16 : index
    %38 = vector.load %arg4[%c0_20, %c16] : memref<4x290xf32, #tpu.memory_space<vmem>>, vector<4x256xf32>
    %c0_21 = arith.constant 0 : index
    %c17_22 = arith.constant 17 : index
    %39 = vector.load %arg4[%c0_21, %c17_22] : memref<4x290xf32, #tpu.memory_space<vmem>>, vector<4x256xf32>
    %c0_23 = arith.constant 0 : index
    %c18 = arith.constant 18 : index
    %40 = vector.load %arg4[%c0_23, %c18] : memref<4x290xf32, #tpu.memory_space<vmem>>, vector<4x256xf32>
    %41 = arith.select %18, %40, %38 : vector<4x256xi1>, vector<4x256xf32>
    %42 = arith.select %20, %38, %40 : vector<4x256xi1>, vector<4x256xf32>
    %c12 = arith.constant 12 : index
    %c0_24 = arith.constant 0 : index
    %43 = vector.load %arg5[%c12, %c0_24] : memref<36x256xf32, #tpu.memory_space<vmem>>, vector<4x256xf32>
    tpu.vector_store %arg5[%c12, %c0_24], %41 {strides = array<i32>} : memref<36x256xf32, #tpu.memory_space<vmem>>, vector<4x256xf32>,
    %c16_25 = arith.constant 16 : index
    %c0_26 = arith.constant 0 : index
    %44 = vector.load %arg5[%c16_25, %c0_26] : memref<36x256xf32, #tpu.memory_space<vmem>>, vector<4x256xf32>
    tpu.vector_store %arg5[%c16_25, %c0_26], %39 {strides = array<i32>} : memref<36x256xf32, #tpu.memory_space<vmem>>, vector<4x256xf32>,
    %c20 = arith.constant 20 : index
    %c0_27 = arith.constant 0 : index
    %45 = vector.load %arg5[%c20, %c0_27] : memref<36x256xf32, #tpu.memory_space<vmem>>, vector<4x256xf32>
    tpu.vector_store %arg5[%c20, %c0_27], %42 {strides = array<i32>} : memref<36x256xf32, #tpu.memory_space<vmem>>, vector<4x256xf32>,
    %c0_28 = arith.constant 0 : index
    %c32 = arith.constant 32 : index
    %46 = vector.load %arg4[%c0_28, %c32] : memref<4x290xf32, #tpu.memory_space<vmem>>, vector<4x256xf32>
    %c0_29 = arith.constant 0 : index
    %c33 = arith.constant 33 : index
    %47 = vector.load %arg4[%c0_29, %c33] : memref<4x290xf32, #tpu.memory_space<vmem>>, vector<4x256xf32>
    %c0_30 = arith.constant 0 : index
    %c34 = arith.constant 34 : index
    %48 = vector.load %arg4[%c0_30, %c34] : memref<4x290xf32, #tpu.memory_space<vmem>>, vector<4x256xf32>
    %49 = arith.select %18, %48, %46 : vector<4x256xi1>, vector<4x256xf32>
    %50 = arith.select %20, %46, %48 : vector<4x256xi1>, vector<4x256xf32>
    %c24 = arith.constant 24 : index
    %c0_31 = arith.constant 0 : index
    %51 = vector.load %arg5[%c24, %c0_31] : memref<36x256xf32, #tpu.memory_space<vmem>>, vector<4x256xf32>
    tpu.vector_store %arg5[%c24, %c0_31], %49 {strides = array<i32>} : memref<36x256xf32, #tpu.memory_space<vmem>>, vector<4x256xf32>,
    %c28 = arith.constant 28 : index
    %c0_32 = arith.constant 0 : index
    %52 = vector.load %arg5[%c28, %c0_32] : memref<36x256xf32, #tpu.memory_space<vmem>>, vector<4x256xf32>
    tpu.vector_store %arg5[%c28, %c0_32], %47 {strides = array<i32>} : memref<36x256xf32, #tpu.memory_space<vmem>>, vector<4x256xf32>,
    %c32_33 = arith.constant 32 : index
    %c0_34 = arith.constant 0 : index
    %53 = vector.load %arg5[%c32_33, %c0_34] : memref<36x256xf32, #tpu.memory_space<vmem>>, vector<4x256xf32>
    tpu.vector_store %arg5[%c32_33, %c0_34], %50 {strides = array<i32>} : memref<36x256xf32, #tpu.memory_space<vmem>>, vector<4x256xf32>,
    %c0_35 = arith.constant 0 : index
    %c0_36 = arith.constant 0 : index
    %c0_37 = arith.constant 0 : index
    %54 = vector.load %arg2[%c0_35, %c0_36, %c0_37] : memref<6x4x36xbf16, #tpu.memory_space<vmem>>, vector<1x4x36xbf16>
    %55 = vector.shape_cast %54 : vector<1x4x36xbf16> to vector<4x36xbf16>
    %c0_38 = arith.constant 0 : index
    %c0_39 = arith.constant 0 : index
    %56 = vector.load %arg5[%c0_38, %c0_39] : memref<36x256xf32, #tpu.memory_space<vmem>>, vector<36x256xf32>
    %57 = arith.truncf %56 : vector<36x256xf32> to vector<36x256xbf16>
    %cst_40 = arith.constant dense<0.000000e+00> : vector<4x256xf32>
    %58 = tpu.matmul %55, %57, %cst_40 {dimension_numbers = #tpu.dot_dimension_numbers<[1], [0], [0], [1], [0, 0, 1, 1], [], []>} : vector<4x36xbf16>, vector<36x256xbf16>, vector<4x256xf32> -> vector<4x256xf32>
    %cst_41 = arith.constant 0.000000e+00 : f32
    %59 = vector.broadcast %cst_41 : f32 to vector<4x256xf32>
    %60 = arith.cmpf ogt, %58, %59 : vector<4x256xf32>
    %cst_42 = arith.constant 0.00999999977 : f32
    %61 = vector.broadcast %cst_42 : f32 to vector<4x256xf32>
    %62 = arith.mulf %61, %58 : vector<4x256xf32>
    %63 = arith.select %60, %58, %62 : vector<4x256xi1>, vector<4x256xf32>
    %c0_43 = arith.constant 0 : index
    %c17_44 = arith.constant 17 : index
    %64 = vector.load %arg4[%c0_43, %c17_44] : memref<4x290xf32, #tpu.memory_space<vmem>>, vector<4x256xf32>
    tpu.vector_store %arg4[%c0_43, %c17_44], %63 {strides = array<i32>} : memref<4x290xf32, #tpu.memory_space<vmem>>, vector<4x256xf32>,
    %65 = vector.extract_strided_slice %63 {offsets = [0, 16], sizes = [4, 16], strides = [1, 1]} : vector<4x256xf32> to vector<4x16xf32>
    %c0_45 = arith.constant 0 : index
    %c1_46 = arith.constant 1 : index
    %66 = vector.load %arg4[%c0_45, %c1_46] : memref<4x290xf32, #tpu.memory_space<vmem>>, vector<4x16xf32>
    tpu.vector_store %arg4[%c0_45, %c1_46], %65 {strides = array<i32>} : memref<4x290xf32, #tpu.memory_space<vmem>>, vector<4x16xf32>,
    %67 = vector.extract_strided_slice %63 {offsets = [0, 224], sizes = [4, 16], strides = [1, 1]} : vector<4x256xf32> to vector<4x16xf32>
    %c0_47 = arith.constant 0 : index
    %c273_48 = arith.constant 273 : index
    %68 = vector.load %arg4[%c0_47, %c273_48] : memref<4x290xf32, #tpu.memory_space<vmem>>, vector<4x16xf32>
    tpu.vector_store %arg4[%c0_47, %c273_48], %67 {strides = array<i32>} : memref<4x290xf32, #tpu.memory_space<vmem>>, vector<4x16xf32>,
    %c0_49 = arith.constant 0 : index
    %c0_50 = arith.constant 0 : index
    %69 = vector.load %arg4[%c0_49, %c0_50] : memref<4x290xf32, #tpu.memory_space<vmem>>, vector<4x256xf32>
    %c0_51 = arith.constant 0 : index
    %c1_52 = arith.constant 1 : index
    %70 = vector.load %arg4[%c0_51, %c1_52] : memref<4x290xf32, #tpu.memory_space<vmem>>, vector<4x256xf32>
    %c0_53 = arith.constant 0 : index
    %c2_54 = arith.constant 2 : index
    %71 = vector.load %arg4[%c0_53, %c2_54] : memref<4x290xf32, #tpu.memory_space<vmem>>, vector<4x256xf32>
    %72 = arith.select %18, %71, %69 : vector<4x256xi1>, vector<4x256xf32>
    %73 = arith.select %20, %69, %71 : vector<4x256xi1>, vector<4x256xf32>
    %c0_55 = arith.constant 0 : index
    %c0_56 = arith.constant 0 : index
    %74 = vector.load %arg5[%c0_55, %c0_56] : memref<36x256xf32, #tpu.memory_space<vmem>>, vector<4x256xf32>
    tpu.vector_store %arg5[%c0_55, %c0_56], %72 {strides = array<i32>} : memref<36x256xf32, #tpu.memory_space<vmem>>, vector<4x256xf32>,
    %c4_57 = arith.constant 4 : index
    %c0_58 = arith.constant 0 : index
    %75 = vector.load %arg5[%c4_57, %c0_58] : memref<36x256xf32, #tpu.memory_space<vmem>>, vector<4x256xf32>
    tpu.vector_store %arg5[%c4_57, %c0_58], %70 {strides = array<i32>} : memref<36x256xf32, #tpu.memory_space<vmem>>, vector<4x256xf32>,
    %c8_59 = arith.constant 8 : index
    %c0_60 = arith.constant 0 : index
    %76 = vector.load %arg5[%c8_59, %c0_60] : memref<36x256xf32, #tpu.memory_space<vmem>>, vector<4x256xf32>
    tpu.vector_store %arg5[%c8_59, %c0_60], %73 {strides = array<i32>} : memref<36x256xf32, #tpu.memory_space<vmem>>, vector<4x256xf32>,
    %c0_61 = arith.constant 0 : index
    %c16_62 = arith.constant 16 : index
    %77 = vector.load %arg4[%c0_61, %c16_62] : memref<4x290xf32, #tpu.memory_space<vmem>>, vector<4x256xf32>
    %c0_63 = arith.constant 0 : index
    %c17_64 = arith.constant 17 : index
    %78 = vector.load %arg4[%c0_63, %c17_64] : memref<4x290xf32, #tpu.memory_space<vmem>>, vector<4x256xf32>
    %c0_65 = arith.constant 0 : index
    %c18_66 = arith.constant 18 : index
    %79 = vector.load %arg4[%c0_65, %c18_66] : memref<4x290xf32, #tpu.memory_space<vmem>>, vector<4x256xf32>
    %80 = arith.select %18, %79, %77 : vector<4x256xi1>, vector<4x256xf32>
    %81 = arith.select %20, %77, %79 : vector<4x256xi1>, vector<4x256xf32>
    %c12_67 = arith.constant 12 : index
    %c0_68 = arith.constant 0 : index
    %82 = vector.load %arg5[%c12_67, %c0_68] : memref<36x256xf32, #tpu.memory_space<vmem>>, vector<4x256xf32>
    tpu.vector_store %arg5[%c12_67, %c0_68], %80 {strides = array<i32>} : memref<36x256xf32, #tpu.memory_space<vmem>>, vector<4x256xf32>,
    %c16_69 = arith.constant 16 : index
    %c0_70 = arith.constant 0 : index
    %83 = vector.load %arg5[%c16_69, %c0_70] : memref<36x256xf32, #tpu.memory_space<vmem>>, vector<4x256xf32>
    tpu.vector_store %arg5[%c16_69, %c0_70], %78 {strides = array<i32>} : memref<36x256xf32, #tpu.memory_space<vmem>>, vector<4x256xf32>,
    %c20_71 = arith.constant 20 : index
    %c0_72 = arith.constant 0 : index
    %84 = vector.load %arg5[%c20_71, %c0_72] : memref<36x256xf32, #tpu.memory_space<vmem>>, vector<4x256xf32>
    tpu.vector_store %arg5[%c20_71, %c0_72], %81 {strides = array<i32>} : memref<36x256xf32, #tpu.memory_space<vmem>>, vector<4x256xf32>,
    %c0_73 = arith.constant 0 : index
    %c32_74 = arith.constant 32 : index
    %85 = vector.load %arg4[%c0_73, %c32_74] : memref<4x290xf32, #tpu.memory_space<vmem>>, vector<4x256xf32>
    %c0_75 = arith.constant 0 : index
    %c33_76 = arith.constant 33 : index
    %86 = vector.load %arg4[%c0_75, %c33_76] : memref<4x290xf32, #tpu.memory_space<vmem>>, vector<4x256xf32>
    %c0_77 = arith.constant 0 : index
    %c34_78 = arith.constant 34 : index
    %87 = vector.load %arg4[%c0_77, %c34_78] : memref<4x290xf32, #tpu.memory_space<vmem>>, vector<4x256xf32>
    %88 = arith.select %18, %87, %85 : vector<4x256xi1>, vector<4x256xf32>
    %89 = arith.select %20, %85, %87 : vector<4x256xi1>, vector<4x256xf32>
    %c24_79 = arith.constant 24 : index
    %c0_80 = arith.constant 0 : index
    %90 = vector.load %arg5[%c24_79, %c0_80] : memref<36x256xf32, #tpu.memory_space<vmem>>, vector<4x256xf32>
    tpu.vector_store %arg5[%c24_79, %c0_80], %88 {strides = array<i32>} : memref<36x256xf32, #tpu.memory_space<vmem>>, vector<4x256xf32>,
    %c28_81 = arith.constant 28 : index
    %c0_82 = arith.constant 0 : index
    %91 = vector.load %arg5[%c28_81, %c0_82] : memref<36x256xf32, #tpu.memory_space<vmem>>, vector<4x256xf32>
    tpu.vector_store %arg5[%c28_81, %c0_82], %86 {strides = array<i32>} : memref<36x256xf32, #tpu.memory_space<vmem>>, vector<4x256xf32>,
    %c32_83 = arith.constant 32 : index
    %c0_84 = arith.constant 0 : index
    %92 = vector.load %arg5[%c32_83, %c0_84] : memref<36x256xf32, #tpu.memory_space<vmem>>, vector<4x256xf32>
    tpu.vector_store %arg5[%c32_83, %c0_84], %89 {strides = array<i32>} : memref<36x256xf32, #tpu.memory_space<vmem>>, vector<4x256xf32>,
    %c1_85 = arith.constant 1 : index
    %c0_86 = arith.constant 0 : index
    %c0_87 = arith.constant 0 : index
    %93 = vector.load %arg2[%c1_85, %c0_86, %c0_87] : memref<6x4x36xbf16, #tpu.memory_space<vmem>>, vector<1x4x36xbf16>
    %94 = vector.shape_cast %93 : vector<1x4x36xbf16> to vector<4x36xbf16>
    %c0_88 = arith.constant 0 : index
    %c0_89 = arith.constant 0 : index
    %95 = vector.load %arg5[%c0_88, %c0_89] : memref<36x256xf32, #tpu.memory_space<vmem>>, vector<36x256xf32>
    %96 = arith.truncf %95 : vector<36x256xf32> to vector<36x256xbf16>
    %cst_90 = arith.constant dense<0.000000e+00> : vector<4x256xf32>
    %97 = tpu.matmul %94, %96, %cst_90 {dimension_numbers = #tpu.dot_dimension_numbers<[1], [0], [0], [1], [0, 0, 1, 1], [], []>} : vector<4x36xbf16>, vector<36x256xbf16>, vector<4x256xf32> -> vector<4x256xf32>
    %cst_91 = arith.constant 0.000000e+00 : f32
    %98 = vector.broadcast %cst_91 : f32 to vector<4x256xf32>
    %99 = arith.cmpf ogt, %97, %98 : vector<4x256xf32>
    %cst_92 = arith.constant 0.00999999977 : f32
    %100 = vector.broadcast %cst_92 : f32 to vector<4x256xf32>
    %101 = arith.mulf %100, %97 : vector<4x256xf32>
    %102 = arith.select %99, %97, %101 : vector<4x256xi1>, vector<4x256xf32>
    %c0_93 = arith.constant 0 : index
    %c17_94 = arith.constant 17 : index
    %103 = vector.load %arg4[%c0_93, %c17_94] : memref<4x290xf32, #tpu.memory_space<vmem>>, vector<4x256xf32>
    tpu.vector_store %arg4[%c0_93, %c17_94], %102 {strides = array<i32>} : memref<4x290xf32, #tpu.memory_space<vmem>>, vector<4x256xf32>,
    %104 = vector.extract_strided_slice %102 {offsets = [0, 16], sizes = [4, 16], strides = [1, 1]} : vector<4x256xf32> to vector<4x16xf32>
    %c0_95 = arith.constant 0 : index
    %c1_96 = arith.constant 1 : index
    %105 = vector.load %arg4[%c0_95, %c1_96] : memref<4x290xf32, #tpu.memory_space<vmem>>, vector<4x16xf32>
    tpu.vector_store %arg4[%c0_95, %c1_96], %104 {strides = array<i32>} : memref<4x290xf32, #tpu.memory_space<vmem>>, vector<4x16xf32>,
    %106 = vector.extract_strided_slice %102 {offsets = [0, 224], sizes = [4, 16], strides = [1, 1]} : vector<4x256xf32> to vector<4x16xf32>
    %c0_97 = arith.constant 0 : index
    %c273_98 = arith.constant 273 : index
    %107 = vector.load %arg4[%c0_97, %c273_98] : memref<4x290xf32, #tpu.memory_space<vmem>>, vector<4x16xf32>
    tpu.vector_store %arg4[%c0_97, %c273_98], %106 {strides = array<i32>} : memref<4x290xf32, #tpu.memory_space<vmem>>, vector<4x16xf32>,
    %c0_99 = arith.constant 0 : index
    %c0_100 = arith.constant 0 : index
    %108 = vector.load %arg4[%c0_99, %c0_100] : memref<4x290xf32, #tpu.memory_space<vmem>>, vector<4x256xf32>
    %c0_101 = arith.constant 0 : index
    %c1_102 = arith.constant 1 : index
    %109 = vector.load %arg4[%c0_101, %c1_102] : memref<4x290xf32, #tpu.memory_space<vmem>>, vector<4x256xf32>
    %c0_103 = arith.constant 0 : index
    %c2_104 = arith.constant 2 : index
    %110 = vector.load %arg4[%c0_103, %c2_104] : memref<4x290xf32, #tpu.memory_space<vmem>>, vector<4x256xf32>
    %111 = arith.select %18, %110, %108 : vector<4x256xi1>, vector<4x256xf32>
    %112 = arith.select %20, %108, %110 : vector<4x256xi1>, vector<4x256xf32>
    %c0_105 = arith.constant 0 : index
    %c0_106 = arith.constant 0 : index
    %113 = vector.load %arg5[%c0_105, %c0_106] : memref<36x256xf32, #tpu.memory_space<vmem>>, vector<4x256xf32>
    tpu.vector_store %arg5[%c0_105, %c0_106], %111 {strides = array<i32>} : memref<36x256xf32, #tpu.memory_space<vmem>>, vector<4x256xf32>,
    %c4_107 = arith.constant 4 : index
    %c0_108 = arith.constant 0 : index
    %114 = vector.load %arg5[%c4_107, %c0_108] : memref<36x256xf32, #tpu.memory_space<vmem>>, vector<4x256xf32>
    tpu.vector_store %arg5[%c4_107, %c0_108], %109 {strides = array<i32>} : memref<36x256xf32, #tpu.memory_space<vmem>>, vector<4x256xf32>,
    %c8_109 = arith.constant 8 : index
    %c0_110 = arith.constant 0 : index
    %115 = vector.load %arg5[%c8_109, %c0_110] : memref<36x256xf32, #tpu.memory_space<vmem>>, vector<4x256xf32>
    tpu.vector_store %arg5[%c8_109, %c0_110], %112 {strides = array<i32>} : memref<36x256xf32, #tpu.memory_space<vmem>>, vector<4x256xf32>,
    %c0_111 = arith.constant 0 : index
    %c16_112 = arith.constant 16 : index
    %116 = vector.load %arg4[%c0_111, %c16_112] : memref<4x290xf32, #tpu.memory_space<vmem>>, vector<4x256xf32>
    %c0_113 = arith.constant 0 : index
    %c17_114 = arith.constant 17 : index
    %117 = vector.load %arg4[%c0_113, %c17_114] : memref<4x290xf32, #tpu.memory_space<vmem>>, vector<4x256xf32>
    %c0_115 = arith.constant 0 : index
    %c18_116 = arith.constant 18 : index
    %118 = vector.load %arg4[%c0_115, %c18_116] : memref<4x290xf32, #tpu.memory_space<vmem>>, vector<4x256xf32>
    %119 = arith.select %18, %118, %116 : vector<4x256xi1>, vector<4x256xf32>
    %120 = arith.select %20, %116, %118 : vector<4x256xi1>, vector<4x256xf32>
    %c12_117 = arith.constant 12 : index
    %c0_118 = arith.constant 0 : index
    %121 = vector.load %arg5[%c12_117, %c0_118] : memref<36x256xf32, #tpu.memory_space<vmem>>, vector<4x256xf32>
    tpu.vector_store %arg5[%c12_117, %c0_118], %119 {strides = array<i32>} : memref<36x256xf32, #tpu.memory_space<vmem>>, vector<4x256xf32>,
    %c16_119 = arith.constant 16 : index
    %c0_120 = arith.constant 0 : index
    %122 = vector.load %arg5[%c16_119, %c0_120] : memref<36x256xf32, #tpu.memory_space<vmem>>, vector<4x256xf32>
    tpu.vector_store %arg5[%c16_119, %c0_120], %117 {strides = array<i32>} : memref<36x256xf32, #tpu.memory_space<vmem>>, vector<4x256xf32>,
    %c20_121 = arith.constant 20 : index
    %c0_122 = arith.constant 0 : index
    %123 = vector.load %arg5[%c20_121, %c0_122] : memref<36x256xf32, #tpu.memory_space<vmem>>, vector<4x256xf32>
    tpu.vector_store %arg5[%c20_121, %c0_122], %120 {strides = array<i32>} : memref<36x256xf32, #tpu.memory_space<vmem>>, vector<4x256xf32>,
    %c0_123 = arith.constant 0 : index
    %c32_124 = arith.constant 32 : index
    %124 = vector.load %arg4[%c0_123, %c32_124] : memref<4x290xf32, #tpu.memory_space<vmem>>, vector<4x256xf32>
    %c0_125 = arith.constant 0 : index
    %c33_126 = arith.constant 33 : index
    %125 = vector.load %arg4[%c0_125, %c33_126] : memref<4x290xf32, #tpu.memory_space<vmem>>, vector<4x256xf32>
    %c0_127 = arith.constant 0 : index
    %c34_128 = arith.constant 34 : index
    %126 = vector.load %arg4[%c0_127, %c34_128] : memref<4x290xf32, #tpu.memory_space<vmem>>, vector<4x256xf32>
    %127 = arith.select %18, %126, %124 : vector<4x256xi1>, vector<4x256xf32>
    %128 = arith.select %20, %124, %126 : vector<4x256xi1>, vector<4x256xf32>
    %c24_129 = arith.constant 24 : index
    %c0_130 = arith.constant 0 : index
    %129 = vector.load %arg5[%c24_129, %c0_130] : memref<36x256xf32, #tpu.memory_space<vmem>>, vector<4x256xf32>
    tpu.vector_store %arg5[%c24_129, %c0_130], %127 {strides = array<i32>} : memref<36x256xf32, #tpu.memory_space<vmem>>, vector<4x256xf32>,
    %c28_131 = arith.constant 28 : index
    %c0_132 = arith.constant 0 : index
    %130 = vector.load %arg5[%c28_131, %c0_132] : memref<36x256xf32, #tpu.memory_space<vmem>>, vector<4x256xf32>
    tpu.vector_store %arg5[%c28_131, %c0_132], %125 {strides = array<i32>} : memref<36x256xf32, #tpu.memory_space<vmem>>, vector<4x256xf32>,
    %c32_133 = arith.constant 32 : index
    %c0_134 = arith.constant 0 : index
    %131 = vector.load %arg5[%c32_133, %c0_134] : memref<36x256xf32, #tpu.memory_space<vmem>>, vector<4x256xf32>
    tpu.vector_store %arg5[%c32_133, %c0_134], %128 {strides = array<i32>} : memref<36x256xf32, #tpu.memory_space<vmem>>, vector<4x256xf32>,
    %c2_135 = arith.constant 2 : index
    %c0_136 = arith.constant 0 : index
    %c0_137 = arith.constant 0 : index
    %132 = vector.load %arg2[%c2_135, %c0_136, %c0_137] : memref<6x4x36xbf16, #tpu.memory_space<vmem>>, vector<1x4x36xbf16>
    %133 = vector.shape_cast %132 : vector<1x4x36xbf16> to vector<4x36xbf16>
    %c0_138 = arith.constant 0 : index
    %c0_139 = arith.constant 0 : index
    %134 = vector.load %arg5[%c0_138, %c0_139] : memref<36x256xf32, #tpu.memory_space<vmem>>, vector<36x256xf32>
    %135 = arith.truncf %134 : vector<36x256xf32> to vector<36x256xbf16>
    %cst_140 = arith.constant dense<0.000000e+00> : vector<4x256xf32>
    %136 = tpu.matmul %133, %135, %cst_140 {dimension_numbers = #tpu.dot_dimension_numbers<[1], [0], [0], [1], [0, 0, 1, 1], [], []>} : vector<4x36xbf16>, vector<36x256xbf16>, vector<4x256xf32> -> vector<4x256xf32>
    %cst_141 = arith.constant 0.000000e+00 : f32
    %137 = vector.broadcast %cst_141 : f32 to vector<4x256xf32>
    %138 = arith.cmpf ogt, %136, %137 : vector<4x256xf32>
    %cst_142 = arith.constant 0.00999999977 : f32
    %139 = vector.broadcast %cst_142 : f32 to vector<4x256xf32>
    %140 = arith.mulf %139, %136 : vector<4x256xf32>
    %141 = arith.select %138, %136, %140 : vector<4x256xi1>, vector<4x256xf32>
    %c0_143 = arith.constant 0 : index
    %c17_144 = arith.constant 17 : index
    %142 = vector.load %arg4[%c0_143, %c17_144] : memref<4x290xf32, #tpu.memory_space<vmem>>, vector<4x256xf32>
    tpu.vector_store %arg4[%c0_143, %c17_144], %141 {strides = array<i32>} : memref<4x290xf32, #tpu.memory_space<vmem>>, vector<4x256xf32>,
    %143 = vector.extract_strided_slice %141 {offsets = [0, 16], sizes = [4, 16], strides = [1, 1]} : vector<4x256xf32> to vector<4x16xf32>
    %c0_145 = arith.constant 0 : index
    %c1_146 = arith.constant 1 : index
    %144 = vector.load %arg4[%c0_145, %c1_146] : memref<4x290xf32, #tpu.memory_space<vmem>>, vector<4x16xf32>
    tpu.vector_store %arg4[%c0_145, %c1_146], %143 {strides = array<i32>} : memref<4x290xf32, #tpu.memory_space<vmem>>, vector<4x16xf32>,
    %145 = vector.extract_strided_slice %141 {offsets = [0, 224], sizes = [4, 16], strides = [1, 1]} : vector<4x256xf32> to vector<4x16xf32>
    %c0_147 = arith.constant 0 : index
    %c273_148 = arith.constant 273 : index
    %146 = vector.load %arg4[%c0_147, %c273_148] : memref<4x290xf32, #tpu.memory_space<vmem>>, vector<4x16xf32>
    tpu.vector_store %arg4[%c0_147, %c273_148], %145 {strides = array<i32>} : memref<4x290xf32, #tpu.memory_space<vmem>>, vector<4x16xf32>,
    %c0_149 = arith.constant 0 : index
    %c0_150 = arith.constant 0 : index
    %147 = vector.load %arg4[%c0_149, %c0_150] : memref<4x290xf32, #tpu.memory_space<vmem>>, vector<4x256xf32>
    %c0_151 = arith.constant 0 : index
    %c1_152 = arith.constant 1 : index
    %148 = vector.load %arg4[%c0_151, %c1_152] : memref<4x290xf32, #tpu.memory_space<vmem>>, vector<4x256xf32>
    %c0_153 = arith.constant 0 : index
    %c2_154 = arith.constant 2 : index
    %149 = vector.load %arg4[%c0_153, %c2_154] : memref<4x290xf32, #tpu.memory_space<vmem>>, vector<4x256xf32>
    %150 = arith.select %18, %149, %147 : vector<4x256xi1>, vector<4x256xf32>
    %151 = arith.select %20, %147, %149 : vector<4x256xi1>, vector<4x256xf32>
    %c0_155 = arith.constant 0 : index
    %c0_156 = arith.constant 0 : index
    %152 = vector.load %arg5[%c0_155, %c0_156] : memref<36x256xf32, #tpu.memory_space<vmem>>, vector<4x256xf32>
    tpu.vector_store %arg5[%c0_155, %c0_156], %150 {strides = array<i32>} : memref<36x256xf32, #tpu.memory_space<vmem>>, vector<4x256xf32>,
    %c4_157 = arith.constant 4 : index
    %c0_158 = arith.constant 0 : index
    %153 = vector.load %arg5[%c4_157, %c0_158] : memref<36x256xf32, #tpu.memory_space<vmem>>, vector<4x256xf32>
    tpu.vector_store %arg5[%c4_157, %c0_158], %148 {strides = array<i32>} : memref<36x256xf32, #tpu.memory_space<vmem>>, vector<4x256xf32>,
    %c8_159 = arith.constant 8 : index
    %c0_160 = arith.constant 0 : index
    %154 = vector.load %arg5[%c8_159, %c0_160] : memref<36x256xf32, #tpu.memory_space<vmem>>, vector<4x256xf32>
    tpu.vector_store %arg5[%c8_159, %c0_160], %151 {strides = array<i32>} : memref<36x256xf32, #tpu.memory_space<vmem>>, vector<4x256xf32>,
    %c0_161 = arith.constant 0 : index
    %c16_162 = arith.constant 16 : index
    %155 = vector.load %arg4[%c0_161, %c16_162] : memref<4x290xf32, #tpu.memory_space<vmem>>, vector<4x256xf32>
    %c0_163 = arith.constant 0 : index
    %c17_164 = arith.constant 17 : index
    %156 = vector.load %arg4[%c0_163, %c17_164] : memref<4x290xf32, #tpu.memory_space<vmem>>, vector<4x256xf32>
    %c0_165 = arith.constant 0 : index
    %c18_166 = arith.constant 18 : index
    %157 = vector.load %arg4[%c0_165, %c18_166] : memref<4x290xf32, #tpu.memory_space<vmem>>, vector<4x256xf32>
    %158 = arith.select %18, %157, %155 : vector<4x256xi1>, vector<4x256xf32>
    %159 = arith.select %20, %155, %157 : vector<4x256xi1>, vector<4x256xf32>
    %c12_167 = arith.constant 12 : index
    %c0_168 = arith.constant 0 : index
    %160 = vector.load %arg5[%c12_167, %c0_168] : memref<36x256xf32, #tpu.memory_space<vmem>>, vector<4x256xf32>
    tpu.vector_store %arg5[%c12_167, %c0_168], %158 {strides = array<i32>} : memref<36x256xf32, #tpu.memory_space<vmem>>, vector<4x256xf32>,
    %c16_169 = arith.constant 16 : index
    %c0_170 = arith.constant 0 : index
    %161 = vector.load %arg5[%c16_169, %c0_170] : memref<36x256xf32, #tpu.memory_space<vmem>>, vector<4x256xf32>
    tpu.vector_store %arg5[%c16_169, %c0_170], %156 {strides = array<i32>} : memref<36x256xf32, #tpu.memory_space<vmem>>, vector<4x256xf32>,
    %c20_171 = arith.constant 20 : index
    %c0_172 = arith.constant 0 : index
    %162 = vector.load %arg5[%c20_171, %c0_172] : memref<36x256xf32, #tpu.memory_space<vmem>>, vector<4x256xf32>
    tpu.vector_store %arg5[%c20_171, %c0_172], %159 {strides = array<i32>} : memref<36x256xf32, #tpu.memory_space<vmem>>, vector<4x256xf32>,
    %c0_173 = arith.constant 0 : index
    %c32_174 = arith.constant 32 : index
    %163 = vector.load %arg4[%c0_173, %c32_174] : memref<4x290xf32, #tpu.memory_space<vmem>>, vector<4x256xf32>
    %c0_175 = arith.constant 0 : index
    %c33_176 = arith.constant 33 : index
    %164 = vector.load %arg4[%c0_175, %c33_176] : memref<4x290xf32, #tpu.memory_space<vmem>>, vector<4x256xf32>
    %c0_177 = arith.constant 0 : index
    %c34_178 = arith.constant 34 : index
    %165 = vector.load %arg4[%c0_177, %c34_178] : memref<4x290xf32, #tpu.memory_space<vmem>>, vector<4x256xf32>
    %166 = arith.select %18, %165, %163 : vector<4x256xi1>, vector<4x256xf32>
    %167 = arith.select %20, %163, %165 : vector<4x256xi1>, vector<4x256xf32>
    %c24_179 = arith.constant 24 : index
    %c0_180 = arith.constant 0 : index
    %168 = vector.load %arg5[%c24_179, %c0_180] : memref<36x256xf32, #tpu.memory_space<vmem>>, vector<4x256xf32>
    tpu.vector_store %arg5[%c24_179, %c0_180], %166 {strides = array<i32>} : memref<36x256xf32, #tpu.memory_space<vmem>>, vector<4x256xf32>,
    %c28_181 = arith.constant 28 : index
    %c0_182 = arith.constant 0 : index
    %169 = vector.load %arg5[%c28_181, %c0_182] : memref<36x256xf32, #tpu.memory_space<vmem>>, vector<4x256xf32>
    tpu.vector_store %arg5[%c28_181, %c0_182], %164 {strides = array<i32>} : memref<36x256xf32, #tpu.memory_space<vmem>>, vector<4x256xf32>,
    %c32_183 = arith.constant 32 : index
    %c0_184 = arith.constant 0 : index
    %170 = vector.load %arg5[%c32_183, %c0_184] : memref<36x256xf32, #tpu.memory_space<vmem>>, vector<4x256xf32>
    tpu.vector_store %arg5[%c32_183, %c0_184], %167 {strides = array<i32>} : memref<36x256xf32, #tpu.memory_space<vmem>>, vector<4x256xf32>,
    %c3 = arith.constant 3 : index
    %c0_185 = arith.constant 0 : index
    %c0_186 = arith.constant 0 : index
    %171 = vector.load %arg2[%c3, %c0_185, %c0_186] : memref<6x4x36xbf16, #tpu.memory_space<vmem>>, vector<1x4x36xbf16>
    %172 = vector.shape_cast %171 : vector<1x4x36xbf16> to vector<4x36xbf16>
    %c0_187 = arith.constant 0 : index
    %c0_188 = arith.constant 0 : index
    %173 = vector.load %arg5[%c0_187, %c0_188] : memref<36x256xf32, #tpu.memory_space<vmem>>, vector<36x256xf32>
    %174 = arith.truncf %173 : vector<36x256xf32> to vector<36x256xbf16>
    %cst_189 = arith.constant dense<0.000000e+00> : vector<4x256xf32>
    %175 = tpu.matmul %172, %174, %cst_189 {dimension_numbers = #tpu.dot_dimension_numbers<[1], [0], [0], [1], [0, 0, 1, 1], [], []>} : vector<4x36xbf16>, vector<36x256xbf16>, vector<4x256xf32> -> vector<4x256xf32>
    %cst_190 = arith.constant 0.000000e+00 : f32
    %176 = vector.broadcast %cst_190 : f32 to vector<4x256xf32>
    %177 = arith.cmpf ogt, %175, %176 : vector<4x256xf32>
    %cst_191 = arith.constant 0.00999999977 : f32
    %178 = vector.broadcast %cst_191 : f32 to vector<4x256xf32>
    %179 = arith.mulf %178, %175 : vector<4x256xf32>
    %180 = arith.select %177, %175, %179 : vector<4x256xi1>, vector<4x256xf32>
    %c0_192 = arith.constant 0 : index
    %c17_193 = arith.constant 17 : index
    %181 = vector.load %arg4[%c0_192, %c17_193] : memref<4x290xf32, #tpu.memory_space<vmem>>, vector<4x256xf32>
    tpu.vector_store %arg4[%c0_192, %c17_193], %180 {strides = array<i32>} : memref<4x290xf32, #tpu.memory_space<vmem>>, vector<4x256xf32>,
    %182 = vector.extract_strided_slice %180 {offsets = [0, 16], sizes = [4, 16], strides = [1, 1]} : vector<4x256xf32> to vector<4x16xf32>
    %c0_194 = arith.constant 0 : index
    %c1_195 = arith.constant 1 : index
    %183 = vector.load %arg4[%c0_194, %c1_195] : memref<4x290xf32, #tpu.memory_space<vmem>>, vector<4x16xf32>
    tpu.vector_store %arg4[%c0_194, %c1_195], %182 {strides = array<i32>} : memref<4x290xf32, #tpu.memory_space<vmem>>, vector<4x16xf32>,
    %184 = vector.extract_strided_slice %180 {offsets = [0, 224], sizes = [4, 16], strides = [1, 1]} : vector<4x256xf32> to vector<4x16xf32>
    %c0_196 = arith.constant 0 : index
    %c273_197 = arith.constant 273 : index
    %185 = vector.load %arg4[%c0_196, %c273_197] : memref<4x290xf32, #tpu.memory_space<vmem>>, vector<4x16xf32>
    tpu.vector_store %arg4[%c0_196, %c273_197], %184 {strides = array<i32>} : memref<4x290xf32, #tpu.memory_space<vmem>>, vector<4x16xf32>,
    %c0_198 = arith.constant 0 : index
    %c0_199 = arith.constant 0 : index
    %186 = vector.load %arg4[%c0_198, %c0_199] : memref<4x290xf32, #tpu.memory_space<vmem>>, vector<4x256xf32>
    %c0_200 = arith.constant 0 : index
    %c1_201 = arith.constant 1 : index
    %187 = vector.load %arg4[%c0_200, %c1_201] : memref<4x290xf32, #tpu.memory_space<vmem>>, vector<4x256xf32>
    %c0_202 = arith.constant 0 : index
    %c2_203 = arith.constant 2 : index
    %188 = vector.load %arg4[%c0_202, %c2_203] : memref<4x290xf32, #tpu.memory_space<vmem>>, vector<4x256xf32>
    %189 = arith.select %18, %188, %186 : vector<4x256xi1>, vector<4x256xf32>
    %190 = arith.select %20, %186, %188 : vector<4x256xi1>, vector<4x256xf32>
    %c0_204 = arith.constant 0 : index
    %c0_205 = arith.constant 0 : index
    %191 = vector.load %arg5[%c0_204, %c0_205] : memref<36x256xf32, #tpu.memory_space<vmem>>, vector<4x256xf32>
    tpu.vector_store %arg5[%c0_204, %c0_205], %189 {strides = array<i32>} : memref<36x256xf32, #tpu.memory_space<vmem>>, vector<4x256xf32>,
    %c4_206 = arith.constant 4 : index
    %c0_207 = arith.constant 0 : index
    %192 = vector.load %arg5[%c4_206, %c0_207] : memref<36x256xf32, #tpu.memory_space<vmem>>, vector<4x256xf32>
    tpu.vector_store %arg5[%c4_206, %c0_207], %187 {strides = array<i32>} : memref<36x256xf32, #tpu.memory_space<vmem>>, vector<4x256xf32>,
    %c8_208 = arith.constant 8 : index
    %c0_209 = arith.constant 0 : index
    %193 = vector.load %arg5[%c8_208, %c0_209] : memref<36x256xf32, #tpu.memory_space<vmem>>, vector<4x256xf32>
    tpu.vector_store %arg5[%c8_208, %c0_209], %190 {strides = array<i32>} : memref<36x256xf32, #tpu.memory_space<vmem>>, vector<4x256xf32>,
    %c0_210 = arith.constant 0 : index
    %c16_211 = arith.constant 16 : index
    %194 = vector.load %arg4[%c0_210, %c16_211] : memref<4x290xf32, #tpu.memory_space<vmem>>, vector<4x256xf32>
    %c0_212 = arith.constant 0 : index
    %c17_213 = arith.constant 17 : index
    %195 = vector.load %arg4[%c0_212, %c17_213] : memref<4x290xf32, #tpu.memory_space<vmem>>, vector<4x256xf32>
    %c0_214 = arith.constant 0 : index
    %c18_215 = arith.constant 18 : index
    %196 = vector.load %arg4[%c0_214, %c18_215] : memref<4x290xf32, #tpu.memory_space<vmem>>, vector<4x256xf32>
    %197 = arith.select %18, %196, %194 : vector<4x256xi1>, vector<4x256xf32>
    %198 = arith.select %20, %194, %196 : vector<4x256xi1>, vector<4x256xf32>
    %c12_216 = arith.constant 12 : index
    %c0_217 = arith.constant 0 : index
    %199 = vector.load %arg5[%c12_216, %c0_217] : memref<36x256xf32, #tpu.memory_space<vmem>>, vector<4x256xf32>
    tpu.vector_store %arg5[%c12_216, %c0_217], %197 {strides = array<i32>} : memref<36x256xf32, #tpu.memory_space<vmem>>, vector<4x256xf32>,
    %c16_218 = arith.constant 16 : index
    %c0_219 = arith.constant 0 : index
    %200 = vector.load %arg5[%c16_218, %c0_219] : memref<36x256xf32, #tpu.memory_space<vmem>>, vector<4x256xf32>
    tpu.vector_store %arg5[%c16_218, %c0_219], %195 {strides = array<i32>} : memref<36x256xf32, #tpu.memory_space<vmem>>, vector<4x256xf32>,
    %c20_220 = arith.constant 20 : index
    %c0_221 = arith.constant 0 : index
    %201 = vector.load %arg5[%c20_220, %c0_221] : memref<36x256xf32, #tpu.memory_space<vmem>>, vector<4x256xf32>
    tpu.vector_store %arg5[%c20_220, %c0_221], %198 {strides = array<i32>} : memref<36x256xf32, #tpu.memory_space<vmem>>, vector<4x256xf32>,
    %c0_222 = arith.constant 0 : index
    %c32_223 = arith.constant 32 : index
    %202 = vector.load %arg4[%c0_222, %c32_223] : memref<4x290xf32, #tpu.memory_space<vmem>>, vector<4x256xf32>
    %c0_224 = arith.constant 0 : index
    %c33_225 = arith.constant 33 : index
    %203 = vector.load %arg4[%c0_224, %c33_225] : memref<4x290xf32, #tpu.memory_space<vmem>>, vector<4x256xf32>
    %c0_226 = arith.constant 0 : index
    %c34_227 = arith.constant 34 : index
    %204 = vector.load %arg4[%c0_226, %c34_227] : memref<4x290xf32, #tpu.memory_space<vmem>>, vector<4x256xf32>
    %205 = arith.select %18, %204, %202 : vector<4x256xi1>, vector<4x256xf32>
    %206 = arith.select %20, %202, %204 : vector<4x256xi1>, vector<4x256xf32>
    %c24_228 = arith.constant 24 : index
    %c0_229 = arith.constant 0 : index
    %207 = vector.load %arg5[%c24_228, %c0_229] : memref<36x256xf32, #tpu.memory_space<vmem>>, vector<4x256xf32>
    tpu.vector_store %arg5[%c24_228, %c0_229], %205 {strides = array<i32>} : memref<36x256xf32, #tpu.memory_space<vmem>>, vector<4x256xf32>,
    %c28_230 = arith.constant 28 : index
    %c0_231 = arith.constant 0 : index
    %208 = vector.load %arg5[%c28_230, %c0_231] : memref<36x256xf32, #tpu.memory_space<vmem>>, vector<4x256xf32>
    tpu.vector_store %arg5[%c28_230, %c0_231], %203 {strides = array<i32>} : memref<36x256xf32, #tpu.memory_space<vmem>>, vector<4x256xf32>,
    %c32_232 = arith.constant 32 : index
    %c0_233 = arith.constant 0 : index
    %209 = vector.load %arg5[%c32_232, %c0_233] : memref<36x256xf32, #tpu.memory_space<vmem>>, vector<4x256xf32>
    tpu.vector_store %arg5[%c32_232, %c0_233], %206 {strides = array<i32>} : memref<36x256xf32, #tpu.memory_space<vmem>>, vector<4x256xf32>,
    %c4_234 = arith.constant 4 : index
    %c0_235 = arith.constant 0 : index
    %c0_236 = arith.constant 0 : index
    %210 = vector.load %arg2[%c4_234, %c0_235, %c0_236] : memref<6x4x36xbf16, #tpu.memory_space<vmem>>, vector<1x4x36xbf16>
    %211 = vector.shape_cast %210 : vector<1x4x36xbf16> to vector<4x36xbf16>
    %c0_237 = arith.constant 0 : index
    %c0_238 = arith.constant 0 : index
    %212 = vector.load %arg5[%c0_237, %c0_238] : memref<36x256xf32, #tpu.memory_space<vmem>>, vector<36x256xf32>
    %213 = arith.truncf %212 : vector<36x256xf32> to vector<36x256xbf16>
    %cst_239 = arith.constant dense<0.000000e+00> : vector<4x256xf32>
    %214 = tpu.matmul %211, %213, %cst_239 {dimension_numbers = #tpu.dot_dimension_numbers<[1], [0], [0], [1], [0, 0, 1, 1], [], []>} : vector<4x36xbf16>, vector<36x256xbf16>, vector<4x256xf32> -> vector<4x256xf32>
    %cst_240 = arith.constant 0.000000e+00 : f32
    %215 = vector.broadcast %cst_240 : f32 to vector<4x256xf32>
    %216 = arith.cmpf ogt, %214, %215 : vector<4x256xf32>
    %cst_241 = arith.constant 0.00999999977 : f32
    %217 = vector.broadcast %cst_241 : f32 to vector<4x256xf32>
    %218 = arith.mulf %217, %214 : vector<4x256xf32>
    %219 = arith.select %216, %214, %218 : vector<4x256xi1>, vector<4x256xf32>
    %c0_242 = arith.constant 0 : index
    %c17_243 = arith.constant 17 : index
    %220 = vector.load %arg4[%c0_242, %c17_243] : memref<4x290xf32, #tpu.memory_space<vmem>>, vector<4x256xf32>
    tpu.vector_store %arg4[%c0_242, %c17_243], %219 {strides = array<i32>} : memref<4x290xf32, #tpu.memory_space<vmem>>, vector<4x256xf32>,
    %221 = vector.extract_strided_slice %219 {offsets = [0, 16], sizes = [4, 16], strides = [1, 1]} : vector<4x256xf32> to vector<4x16xf32>
    %c0_244 = arith.constant 0 : index
    %c1_245 = arith.constant 1 : index
    %222 = vector.load %arg4[%c0_244, %c1_245] : memref<4x290xf32, #tpu.memory_space<vmem>>, vector<4x16xf32>
    tpu.vector_store %arg4[%c0_244, %c1_245], %221 {strides = array<i32>} : memref<4x290xf32, #tpu.memory_space<vmem>>, vector<4x16xf32>,
    %223 = vector.extract_strided_slice %219 {offsets = [0, 224], sizes = [4, 16], strides = [1, 1]} : vector<4x256xf32> to vector<4x16xf32>
    %c0_246 = arith.constant 0 : index
    %c273_247 = arith.constant 273 : index
    %224 = vector.load %arg4[%c0_246, %c273_247] : memref<4x290xf32, #tpu.memory_space<vmem>>, vector<4x16xf32>
    tpu.vector_store %arg4[%c0_246, %c273_247], %223 {strides = array<i32>} : memref<4x290xf32, #tpu.memory_space<vmem>>, vector<4x16xf32>,
    %c0_248 = arith.constant 0 : index
    %c0_249 = arith.constant 0 : index
    %225 = vector.load %arg4[%c0_248, %c0_249] : memref<4x290xf32, #tpu.memory_space<vmem>>, vector<4x256xf32>
    %c0_250 = arith.constant 0 : index
    %c1_251 = arith.constant 1 : index
    %226 = vector.load %arg4[%c0_250, %c1_251] : memref<4x290xf32, #tpu.memory_space<vmem>>, vector<4x256xf32>
    %c0_252 = arith.constant 0 : index
    %c2_253 = arith.constant 2 : index
    %227 = vector.load %arg4[%c0_252, %c2_253] : memref<4x290xf32, #tpu.memory_space<vmem>>, vector<4x256xf32>
    %228 = arith.select %18, %227, %225 : vector<4x256xi1>, vector<4x256xf32>
    %229 = arith.select %20, %225, %227 : vector<4x256xi1>, vector<4x256xf32>
    %c0_254 = arith.constant 0 : index
    %c0_255 = arith.constant 0 : index
    %230 = vector.load %arg5[%c0_254, %c0_255] : memref<36x256xf32, #tpu.memory_space<vmem>>, vector<4x256xf32>
    tpu.vector_store %arg5[%c0_254, %c0_255], %228 {strides = array<i32>} : memref<36x256xf32, #tpu.memory_space<vmem>>, vector<4x256xf32>,
    %c4_256 = arith.constant 4 : index
    %c0_257 = arith.constant 0 : index
    %231 = vector.load %arg5[%c4_256, %c0_257] : memref<36x256xf32, #tpu.memory_space<vmem>>, vector<4x256xf32>
    tpu.vector_store %arg5[%c4_256, %c0_257], %226 {strides = array<i32>} : memref<36x256xf32, #tpu.memory_space<vmem>>, vector<4x256xf32>,
    %c8_258 = arith.constant 8 : index
    %c0_259 = arith.constant 0 : index
    %232 = vector.load %arg5[%c8_258, %c0_259] : memref<36x256xf32, #tpu.memory_space<vmem>>, vector<4x256xf32>
    tpu.vector_store %arg5[%c8_258, %c0_259], %229 {strides = array<i32>} : memref<36x256xf32, #tpu.memory_space<vmem>>, vector<4x256xf32>,
    %c0_260 = arith.constant 0 : index
    %c16_261 = arith.constant 16 : index
    %233 = vector.load %arg4[%c0_260, %c16_261] : memref<4x290xf32, #tpu.memory_space<vmem>>, vector<4x256xf32>
    %c0_262 = arith.constant 0 : index
    %c17_263 = arith.constant 17 : index
    %234 = vector.load %arg4[%c0_262, %c17_263] : memref<4x290xf32, #tpu.memory_space<vmem>>, vector<4x256xf32>
    %c0_264 = arith.constant 0 : index
    %c18_265 = arith.constant 18 : index
    %235 = vector.load %arg4[%c0_264, %c18_265] : memref<4x290xf32, #tpu.memory_space<vmem>>, vector<4x256xf32>
    %236 = arith.select %18, %235, %233 : vector<4x256xi1>, vector<4x256xf32>
    %237 = arith.select %20, %233, %235 : vector<4x256xi1>, vector<4x256xf32>
    %c12_266 = arith.constant 12 : index
    %c0_267 = arith.constant 0 : index
    %238 = vector.load %arg5[%c12_266, %c0_267] : memref<36x256xf32, #tpu.memory_space<vmem>>, vector<4x256xf32>
    tpu.vector_store %arg5[%c12_266, %c0_267], %236 {strides = array<i32>} : memref<36x256xf32, #tpu.memory_space<vmem>>, vector<4x256xf32>,
    %c16_268 = arith.constant 16 : index
    %c0_269 = arith.constant 0 : index
    %239 = vector.load %arg5[%c16_268, %c0_269] : memref<36x256xf32, #tpu.memory_space<vmem>>, vector<4x256xf32>
    tpu.vector_store %arg5[%c16_268, %c0_269], %234 {strides = array<i32>} : memref<36x256xf32, #tpu.memory_space<vmem>>, vector<4x256xf32>,
    %c20_270 = arith.constant 20 : index
    %c0_271 = arith.constant 0 : index
    %240 = vector.load %arg5[%c20_270, %c0_271] : memref<36x256xf32, #tpu.memory_space<vmem>>, vector<4x256xf32>
    tpu.vector_store %arg5[%c20_270, %c0_271], %237 {strides = array<i32>} : memref<36x256xf32, #tpu.memory_space<vmem>>, vector<4x256xf32>,
    %c0_272 = arith.constant 0 : index
    %c32_273 = arith.constant 32 : index
    %241 = vector.load %arg4[%c0_272, %c32_273] : memref<4x290xf32, #tpu.memory_space<vmem>>, vector<4x256xf32>
    %c0_274 = arith.constant 0 : index
    %c33_275 = arith.constant 33 : index
    %242 = vector.load %arg4[%c0_274, %c33_275] : memref<4x290xf32, #tpu.memory_space<vmem>>, vector<4x256xf32>
    %c0_276 = arith.constant 0 : index
    %c34_277 = arith.constant 34 : index
    %243 = vector.load %arg4[%c0_276, %c34_277] : memref<4x290xf32, #tpu.memory_space<vmem>>, vector<4x256xf32>
    %244 = arith.select %18, %243, %241 : vector<4x256xi1>, vector<4x256xf32>
    %245 = arith.select %20, %241, %243 : vector<4x256xi1>, vector<4x256xf32>
    %c24_278 = arith.constant 24 : index
    %c0_279 = arith.constant 0 : index
    %246 = vector.load %arg5[%c24_278, %c0_279] : memref<36x256xf32, #tpu.memory_space<vmem>>, vector<4x256xf32>
    tpu.vector_store %arg5[%c24_278, %c0_279], %244 {strides = array<i32>} : memref<36x256xf32, #tpu.memory_space<vmem>>, vector<4x256xf32>,
    %c28_280 = arith.constant 28 : index
    %c0_281 = arith.constant 0 : index
    %247 = vector.load %arg5[%c28_280, %c0_281] : memref<36x256xf32, #tpu.memory_space<vmem>>, vector<4x256xf32>
    tpu.vector_store %arg5[%c28_280, %c0_281], %242 {strides = array<i32>} : memref<36x256xf32, #tpu.memory_space<vmem>>, vector<4x256xf32>,
    %c32_282 = arith.constant 32 : index
    %c0_283 = arith.constant 0 : index
    %248 = vector.load %arg5[%c32_282, %c0_283] : memref<36x256xf32, #tpu.memory_space<vmem>>, vector<4x256xf32>
    tpu.vector_store %arg5[%c32_282, %c0_283], %245 {strides = array<i32>} : memref<36x256xf32, #tpu.memory_space<vmem>>, vector<4x256xf32>,
    %c5 = arith.constant 5 : index
    %c0_284 = arith.constant 0 : index
    %c0_285 = arith.constant 0 : index
    %249 = vector.load %arg2[%c5, %c0_284, %c0_285] : memref<6x4x36xbf16, #tpu.memory_space<vmem>>, vector<1x4x36xbf16>
    %250 = vector.shape_cast %249 : vector<1x4x36xbf16> to vector<4x36xbf16>
    %c0_286 = arith.constant 0 : index
    %c0_287 = arith.constant 0 : index
    %251 = vector.load %arg5[%c0_286, %c0_287] : memref<36x256xf32, #tpu.memory_space<vmem>>, vector<36x256xf32>
    %252 = arith.truncf %251 : vector<36x256xf32> to vector<36x256xbf16>
    %cst_288 = arith.constant dense<0.000000e+00> : vector<4x256xf32>
    %253 = tpu.matmul %250, %252, %cst_288 {dimension_numbers = #tpu.dot_dimension_numbers<[1], [0], [0], [1], [0, 0, 1, 1], [], []>} : vector<4x36xbf16>, vector<36x256xbf16>, vector<4x256xf32> -> vector<4x256xf32>
    %c0_289 = arith.constant 0 : index
    %c0_290 = arith.constant 0 : index
    %c0_291 = arith.constant 0 : index
    %254 = vector.load %arg3[%c0_289, %c0_290, %c0_291] : memref<1x4x256xf32, #tpu.memory_space<vmem>>, vector<1x4x256xf32>
    %255 = vector.shape_cast %254 : vector<1x4x256xf32> to vector<4x256xf32>
    %256 = vector.shape_cast %253 : vector<4x256xf32> to vector<1x4x256xf32>
    tpu.vector_store %arg3[%c0_289, %c0_290, %c0_291], %256 {strides = array<i32>} : memref<1x4x256xf32, #tpu.memory_space<vmem>>, vector<1x4x256xf32>,
    return
  }
  func.func @transform_0(%arg0: i32) -> (i32, i32, i32) {
    %c0_i32 = arith.constant 0 : i32
    %c0_i32_0 = arith.constant 0 : i32
    %c0_i32_1 = arith.constant 0 : i32
    return %arg0, %c0_i32, %c0_i32_0 : i32, i32, i32
  }
  func.func @transform_1(%arg0: i32) -> (i32, i32, i32) {
    %c0_i32 = arith.constant 0 : i32
    %c0_i32_0 = arith.constant 0 : i32
    %c0_i32_1 = arith.constant 0 : i32
    %c0_i32_2 = arith.constant 0 : i32
    return %c0_i32, %c0_i32_0, %c0_i32_1 : i32, i32, i32
  }
  func.func @transform_2(%arg0: i32) -> (i32, i32, i32) {
    %c0_i32 = arith.constant 0 : i32
    %c0_i32_0 = arith.constant 0 : i32
    %c0_i32_1 = arith.constant 0 : i32
    return %arg0, %c0_i32, %c0_i32_0 : i32, i32, i32
  }
}

</mosaic_0001>

<llo_original>
// kernel: multi_conv_block_forward.1
$region0: #{multi_conv_block_forward.1}
  #allocation0 [shape = 'u32[]', space=smem, size = 0x4, offset = 0x4, fixed_abs, tag = 'smem constant byte address 0x4 - core index']
  #allocation1 [shape = 'u32[72,128]{1,0:T(1,128)}', space=vmem, size = 0x9000, scoped, tag = 'internal scratch']
  #allocation2 [shape = 'f32[4,290]{1,0:T(4,128)}', space=vmem, size = 0x1800, scoped, tag = 'scratch operand']
  #allocation3 [shape = 'f32[36,256]{1,0:T(8,128)}', space=vmem, size = 0xa000, scoped, tag = 'scratch operand']
  %s0 = inlined_call_operand.vmem [shape: f32[2,4,256], index: 0, kind: input, shape index: {}]
  %s1 = inlined_call_operand.vmem [shape: bf16[6,4,36], index: 1, kind: input, shape index: {}]
  %s2 = inlined_call_operand.vmem [shape: f32[2,4,256], index: 2, kind: output, shape index: {}]
  %s3 = sld [smem:[#allocation0]]
  $region41: #{multi_conv_block_forward.1} parent=0
    _
  %s5 = ssub.s32 1, %s3
  %s6 = scalar_select 0, %s5, %s3
  loop: start=0, step=1, limit=4
  $region2: #{multi_conv_block_forward.1} parent=0 // loop_pre_header
    _
  $region3: #{multi_conv_block_forward.1} parent=0 // loop_header
    %s8 = sphi 0, %s12
    %p9 = scmp.ge.s32.totalorder %s8, 4
    %s18 = sphi 0, %s20
    %s21 = sphi 0, %s18
    %s22 = sphi 0, %s21
    %s38 = sphi 0, %s22
    %s42 = sphi 0, %s42
    %s44 = sphi 0, %s42
    %s45 = sphi 0, %s44
    %s59 = sphi 0, %s45
    %s65 = sphi 0, %s67
    %s68 = sphi 0, %s65
    %s69 = sphi 0, %s68
    %s85 = sphi 0, %s69
  $region4: #{multi_conv_block_forward.1} parent=0 // loop_header_branch
    %11 = sbr.rel (%p9) target = $region8
  $region5: #{multi_conv_block_forward.1} parent=0 // loop_body
    %s13 = ssub.s32 %s8, 1
    %s14 = ssub.s32 %s8, 2
    %s15 = sadd.s32 %s8, 1
    %s16 = ssub.s32 %s8, %s15
    %p17 = scmp.eq.s32.totalorder %s16, 0
    %s19 = sadd.s32 %s18, 1
    %s20 = scalar_select %p17, %s18, %s19
    %p23 = pneg %p17
    %p24 = scmp.eq.s32.totalorder %s8, 1
    %p25 = por %p23, %p24
    %p26 = scmp.ne.s32.totalorder %s18, %s21
    %p27 = scmp.eq.s32.totalorder %s8, 0
    %p28 = por %p26, %p27
    %p29 = scmp.ne.s32.totalorder %s18, %s21
    %p30 = scmp.eq.s32.totalorder %s13, 1
    %p31 = por %p29, %p30
    %p32 = scmp.ne.s32.totalorder %s21, %s22
    %p33 = scmp.eq.s32.totalorder %s13, 0
    %p34 = por %p32, %p33
    %p35 = scmp.ne.s32.totalorder %s21, %s22
    %p36 = scmp.eq.s32.totalorder %s14, 1
    %p37 = por %p35, %p36
    %p39 = scmp.ne.s32.totalorder %s22, %s38
    %p40 = scmp.eq.s32.totalorder %s14, 0
    %p41 = por %p39, %p40
    %s43 = sadd.s32 %s42, 1
    %p46 = scmp.eq.s32.totalorder %s8, 1
    %p47 = scmp.ne.s32.totalorder %s42, %s44
    %p48 = scmp.eq.s32.totalorder %s8, 0
    %p49 = por %p47, %p48
    %p50 = scmp.ne.s32.totalorder %s42, %s44
    %p51 = scmp.eq.s32.totalorder %s13, 1
    %p52 = por %p50, %p51
    %p53 = scmp.ne.s32.totalorder %s44, %s45
    %p54 = scmp.eq.s32.totalorder %s13, 0
    %p55 = por %p53, %p54
    %p56 = scmp.ne.s32.totalorder %s44, %s45
    %p57 = scmp.eq.s32.totalorder %s14, 1
    %p58 = por %p56, %p57
    %p60 = scmp.ne.s32.totalorder %s45, %s59
    %p61 = scmp.eq.s32.totalorder %s14, 0
    %p62 = por %p60, %p61
    %s63 = ssub.s32 %s8, %s15
    %p64 = scmp.eq.s32.totalorder %s63, 0
    %s66 = sadd.s32 %s65, 1
    %s67 = scalar_select %p64, %s65, %s66
    %p70 = pneg %p64
    %p71 = scmp.eq.s32.totalorder %s8, 1
    %p72 = por %p70, %p71
    %p73 = scmp.ne.s32.totalorder %s65, %s68
    %p74 = scmp.eq.s32.totalorder %s8, 0
    %p75 = por %p73, %p74
    %p76 = scmp.ne.s32.totalorder %s65, %s68
    %p77 = scmp.eq.s32.totalorder %s13, 1
    %p78 = por %p76, %p77
    %p79 = scmp.ne.s32.totalorder %s68, %s69
    %p80 = scmp.eq.s32.totalorder %s13, 0
    %p81 = por %p79, %p80
    %p82 = scmp.ne.s32.totalorder %s68, %s69
    %p83 = scmp.eq.s32.totalorder %s14, 1
    %p84 = por %p82, %p83
    %p86 = scmp.ne.s32.totalorder %s69, %s85
    %p87 = scmp.eq.s32.totalorder %s14, 0
    %p88 = por %p86, %p87
    %p89 = scmp.le.s32.totalorder 1, %s8
    %p90 = scmp.lt.s32.totalorder %s8, 3
    %p91 = pnand %p89, %p90
    %p92 = pneg %p91
    // Predicated region
    $region9: #{multi_conv_block_forward.1} parent=5 // pred_check
      _
    $region10: #{multi_conv_block_forward.1} parent=5 // pred_check_branch
      %94 = sbr.rel (%p91) target = $region12
    $region11: #{multi_conv_block_forward.1} parent=5 // pred_region
      %s95 = ssub.s32 %s8, 1
      // Predicated region
      $region13: #{multi_conv_block_forward.1} parent=11 // pred_check
        %p96 = pneg %p55
      $region14: #{multi_conv_block_forward.1} parent=11 // pred_check_branch
        %98 = sbr.rel (%p96) target = $region16
      $region15: #{multi_conv_block_forward.1} parent=11 // pred_region
        _
      $region16: #{multi_conv_block_forward.1} parent=11 // pred_fallthru
        _
    $region12: #{multi_conv_block_forward.1} parent=5 // pred_fallthru
      _
    %p99 = scmp.lt.s32.totalorder %s8, 2
    // Predicated region
    $region17: #{multi_conv_block_forward.1} parent=5 // pred_check
      %p100 = pneg %p99
    $region18: #{multi_conv_block_forward.1} parent=5 // pred_check_branch
      %102 = sbr.rel (%p100) target = $region20
    $region19: #{multi_conv_block_forward.1} parent=5 // pred_region
      // Predicated region
      $region21: #{multi_conv_block_forward.1} parent=19 // pred_check
        %p103 = pneg %p28
      $region22: #{multi_conv_block_forward.1} parent=19 // pred_check_branch
        %105 = sbr.rel (%p103) target = $region24
      $region23: #{multi_conv_block_forward.1} parent=19 // pred_region
        %p106 = scmp.lt.s32.totalorder %s8, 1
        %s107 = scalar_select %p106, %s8, 1
        %s108 = smul.addr %s107, 2
        %s109 = smul.addr %s108, 4
        %s110 = scalar_lea.vmem %s0, %s109
      $region24: #{multi_conv_block_forward.1} parent=19 // pred_fallthru
        _
    $region20: #{multi_conv_block_forward.1} parent=5 // pred_fallthru
      _
    %p111 = scmp.le.s32.totalorder 1, %s8
    %p112 = scmp.lt.s32.totalorder %s8, 3
    %p113 = pnand %p111, %p112
    %p114 = pneg %p113
    // Predicated region
    $region25: #{multi_conv_block_forward.1} parent=5 // pred_check
      _
    $region26: #{multi_conv_block_forward.1} parent=5 // pred_check_branch
      %116 = sbr.rel (%p113) target = $region28
    $region27: #{multi_conv_block_forward.1} parent=5 // pred_region
      %s117 = ssub.s32 %s8, 1
      %p118 = scmp.lt.s32.totalorder %s13, 1
      %s119 = scalar_select %p118, %s13, 1
      %s120 = smul.addr %s119, 2
      %s121 = smul.addr %s120, 4
      %s122 = scalar_lea.vmem %s0, %s121
      %p123 = pneg %p34
      %p124 = pneg %p31
      %p125 = pneg %p55
      %p126 = pneg %p52
      %p127 = pneg %p81
      %p128 = pneg %p78
      %p129 = scmp.lt.s32.totalorder %s13, 1
      %s130 = scalar_select %p129, %s13, 1
      %s131 = smul.addr %s130, 2
      %s132 = smul.addr %s131, 4
      %s133 = scalar_lea.vmem %s2, %s132
      %p134 = scmp.lt.s32.totalorder %s13, 1
      %s135 = scalar_select %p134, %s13, 1
      %s136 = smul.addr %s135, 2
      %s137 = smul.addr %s136, 4
      %s138 = scalar_lea.vmem %s0, %s137
      %p139 = scmp.lt.s32.totalorder %s13, 1
      %s140 = scalar_select %p139, %s13, 1
      %s141 = smul.addr %s140, 2
      %s142 = smul.addr %s141, 4
      %s143 = scalar_lea.vmem %s2, %s142
      %v145 = vlaneseq
      %v146 = vand.u32 %v145, 127
      %v147 = vadd.s32 %v146, 128
      %vm148 = vcmp.lt.s32.totalorder %v146, 0
      %v149 = vsub.s32 0, %v146
      %v150 = vsel %vm148, %v149, %v146
      %v151 = vshrl.u32 %v150, 4
      %v152 = vand.u32 %v150, 15
      %v153 = vsub.s32 0, %v152
      %v154 = vsel %vm148, %v153, %v152
      %vm155 = vcmp.lt.s32.totalorder %v147, 0
      %v156 = vsub.s32 0, %v147
      %v157 = vsel %vm155, %v156, %v147
      %v158 = vshrl.u32 %v157, 4
      %v159 = vand.u32 %v157, 15
      %v160 = vsub.s32 0, %v159
      %v161 = vsel %vm155, %v160, %v159
      %vm162 = vcmp.ne.s32.totalorder %v154, 0
      %vm163 = vcmp.ne.s32.totalorder %v161, 0
      %vm164 = vcmp.lt.s32.totalorder %v154, 0
      %vm165 = vcmp.lt.s32.totalorder %v161, 0
      %vm166 = vmand %vm164, %vm162
      %vm167 = vmand %vm165, %vm163
      %v168 = vadd.s32 %v154, 16
      %v169 = vadd.s32 %v161, 16
      %v170 = vsel %vm166, %v168, %v154
      %v171 = vsel %vm167, %v169, %v161
      %vm172 = vcmp.eq.s32.totalorder %v170, 0
      %vm173 = vcmp.eq.s32.totalorder %v171, 0
      %vm174 = vcmp.eq.s32.totalorder %v170, 15
      %vm175 = vcmp.eq.s32.totalorder %v171, 15
      %176 = vst [vmem:[#allocation2] sm:$0xff] 0.0
      %vm177 = vcmask 273408
      %178 = vst.msk [vmem:[#allocation2 + $0x8] sm:$0xf] %vm177, 0.0
      %v179 = vld [vmem:[%s138] sm:$0xff]
      %181 = vrot.lane.b32.xlu0 %v179, 17
      %v182 = vpop.permute.xlu0 %181
      %v183 = vrot.slane %v182, 4
      %vm184 = vcmask 138240
      %v185 = vsel %vm184, %v183, %v182
      %vm188 = vcmask 1043592
      %vm189 = vcmask 1047556
      %vm190 = vmor %vm189, %vm188
      %191 = vst.msk [vmem:[#allocation2] sm:$0xff] %vm190, %v185
      %vm192 = vcmask 134144
      %193 = vst.msk [vmem:[#allocation2 + $0x8] sm:$0xf] %vm192, %v183
      %194 = vrot.lane.b32.xlu0 %v179, 113
      %v195 = vpop.permute.xlu0 %194
      %vm197 = vcmask 134152
      %198 = vst.msk [vmem:[#allocation2] sm:$0xf] %vm197, %v195
      %199 = vrot.lane.b32.xlu0 %v179, 49
      %v200 = vpop.permute.xlu0 %199
      %v201 = vrot.slane %v200, 4
      %vm203 = vcmask 265352
      %204 = vst.msk [vmem:[#allocation2 + $0x8] sm:$0xf] %vm203, %v201
      %v205 = vld [vmem:[#allocation2] sm:$0xff]
      %v206 = vld [vmem:[#allocation2 + $0x8] sm:$0xf]
      %209 = vst [vmem:[#allocation1] ss:$2 sm:$0xff] %v205
      %s210 = scalar_lea.vmem [#allocation1], 16
      %211 = vst [vmem:[%s210] ss:$2 sm:$0xff] %v206
      %v212 = vld.sshfl [vmem:[#allocation1] sm:$0xff pattern:$0x75316420]
      %v213 = vld.sshfl [vmem:[#allocation1 + $0x8] sm:$0xff pattern:$0x75316420]
      %v214 = vld.sshfl [vmem:[#allocation1 + $0x10] sm:$0xff pattern:$0x75316420]
      %215 = vrot.lane.b32.xlu0 %v212, 126
      %v216 = vpop.permute.xlu0 %215
      %217 = vrot.lane.b32.xlu0 %v213, 126
      %v218 = vpop.permute.xlu0 %217
      %219 = vrot.lane.b32.xlu0 %v214, 126
      %v220 = vpop.permute.xlu0 %219
      %vm221 = vcmask 1031168
      %v222 = vsel %vm221, %v216, %v218
      %v223 = vsel %vm221, %v218, %v220
      %226 = vst [vmem:[#allocation1] ss:$2 sm:$0xff] %v205
      %v227 = vld.sshfl [vmem:[#allocation1] sm:$0xff pattern:$0x75316420]
      %v228 = vld.sshfl [vmem:[#allocation1 + $0x8] sm:$0xff pattern:$0x75316420]
      %v231 = vsel %vm172, %v222, %v227
      %v232 = vsel %vm173, %v223, %v228
      %233 = vst [vmem:[#allocation1] ss:$2 sm:$0xff] %v205
      %v234 = vld.sshfl [vmem:[#allocation1] sm:$0xff pattern:$0x75316420]
      %v235 = vld.sshfl [vmem:[#allocation1 + $0x8] sm:$0xff pattern:$0x75316420]
      %238 = vst [vmem:[#allocation1] ss:$2 sm:$0xff] %v205
      %s239 = scalar_lea.vmem [#allocation1], 16
      %240 = vst [vmem:[%s239] ss:$2 sm:$0xff] %v206
      %v241 = vld.sshfl [vmem:[#allocation1] sm:$0xff pattern:$0x75316420]
      %v242 = vld.sshfl [vmem:[#allocation1 + $0x8] sm:$0xff pattern:$0x75316420]
      %v243 = vld.sshfl [vmem:[#allocation1 + $0x10] sm:$0xff pattern:$0x75316420]
      %244 = vrot.lane.b32.xlu0 %v241, 126
      %v245 = vpop.permute.xlu0 %244
      %246 = vrot.lane.b32.xlu0 %v242, 126
      %v247 = vpop.permute.xlu0 %246
      %248 = vrot.lane.b32.xlu0 %v243, 126
      %v249 = vpop.permute.xlu0 %248
      %v250 = vsel %vm221, %v245, %v247
      %v251 = vsel %vm221, %v247, %v249
      %v254 = vsel %vm174, %v234, %v250
      %v255 = vsel %vm175, %v235, %v251
      %256 = vst [vmem:[#allocation3] sm:$0xf] %v231
      %257 = vst [vmem:[#allocation3 + $0x8] sm:$0xf] %v232
      %s258 = scalar_lea.vmem [#allocation1], 1
      %259 = vst [vmem:[%s258] ss:$2 sm:$0xff] %v205
      %s260 = scalar_lea.vmem [#allocation1], 17
      %261 = vst [vmem:[%s260] ss:$2 sm:$0xff] %v206
      %v262 = vld.sshfl [vmem:[#allocation1] sm:$0xff pattern:$0x75316420]
      %v263 = vld.sshfl [vmem:[#allocation1 + $0x8] sm:$0xff pattern:$0x75316420]
      %v264 = vld.sshfl [vmem:[#allocation1 + $0x10] sm:$0xff pattern:$0x75316420]
      %265 = vrot.lane.b32.xlu0 %v262, 127
      %v266 = vpop.permute.xlu0 %265
      %267 = vrot.lane.b32.xlu0 %v263, 127
      %v268 = vpop.permute.xlu0 %267
      %269 = vrot.lane.b32.xlu0 %v264, 127
      %v270 = vpop.permute.xlu0 %269
      %vm271 = vcmask 1039360
      %v272 = vsel %vm271, %v266, %v268
      %v273 = vsel %vm271, %v268, %v270
      %276 = vst [vmem:[#allocation3] sm:$0xf0] %v272
      %277 = vst [vmem:[#allocation3 + $0x8] sm:$0xf0] %v273
      %278 = vst [vmem:[#allocation3 + $0x10] sm:$0xf] %v254
      %279 = vst [vmem:[#allocation3 + $0x18] sm:$0xf] %v255
      %v280 = vld [vmem:[#allocation2] sm:$0xff]
      %v281 = vld [vmem:[#allocation2 + $0x8] sm:$0xf]
      %284 = vst [vmem:[#allocation1] ss:$2 sm:$0xff] %v280
      %s285 = scalar_lea.vmem [#allocation1], 16
      %286 = vst [vmem:[%s285] ss:$2 sm:$0xff] %v281
      %v287 = vld.sshfl [vmem:[#allocation1] sm:$0xff pattern:$0x75316420]
      %v288 = vld.sshfl [vmem:[#allocation1 + $0x8] sm:$0xff pattern:$0x75316420]
      %v289 = vld.sshfl [vmem:[#allocation1 + $0x10] sm:$0xff pattern:$0x75316420]
      %290 = vrot.lane.b32.xlu0 %v287, 110
      %v291 = vpop.permute.xlu0 %290
      %292 = vrot.lane.b32.xlu0 %v288, 110
      %v293 = vpop.permute.xlu0 %292
      %294 = vrot.lane.b32.xlu0 %v289, 110
      %v295 = vpop.permute.xlu0 %294
      %vm296 = vcmask 900096
      %v297 = vsel %vm296, %v291, %v293
      %v298 = vsel %vm296, %v293, %v295
      %301 = vst [vmem:[#allocation1] ss:$2 sm:$0xff] %v280
      %s302 = scalar_lea.vmem [#allocation1], 16
      %303 = vst [vmem:[%s302] ss:$2 sm:$0xff] %v281
      %v304 = vld.sshfl [vmem:[#allocation1] sm:$0xff pattern:$0x75316420]
      %v305 = vld.sshfl [vmem:[#allocation1 + $0x8] sm:$0xff pattern:$0x75316420]
      %v306 = vld.sshfl [vmem:[#allocation1 + $0x10] sm:$0xff pattern:$0x75316420]
      %307 = vrot.lane.b32.xlu0 %v304, 112
      %v308 = vpop.permute.xlu0 %307
      %309 = vrot.lane.b32.xlu0 %v305, 112
      %v310 = vpop.permute.xlu0 %309
      %311 = vrot.lane.b32.xlu0 %v306, 112
      %v312 = vpop.permute.xlu0 %311
      %vm313 = vcmask 916480
      %v314 = vsel %vm313, %v308, %v310
      %v315 = vsel %vm313, %v310, %v312
      %v318 = vsel %vm172, %v297, %v314
      %v319 = vsel %vm173, %v298, %v315
      %320 = vst [vmem:[#allocation1] ss:$2 sm:$0xff] %v280
      %s321 = scalar_lea.vmem [#allocation1], 16
      %322 = vst [vmem:[%s321] ss:$2 sm:$0xff] %v281
      %v323 = vld.sshfl [vmem:[#allocation1] sm:$0xff pattern:$0x75316420]
      %v324 = vld.sshfl [vmem:[#allocation1 + $0x8] sm:$0xff pattern:$0x75316420]
      %v325 = vld.sshfl [vmem:[#allocation1 + $0x10] sm:$0xff pattern:$0x75316420]
      %326 = vrot.lane.b32.xlu0 %v323, 112
      %v327 = vpop.permute.xlu0 %326
      %328 = vrot.lane.b32.xlu0 %v324, 112
      %v329 = vpop.permute.xlu0 %328
      %330 = vrot.lane.b32.xlu0 %v325, 112
      %v331 = vpop.permute.xlu0 %330
      %v332 = vsel %vm313, %v327, %v329
      %v333 = vsel %vm313, %v329, %v331
      %336 = vst [vmem:[#allocation1] ss:$2 sm:$0xff] %v280
      %s337 = scalar_lea.vmem [#allocation1], 16
      %338 = vst [vmem:[%s337] ss:$2 sm:$0xff] %v281
      %v339 = vld.sshfl [vmem:[#allocation1] sm:$0xff pattern:$0x75316420]
      %v340 = vld.sshfl [vmem:[#allocation1 + $0x8] sm:$0xff pattern:$0x75316420]
      %v341 = vld.sshfl [vmem:[#allocation1 + $0x10] sm:$0xff pattern:$0x75316420]
      %342 = vrot.lane.b32.xlu0 %v339, 110
      %v343 = vpop.permute.xlu0 %342
      %344 = vrot.lane.b32.xlu0 %v340, 110
      %v345 = vpop.permute.xlu0 %344
      %346 = vrot.lane.b32.xlu0 %v341, 110
      %v347 = vpop.permute.xlu0 %346
      %v348 = vsel %vm296, %v343, %v345
      %v349 = vsel %vm296, %v345, %v347
      %v352 = vsel %vm174, %v332, %v348
      %v353 = vsel %vm175, %v333, %v349
      %v356 = vrot.slane %v318, 4
      %v357 = vrot.slane %v319, 4
      %360 = vst [vmem:[#allocation3 + $0x10] sm:$0xf0] %v356
      %361 = vst [vmem:[#allocation3 + $0x18] sm:$0xf0] %v357
      %362 = vst [vmem:[#allocation1] ss:$2 sm:$0xff] %v280
      %s363 = scalar_lea.vmem [#allocation1], 16
      %364 = vst [vmem:[%s363] ss:$2 sm:$0xff] %v281
      %v365 = vld.sshfl [vmem:[#allocation1] sm:$0xff pattern:$0x75316420]
      %v366 = vld.sshfl [vmem:[#allocation1 + $0x8] sm:$0xff pattern:$0x75316420]
      %v367 = vld.sshfl [vmem:[#allocation1 + $0x10] sm:$0xff pattern:$0x75316420]
      %368 = vrot.lane.b32.xlu0 %v365, 111
      %v369 = vpop.permute.xlu0 %368
      %370 = vrot.lane.b32.xlu0 %v366, 111
      %v371 = vpop.permute.xlu0 %370
      %372 = vrot.lane.b32.xlu0 %v367, 111
      %v373 = vpop.permute.xlu0 %372
      %vm374 = vcmask 908288
      %v375 = vsel %vm374, %v369, %v371
      %v376 = vsel %vm374, %v371, %v373
      %379 = vst [vmem:[#allocation3 + $0x20] sm:$0xf] %v375
      %380 = vst [vmem:[#allocation3 + $0x28] sm:$0xf] %v376
      %v383 = vrot.slane %v352, 4
      %v384 = vrot.slane %v353, 4
      %387 = vst [vmem:[#allocation3 + $0x20] sm:$0xf0] %v383
      %388 = vst [vmem:[#allocation3 + $0x28] sm:$0xf0] %v384
      %v389 = vld [vmem:[#allocation2] sm:$0xff]
      %v390 = vld [vmem:[#allocation2 + $0x8] sm:$0xf]
      %393 = vst [vmem:[#allocation1] ss:$2 sm:$0xff] %v389
      %s394 = scalar_lea.vmem [#allocation1], 16
      %395 = vst [vmem:[%s394] ss:$2 sm:$0xff] %v390
      %v396 = vld.sshfl [vmem:[#allocation1] sm:$0xff pattern:$0x75316420]
      %v397 = vld.sshfl [vmem:[#allocation1 + $0x8] sm:$0xff pattern:$0x75316420]
      %v398 = vld.sshfl [vmem:[#allocation1 + $0x10] sm:$0xff pattern:$0x75316420]
      %399 = vrot.lane.b32.xlu0 %v396, 94
      %v400 = vpop.permute.xlu0 %399
      %401 = vrot.lane.b32.xlu0 %v397, 94
      %v402 = vpop.permute.xlu0 %401
      %403 = vrot.lane.b32.xlu0 %v398, 94
      %v404 = vpop.permute.xlu0 %403
      %vm405 = vcmask 769024
      %v406 = vsel %vm405, %v400, %v402
      %v407 = vsel %vm405, %v402, %v404
      %410 = vst [vmem:[#allocation1] ss:$2 sm:$0xff] %v389
      %s411 = scalar_lea.vmem [#allocation1], 16
      %412 = vst [vmem:[%s411] ss:$2 sm:$0xff] %v390
      %v413 = vld.sshfl [vmem:[#allocation1] sm:$0xff pattern:$0x75316420]
      %v414 = vld.sshfl [vmem:[#allocation1 + $0x8] sm:$0xff pattern:$0x75316420]
      %v415 = vld.sshfl [vmem:[#allocation1 + $0x10] sm:$0xff pattern:$0x75316420]
      %416 = vrot.lane.b32.xlu0 %v413, 96
      %v417 = vpop.permute.xlu0 %416
      %418 = vrot.lane.b32.xlu0 %v414, 96
      %v419 = vpop.permute.xlu0 %418
      %420 = vrot.lane.b32.xlu0 %v415, 96
      %v421 = vpop.permute.xlu0 %420
      %vm422 = vcmask 785408
      %v423 = vsel %vm422, %v417, %v419
      %v424 = vsel %vm422, %v419, %v421
      %v427 = vsel %vm172, %v406, %v423
      %v428 = vsel %vm173, %v407, %v424
      %429 = vst [vmem:[#allocation1] ss:$2 sm:$0xff] %v389
      %s430 = scalar_lea.vmem [#allocation1], 16
      %431 = vst [vmem:[%s430] ss:$2 sm:$0xff] %v390
      %v432 = vld.sshfl [vmem:[#allocation1] sm:$0xff pattern:$0x75316420]
      %v433 = vld.sshfl [vmem:[#allocation1 + $0x8] sm:$0xff pattern:$0x75316420]
      %v434 = vld.sshfl [vmem:[#allocation1 + $0x10] sm:$0xff pattern:$0x75316420]
      %435 = vrot.lane.b32.xlu0 %v432, 96
      %v436 = vpop.permute.xlu0 %435
      %437 = vrot.lane.b32.xlu0 %v433, 96
      %v438 = vpop.permute.xlu0 %437
      %439 = vrot.lane.b32.xlu0 %v434, 96
      %v440 = vpop.permute.xlu0 %439
      %v441 = vsel %vm422, %v436, %v438
      %v442 = vsel %vm422, %v438, %v440
      %445 = vst [vmem:[#allocation1] ss:$2 sm:$0xff] %v389
      %s446 = scalar_lea.vmem [#allocation1], 16
      %447 = vst [vmem:[%s446] ss:$2 sm:$0xff] %v390
      %v448 = vld.sshfl [vmem:[#allocation1] sm:$0xff pattern:$0x75316420]
      %v449 = vld.sshfl [vmem:[#allocation1 + $0x8] sm:$0xff pattern:$0x75316420]
      %v450 = vld.sshfl [vmem:[#allocation1 + $0x10] sm:$0xff pattern:$0x75316420]
      %451 = vrot.lane.b32.xlu0 %v448, 94
      %v452 = vpop.permute.xlu0 %451
      %453 = vrot.lane.b32.xlu0 %v449, 94
      %v454 = vpop.permute.xlu0 %453
      %455 = vrot.lane.b32.xlu0 %v450, 94
      %v456 = vpop.permute.xlu0 %455
      %v457 = vsel %vm405, %v452, %v454
      %v458 = vsel %vm405, %v454, %v456
      %v461 = vsel %vm174, %v441, %v457
      %v462 = vsel %vm175, %v442, %v458
      %463 = vst [vmem:[#allocation3 + $0x30] sm:$0xf] %v427
      %464 = vst [vmem:[#allocation3 + $0x38] sm:$0xf] %v428
      %s465 = scalar_lea.vmem [#allocation1], 1
      %466 = vst [vmem:[%s465] ss:$2 sm:$0xff] %v389
      %s467 = scalar_lea.vmem [#allocation1], 17
      %468 = vst [vmem:[%s467] ss:$2 sm:$0xff] %v390
      %v469 = vld.sshfl [vmem:[#allocation1] sm:$0xff pattern:$0x75316420]
      %v470 = vld.sshfl [vmem:[#allocation1 + $0x8] sm:$0xff pattern:$0x75316420]
      %v471 = vld.sshfl [vmem:[#allocation1 + $0x10] sm:$0xff pattern:$0x75316420]
      %472 = vrot.lane.b32.xlu0 %v469, 95
      %v473 = vpop.permute.xlu0 %472
      %474 = vrot.lane.b32.xlu0 %v470, 95
      %v475 = vpop.permute.xlu0 %474
      %476 = vrot.lane.b32.xlu0 %v471, 95
      %v477 = vpop.permute.xlu0 %476
      %vm478 = vcmask 777216
      %v479 = vsel %vm478, %v473, %v475
      %v480 = vsel %vm478, %v475, %v477
      %483 = vst [vmem:[#allocation3 + $0x30] sm:$0xf0] %v479
      %484 = vst [vmem:[#allocation3 + $0x38] sm:$0xf0] %v480
      %485 = vst [vmem:[#allocation3 + $0x40] sm:$0xf] %v461
      %486 = vst [vmem:[#allocation3 + $0x48] sm:$0xf] %v462
      %v487 = vld [vmem:[%s1] sm:$0x3]
      %v488 = vld [vmem:[#allocation3] sm:$0xff]
      %v489 = vld [vmem:[#allocation3 + $0x8] sm:$0xff]
      %v490 = vld [vmem:[#allocation3 + $0x10] sm:$0xff]
      %v491 = vld [vmem:[#allocation3 + $0x18] sm:$0xff]
      %v492 = vld [vmem:[#allocation3 + $0x20] sm:$0xff]
      %v493 = vld [vmem:[#allocation3 + $0x28] sm:$0xff]
      %v494 = vld [vmem:[#allocation3 + $0x30] sm:$0xff]
      %v495 = vld [vmem:[#allocation3 + $0x38] sm:$0xff]
      %v496 = vld [vmem:[#allocation3 + $0x40] sm:$0xf]
      %v497 = vld [vmem:[#allocation3 + $0x48] sm:$0xf]
      %v498 = vpack.c.bf16 %v490, %v488
      %v499 = vpack.c.bf16 %v491, %v489
      %v500 = vpack.c.bf16 %v494, %v492
      %v501 = vpack.c.bf16 %v495, %v493
      %v502 = vpack.c.bf16 %v496, %v496
      %v503 = vpack.c.bf16 %v497, %v497
      %vm504 = vcmask 293888
      %v506 = vsel %vm504, %v487, 0
      %vm508 = vcmask 1041408
      %v510 = vsel %vm508, %v502, 0
      %v513 = vsel %vm508, %v503, 0
      %515 = vmatpush.bf16.msra.mxu0 0
      %516 = vmatpush.bf16.msra.mxu0 0
      %517 = vmatpush.bf16.msra.mxu0 0
      %518 = vmatpush.bf16.msra.mxu0 0
      %519 = vmatpush.bf16.msra.mxu0 0
      %520 = vmatpush.bf16.msra.mxu0 %v510
      %521 = vmatpush.bf16.msra.mxu0 %v500
      %522 = vmatpush.bf16.msra.mxu0 %v498
      %523 = vmatmul.bf16.gmra.mxu0 %v506
      %v524 = vpop.f32.mrf.mxu0
      %v525 = vadd.f32 0.0, %v524
      %v526 = vpop.f32.mrf.mxu0
      %527 = vdwg.mxu0
      %528 = vmatpush.bf16.msra.mxu0 0
      %529 = vmatpush.bf16.msra.mxu0 0
      %530 = vmatpush.bf16.msra.mxu0 0
      %531 = vmatpush.bf16.msra.mxu0 0
      %532 = vmatpush.bf16.msra.mxu0 0
      %533 = vmatpush.bf16.msra.mxu0 %v513
      %534 = vmatpush.bf16.msra.mxu0 %v501
      %535 = vmatpush.bf16.msra.mxu0 %v499
      %536 = vmatmul.bf16.gmra.mxu0 %v506
      %v537 = vpop.f32.mrf.mxu0
      %v538 = vadd.f32 0.0, %v537
      %v539 = vpop.f32.mrf.mxu0
      %540 = vdwg.mxu0
      %vm541 = vcmp.gt.f32.partialorder %v525, 0.0
      %vm542 = vcmp.gt.f32.partialorder %v538, 0.0
      %v543 = vmul.f32 %v525, 0.01
      %v544 = vmul.f32 %v538, 0.01
      %v545 = vsel %vm541, %v525, %v543
      %v546 = vsel %vm542, %v538, %v544
      %v549 = vrot.slane %v546, 4
      %vm550 = vcmask 1043456
      %v551 = vsel %vm550, %v545, %v549
      %552 = vrot.lane.b32.xlu0 %v551, 17
      %v553 = vpop.permute.xlu0 %552
      %v554 = vrot.slane %v553, 4
      %v555 = vsel %vm184, %v554, %v553
      %558 = vst.msk [vmem:[#allocation2] sm:$0xff] %vm190, %v555
      %559 = vst.msk [vmem:[#allocation2 + $0x8] sm:$0xf] %vm192, %v554
      %560 = vrot.lane.b32.xlu0 %v545, 113
      %v561 = vpop.permute.xlu0 %560
      %563 = vst.msk [vmem:[#allocation2] sm:$0xf] %vm197, %v561
      %564 = vrot.lane.b32.xlu0 %v546, 49
      %v565 = vpop.permute.xlu0 %564
      %567 = vst.msk [vmem:[#allocation2 + $0x8] sm:$0xf] %vm203, %v565
      %v568 = vld [vmem:[#allocation2] sm:$0xff]
      %v569 = vld [vmem:[#allocation2 + $0x8] sm:$0xf]
      %572 = vst [vmem:[#allocation1] ss:$2 sm:$0xff] %v568
      %s573 = scalar_lea.vmem [#allocation1], 16
      %574 = vst [vmem:[%s573] ss:$2 sm:$0xff] %v569
      %v575 = vld.sshfl [vmem:[#allocation1] sm:$0xff pattern:$0x75316420]
      %v576 = vld.sshfl [vmem:[#allocation1 + $0x8] sm:$0xff pattern:$0x75316420]
      %v577 = vld.sshfl [vmem:[#allocation1 + $0x10] sm:$0xff pattern:$0x75316420]
      %578 = vrot.lane.b32.xlu0 %v575, 126
      %v579 = vpop.permute.xlu0 %578
      %580 = vrot.lane.b32.xlu0 %v576, 126
      %v581 = vpop.permute.xlu0 %580
      %582 = vrot.lane.b32.xlu0 %v577, 126
      %v583 = vpop.permute.xlu0 %582
      %v584 = vsel %vm221, %v579, %v581
      %v585 = vsel %vm221, %v581, %v583
      %588 = vst [vmem:[#allocation1] ss:$2 sm:$0xff] %v568
      %v589 = vld.sshfl [vmem:[#allocation1] sm:$0xff pattern:$0x75316420]
      %v590 = vld.sshfl [vmem:[#allocation1 + $0x8] sm:$0xff pattern:$0x75316420]
      %v593 = vsel %vm172, %v584, %v589
      %v594 = vsel %vm173, %v585, %v590
      %595 = vst [vmem:[#allocation1] ss:$2 sm:$0xff] %v568
      %v596 = vld.sshfl [vmem:[#allocation1] sm:$0xff pattern:$0x75316420]
      %v597 = vld.sshfl [vmem:[#allocation1 + $0x8] sm:$0xff pattern:$0x75316420]
      %600 = vst [vmem:[#allocation1] ss:$2 sm:$0xff] %v568
      %s601 = scalar_lea.vmem [#allocation1], 16
      %602 = vst [vmem:[%s601] ss:$2 sm:$0xff] %v569
      %v603 = vld.sshfl [vmem:[#allocation1] sm:$0xff pattern:$0x75316420]
      %v604 = vld.sshfl [vmem:[#allocation1 + $0x8] sm:$0xff pattern:$0x75316420]
      %v605 = vld.sshfl [vmem:[#allocation1 + $0x10] sm:$0xff pattern:$0x75316420]
      %606 = vrot.lane.b32.xlu0 %v603, 126
      %v607 = vpop.permute.xlu0 %606
      %608 = vrot.lane.b32.xlu0 %v604, 126
      %v609 = vpop.permute.xlu0 %608
      %610 = vrot.lane.b32.xlu0 %v605, 126
      %v611 = vpop.permute.xlu0 %610
      %v612 = vsel %vm221, %v607, %v609
      %v613 = vsel %vm221, %v609, %v611
      %v616 = vsel %vm174, %v596, %v612
      %v617 = vsel %vm175, %v597, %v613
      %618 = vst [vmem:[#allocation3] sm:$0xf] %v593
      %619 = vst [vmem:[#allocation3 + $0x8] sm:$0xf] %v594
      %s620 = scalar_lea.vmem [#allocation1], 1
      %621 = vst [vmem:[%s620] ss:$2 sm:$0xff] %v568
      %s622 = scalar_lea.vmem [#allocation1], 17
      %623 = vst [vmem:[%s622] ss:$2 sm:$0xff] %v569
      %v624 = vld.sshfl [vmem:[#allocation1] sm:$0xff pattern:$0x75316420]
      %v625 = vld.sshfl [vmem:[#allocation1 + $0x8] sm:$0xff pattern:$0x75316420]
      %v626 = vld.sshfl [vmem:[#allocation1 + $0x10] sm:$0xff pattern:$0x75316420]
      %627 = vrot.lane.b32.xlu0 %v624, 127
      %v628 = vpop.permute.xlu0 %627
      %629 = vrot.lane.b32.xlu0 %v625, 127
      %v630 = vpop.permute.xlu0 %629
      %631 = vrot.lane.b32.xlu0 %v626, 127
      %v632 = vpop.permute.xlu0 %631
      %v633 = vsel %vm271, %v628, %v630
      %v634 = vsel %vm271, %v630, %v632
      %637 = vst [vmem:[#allocation3] sm:$0xf0] %v633
      %638 = vst [vmem:[#allocation3 + $0x8] sm:$0xf0] %v634
      %639 = vst [vmem:[#allocation3 + $0x10] sm:$0xf] %v616
      %640 = vst [vmem:[#allocation3 + $0x18] sm:$0xf] %v617
      %v641 = vld [vmem:[#allocation2] sm:$0xff]
      %v642 = vld [vmem:[#allocation2 + $0x8] sm:$0xf]
      %645 = vst [vmem:[#allocation1] ss:$2 sm:$0xff] %v641
      %s646 = scalar_lea.vmem [#allocation1], 16
      %647 = vst [vmem:[%s646] ss:$2 sm:$0xff] %v642
      %v648 = vld.sshfl [vmem:[#allocation1] sm:$0xff pattern:$0x75316420]
      %v649 = vld.sshfl [vmem:[#allocation1 + $0x8] sm:$0xff pattern:$0x75316420]
      %v650 = vld.sshfl [vmem:[#allocation1 + $0x10] sm:$0xff pattern:$0x75316420]
      %651 = vrot.lane.b32.xlu0 %v648, 110
      %v652 = vpop.permute.xlu0 %651
      %653 = vrot.lane.b32.xlu0 %v649, 110
      %v654 = vpop.permute.xlu0 %653
      %655 = vrot.lane.b32.xlu0 %v650, 110
      %v656 = vpop.permute.xlu0 %655
      %v657 = vsel %vm296, %v652, %v654
      %v658 = vsel %vm296, %v654, %v656
      %661 = vst [vmem:[#allocation1] ss:$2 sm:$0xff] %v641
      %s662 = scalar_lea.vmem [#allocation1], 16
      %663 = vst [vmem:[%s662] ss:$2 sm:$0xff] %v642
      %v664 = vld.sshfl [vmem:[#allocation1] sm:$0xff pattern:$0x75316420]
      %v665 = vld.sshfl [vmem:[#allocation1 + $0x8] sm:$0xff pattern:$0x75316420]
      %v666 = vld.sshfl [vmem:[#allocation1 + $0x10] sm:$0xff pattern:$0x75316420]
      %667 = vrot.lane.b32.xlu0 %v664, 112
      %v668 = vpop.permute.xlu0 %667
      %669 = vrot.lane.b32.xlu0 %v665, 112
      %v670 = vpop.permute.xlu0 %669
      %671 = vrot.lane.b32.xlu0 %v666, 112
      %v672 = vpop.permute.xlu0 %671
      %v673 = vsel %vm313, %v668, %v670
      %v674 = vsel %vm313, %v670, %v672
      %v677 = vsel %vm172, %v657, %v673
      %v678 = vsel %vm173, %v658, %v674
      %679 = vst [vmem:[#allocation1] ss:$2 sm:$0xff] %v641
      %s680 = scalar_lea.vmem [#allocation1], 16
      %681 = vst [vmem:[%s680] ss:$2 sm:$0xff] %v642
      %v682 = vld.sshfl [vmem:[#allocation1] sm:$0xff pattern:$0x75316420]
      %v683 = vld.sshfl [vmem:[#allocation1 + $0x8] sm:$0xff pattern:$0x75316420]
      %v684 = vld.sshfl [vmem:[#allocation1 + $0x10] sm:$0xff pattern:$0x75316420]
      %685 = vrot.lane.b32.xlu0 %v682, 112
      %v686 = vpop.permute.xlu0 %685
      %687 = vrot.lane.b32.xlu0 %v683, 112
      %v688 = vpop.permute.xlu0 %687
      %689 = vrot.lane.b32.xlu0 %v684, 112
      %v690 = vpop.permute.xlu0 %689
      %v691 = vsel %vm313, %v686, %v688
      %v692 = vsel %vm313, %v688, %v690
      %695 = vst [vmem:[#allocation1] ss:$2 sm:$0xff] %v641
      %s696 = scalar_lea.vmem [#allocation1], 16
      %697 = vst [vmem:[%s696] ss:$2 sm:$0xff] %v642
      %v698 = vld.sshfl [vmem:[#allocation1] sm:$0xff pattern:$0x75316420]
      %v699 = vld.sshfl [vmem:[#allocation1 + $0x8] sm:$0xff pattern:$0x75316420]
      %v700 = vld.sshfl [vmem:[#allocation1 + $0x10] sm:$0xff pattern:$0x75316420]
      %701 = vrot.lane.b32.xlu0 %v698, 110
      %v702 = vpop.permute.xlu0 %701
      %703 = vrot.lane.b32.xlu0 %v699, 110
      %v704 = vpop.permute.xlu0 %703
      %705 = vrot.lane.b32.xlu0 %v700, 110
      %v706 = vpop.permute.xlu0 %705
      %v707 = vsel %vm296, %v702, %v704
      %v708 = vsel %vm296, %v704, %v706
      %v711 = vsel %vm174, %v691, %v707
      %v712 = vsel %vm175, %v692, %v708
      %v715 = vrot.slane %v677, 4
      %v716 = vrot.slane %v678, 4
      %719 = vst [vmem:[#allocation3 + $0x10] sm:$0xf0] %v715
      %720 = vst [vmem:[#allocation3 + $0x18] sm:$0xf0] %v716
      %721 = vst [vmem:[#allocation1] ss:$2 sm:$0xff] %v641
      %s722 = scalar_lea.vmem [#allocation1], 16
      %723 = vst [vmem:[%s722] ss:$2 sm:$0xff] %v642
      %v724 = vld.sshfl [vmem:[#allocation1] sm:$0xff pattern:$0x75316420]
      %v725 = vld.sshfl [vmem:[#allocation1 + $0x8] sm:$0xff pattern:$0x75316420]
      %v726 = vld.sshfl [vmem:[#allocation1 + $0x10] sm:$0xff pattern:$0x75316420]
      %727 = vrot.lane.b32.xlu0 %v724, 111
      %v728 = vpop.permute.xlu0 %727
      %729 = vrot.lane.b32.xlu0 %v725, 111
      %v730 = vpop.permute.xlu0 %729
      %731 = vrot.lane.b32.xlu0 %v726, 111
      %v732 = vpop.permute.xlu0 %731
      %v733 = vsel %vm374, %v728, %v730
      %v734 = vsel %vm374, %v730, %v732
      %737 = vst [vmem:[#allocation3 + $0x20] sm:$0xf] %v733
      %738 = vst [vmem:[#allocation3 + $0x28] sm:$0xf] %v734
      %v741 = vrot.slane %v711, 4
      %v742 = vrot.slane %v712, 4
      %745 = vst [vmem:[#allocation3 + $0x20] sm:$0xf0] %v741
      %746 = vst [vmem:[#allocation3 + $0x28] sm:$0xf0] %v742
      %v747 = vld [vmem:[#allocation2] sm:$0xff]
      %v748 = vld [vmem:[#allocation2 + $0x8] sm:$0xf]
      %751 = vst [vmem:[#allocation1] ss:$2 sm:$0xff] %v747
      %s752 = scalar_lea.vmem [#allocation1], 16
      %753 = vst [vmem:[%s752] ss:$2 sm:$0xff] %v748
      %v754 = vld.sshfl [vmem:[#allocation1] sm:$0xff pattern:$0x75316420]
      %v755 = vld.sshfl [vmem:[#allocation1 + $0x8] sm:$0xff pattern:$0x75316420]
      %v756 = vld.sshfl [vmem:[#allocation1 + $0x10] sm:$0xff pattern:$0x75316420]
      %757 = vrot.lane.b32.xlu0 %v754, 94
      %v758 = vpop.permute.xlu0 %757
      %759 = vrot.lane.b32.xlu0 %v755, 94
      %v760 = vpop.permute.xlu0 %759
      %761 = vrot.lane.b32.xlu0 %v756, 94
      %v762 = vpop.permute.xlu0 %761
      %v763 = vsel %vm405, %v758, %v760
      %v764 = vsel %vm405, %v760, %v762
      %767 = vst [vmem:[#allocation1] ss:$2 sm:$0xff] %v747
      %s768 = scalar_lea.vmem [#allocation1], 16
      %769 = vst [vmem:[%s768] ss:$2 sm:$0xff] %v748
      %v770 = vld.sshfl [vmem:[#allocation1] sm:$0xff pattern:$0x75316420]
      %v771 = vld.sshfl [vmem:[#allocation1 + $0x8] sm:$0xff pattern:$0x75316420]
      %v772 = vld.sshfl [vmem:[#allocation1 + $0x10] sm:$0xff pattern:$0x75316420]
      %773 = vrot.lane.b32.xlu0 %v770, 96
      %v774 = vpop.permute.xlu0 %773
      %775 = vrot.lane.b32.xlu0 %v771, 96
      %v776 = vpop.permute.xlu0 %775
      %777 = vrot.lane.b32.xlu0 %v772, 96
      %v778 = vpop.permute.xlu0 %777
      %v779 = vsel %vm422, %v774, %v776
      %v780 = vsel %vm422, %v776, %v778
      %v783 = vsel %vm172, %v763, %v779
      %v784 = vsel %vm173, %v764, %v780
      %785 = vst [vmem:[#allocation1] ss:$2 sm:$0xff] %v747
      %s786 = scalar_lea.vmem [#allocation1], 16
      %787 = vst [vmem:[%s786] ss:$2 sm:$0xff] %v748
      %v788 = vld.sshfl [vmem:[#allocation1] sm:$0xff pattern:$0x75316420]
      %v789 = vld.sshfl [vmem:[#allocation1 + $0x8] sm:$0xff pattern:$0x75316420]
      %v790 = vld.sshfl [vmem:[#allocation1 + $0x10] sm:$0xff pattern:$0x75316420]
      %791 = vrot.lane.b32.xlu0 %v788, 96
      %v792 = vpop.permute.xlu0 %791
      %793 = vrot.lane.b32.xlu0 %v789, 96
      %v794 = vpop.permute.xlu0 %793
      %795 = vrot.lane.b32.xlu0 %v790, 96
      %v796 = vpop.permute.xlu0 %795
      %v797 = vsel %vm422, %v792, %v794
      %v798 = vsel %vm422, %v794, %v796
      %801 = vst [vmem:[#allocation1] ss:$2 sm:$0xff] %v747
      %s802 = scalar_lea.vmem [#allocation1], 16
      %803 = vst [vmem:[%s802] ss:$2 sm:$0xff] %v748
      %v804 = vld.sshfl [vmem:[#allocation1] sm:$0xff pattern:$0x75316420]
      %v805 = vld.sshfl [vmem:[#allocation1 + $0x8] sm:$0xff pattern:$0x75316420]
      %v806 = vld.sshfl [vmem:[#allocation1 + $0x10] sm:$0xff pattern:$0x75316420]
      %807 = vrot.lane.b32.xlu0 %v804, 94
      %v808 = vpop.permute.xlu0 %807
      %809 = vrot.lane.b32.xlu0 %v805, 94
      %v810 = vpop.permute.xlu0 %809
      %811 = vrot.lane.b32.xlu0 %v806, 94
      %v812 = vpop.permute.xlu0 %811
      %v813 = vsel %vm405, %v808, %v810
      %v814 = vsel %vm405, %v810, %v812
      %v817 = vsel %vm174, %v797, %v813
      %v818 = vsel %vm175, %v798, %v814
      %819 = vst [vmem:[#allocation3 + $0x30] sm:$0xf] %v783
      %820 = vst [vmem:[#allocation3 + $0x38] sm:$0xf] %v784
      %s821 = scalar_lea.vmem [#allocation1], 1
      %822 = vst [vmem:[%s821] ss:$2 sm:$0xff] %v747
      %s823 = scalar_lea.vmem [#allocation1], 17
      %824 = vst [vmem:[%s823] ss:$2 sm:$0xff] %v748
      %v825 = vld.sshfl [vmem:[#allocation1] sm:$0xff pattern:$0x75316420]
      %v826 = vld.sshfl [vmem:[#allocation1 + $0x8] sm:$0xff pattern:$0x75316420]
      %v827 = vld.sshfl [vmem:[#allocation1 + $0x10] sm:$0xff pattern:$0x75316420]
      %828 = vrot.lane.b32.xlu0 %v825, 95
      %v829 = vpop.permute.xlu0 %828
      %830 = vrot.lane.b32.xlu0 %v826, 95
      %v831 = vpop.permute.xlu0 %830
      %832 = vrot.lane.b32.xlu0 %v827, 95
      %v833 = vpop.permute.xlu0 %832
      %v834 = vsel %vm478, %v829, %v831
      %v835 = vsel %vm478, %v831, %v833
      %838 = vst [vmem:[#allocation3 + $0x30] sm:$0xf0] %v834
      %839 = vst [vmem:[#allocation3 + $0x38] sm:$0xf0] %v835
      %840 = vst [vmem:[#allocation3 + $0x40] sm:$0xf] %v817
      %841 = vst [vmem:[#allocation3 + $0x48] sm:$0xf] %v818
      %s842 = scalar_lea.vmem %s1, 2
      %v843 = vld [vmem:[%s842] sm:$0x3]
      %v844 = vld [vmem:[#allocation3] sm:$0xff]
      %v845 = vld [vmem:[#allocation3 + $0x8] sm:$0xff]
      %v846 = vld [vmem:[#allocation3 + $0x10] sm:$0xff]
      %v847 = vld [vmem:[#allocation3 + $0x18] sm:$0xff]
      %v848 = vld [vmem:[#allocation3 + $0x20] sm:$0xff]
      %v849 = vld [vmem:[#allocation3 + $0x28] sm:$0xff]
      %v850 = vld [vmem:[#allocation3 + $0x30] sm:$0xff]
      %v851 = vld [vmem:[#allocation3 + $0x38] sm:$0xff]
      %v852 = vld [vmem:[#allocation3 + $0x40] sm:$0xf]
      %v853 = vld [vmem:[#allocation3 + $0x48] sm:$0xf]
      %v854 = vpack.c.bf16 %v846, %v844
      %v855 = vpack.c.bf16 %v847, %v845
      %v856 = vpack.c.bf16 %v850, %v848
      %v857 = vpack.c.bf16 %v851, %v849
      %v858 = vpack.c.bf16 %v852, %v852
      %v859 = vpack.c.bf16 %v853, %v853
      %v861 = vsel %vm504, %v843, 0
      %v864 = vsel %vm508, %v858, 0
      %v867 = vsel %vm508, %v859, 0
      %869 = vmatpush.bf16.msra.mxu0 0
      %870 = vmatpush.bf16.msra.mxu0 0
      %871 = vmatpush.bf16.msra.mxu0 0
      %872 = vmatpush.bf16.msra.mxu0 0
      %873 = vmatpush.bf16.msra.mxu0 0
      %874 = vmatpush.bf16.msra.mxu0 %v864
      %875 = vmatpush.bf16.msra.mxu0 %v856
      %876 = vmatpush.bf16.msra.mxu0 %v854
      %877 = vmatmul.bf16.gmra.mxu0 %v861
      %v878 = vpop.f32.mrf.mxu0
      %v879 = vadd.f32 0.0, %v878
      %v880 = vpop.f32.mrf.mxu0
      %881 = vdwg.mxu0
      %882 = vmatpush.bf16.msra.mxu0 0
      %883 = vmatpush.bf16.msra.mxu0 0
      %884 = vmatpush.bf16.msra.mxu0 0
      %885 = vmatpush.bf16.msra.mxu0 0
      %886 = vmatpush.bf16.msra.mxu0 0
      %887 = vmatpush.bf16.msra.mxu0 %v867
      %888 = vmatpush.bf16.msra.mxu0 %v857
      %889 = vmatpush.bf16.msra.mxu0 %v855
      %890 = vmatmul.bf16.gmra.mxu0 %v861
      %v891 = vpop.f32.mrf.mxu0
      %v892 = vadd.f32 0.0, %v891
      %v893 = vpop.f32.mrf.mxu0
      %894 = vdwg.mxu0
      %vm895 = vcmp.gt.f32.partialorder %v879, 0.0
      %vm896 = vcmp.gt.f32.partialorder %v892, 0.0
      %v897 = vmul.f32 %v879, 0.01
      %v898 = vmul.f32 %v892, 0.01
      %v899 = vsel %vm895, %v879, %v897
      %v900 = vsel %vm896, %v892, %v898
      %v903 = vrot.slane %v900, 4
      %v904 = vsel %vm550, %v899, %v903
      %905 = vrot.lane.b32.xlu0 %v904, 17
      %v906 = vpop.permute.xlu0 %905
      %v907 = vrot.slane %v906, 4
      %v908 = vsel %vm184, %v907, %v906
      %911 = vst.msk [vmem:[#allocation2] sm:$0xff] %vm190, %v908
      %912 = vst.msk [vmem:[#allocation2 + $0x8] sm:$0xf] %vm192, %v907
      %913 = vrot.lane.b32.xlu0 %v899, 113
      %v914 = vpop.permute.xlu0 %913
      %916 = vst.msk [vmem:[#allocation2] sm:$0xf] %vm197, %v914
      %917 = vrot.lane.b32.xlu0 %v900, 49
      %v918 = vpop.permute.xlu0 %917
      %920 = vst.msk [vmem:[#allocation2 + $0x8] sm:$0xf] %vm203, %v918
      %v921 = vld [vmem:[#allocation2] sm:$0xff]
      %v922 = vld [vmem:[#allocation2 + $0x8] sm:$0xf]
      %925 = vst [vmem:[#allocation1] ss:$2 sm:$0xff] %v921
      %s926 = scalar_lea.vmem [#allocation1], 16
      %927 = vst [vmem:[%s926] ss:$2 sm:$0xff] %v922
      %v928 = vld.sshfl [vmem:[#allocation1] sm:$0xff pattern:$0x75316420]
      %v929 = vld.sshfl [vmem:[#allocation1 + $0x8] sm:$0xff pattern:$0x75316420]
      %v930 = vld.sshfl [vmem:[#allocation1 + $0x10] sm:$0xff pattern:$0x75316420]
      %931 = vrot.lane.b32.xlu0 %v928, 126
      %v932 = vpop.permute.xlu0 %931
      %933 = vrot.lane.b32.xlu0 %v929, 126
      %v934 = vpop.permute.xlu0 %933
      %935 = vrot.lane.b32.xlu0 %v930, 126
      %v936 = vpop.permute.xlu0 %935
      %v937 = vsel %vm221, %v932, %v934
      %v938 = vsel %vm221, %v934, %v936
      %941 = vst [vmem:[#allocation1] ss:$2 sm:$0xff] %v921
      %v942 = vld.sshfl [vmem:[#allocation1] sm:$0xff pattern:$0x75316420]
      %v943 = vld.sshfl [vmem:[#allocation1 + $0x8] sm:$0xff pattern:$0x75316420]
      %v946 = vsel %vm172, %v937, %v942
      %v947 = vsel %vm173, %v938, %v943
      %948 = vst [vmem:[#allocation1] ss:$2 sm:$0xff] %v921
      %v949 = vld.sshfl [vmem:[#allocation1] sm:$0xff pattern:$0x75316420]
      %v950 = vld.sshfl [vmem:[#allocation1 + $0x8] sm:$0xff pattern:$0x75316420]
      %953 = vst [vmem:[#allocation1] ss:$2 sm:$0xff] %v921
      %s954 = scalar_lea.vmem [#allocation1], 16
      %955 = vst [vmem:[%s954] ss:$2 sm:$0xff] %v922
      %v956 = vld.sshfl [vmem:[#allocation1] sm:$0xff pattern:$0x75316420]
      %v957 = vld.sshfl [vmem:[#allocation1 + $0x8] sm:$0xff pattern:$0x75316420]
      %v958 = vld.sshfl [vmem:[#allocation1 + $0x10] sm:$0xff pattern:$0x75316420]
      %959 = vrot.lane.b32.xlu0 %v956, 126
      %v960 = vpop.permute.xlu0 %959
      %961 = vrot.lane.b32.xlu0 %v957, 126
      %v962 = vpop.permute.xlu0 %961
      %963 = vrot.lane.b32.xlu0 %v958, 126
      %v964 = vpop.permute.xlu0 %963
      %v965 = vsel %vm221, %v960, %v962
      %v966 = vsel %vm221, %v962, %v964
      %v969 = vsel %vm174, %v949, %v965
      %v970 = vsel %vm175, %v950, %v966
      %971 = vst [vmem:[#allocation3] sm:$0xf] %v946
      %972 = vst [vmem:[#allocation3 + $0x8] sm:$0xf] %v947
      %s973 = scalar_lea.vmem [#allocation1], 1
      %974 = vst [vmem:[%s973] ss:$2 sm:$0xff] %v921
      %s975 = scalar_lea.vmem [#allocation1], 17
      %976 = vst [vmem:[%s975] ss:$2 sm:$0xff] %v922
      %v977 = vld.sshfl [vmem:[#allocation1] sm:$0xff pattern:$0x75316420]
      %v978 = vld.sshfl [vmem:[#allocation1 + $0x8] sm:$0xff pattern:$0x75316420]
      %v979 = vld.sshfl [vmem:[#allocation1 + $0x10] sm:$0xff pattern:$0x75316420]
      %980 = vrot.lane.b32.xlu0 %v977, 127
      %v981 = vpop.permute.xlu0 %980
      %982 = vrot.lane.b32.xlu0 %v978, 127
      %v983 = vpop.permute.xlu0 %982
      %984 = vrot.lane.b32.xlu0 %v979, 127
      %v985 = vpop.permute.xlu0 %984
      %v986 = vsel %vm271, %v981, %v983
      %v987 = vsel %vm271, %v983, %v985
      %990 = vst [vmem:[#allocation3] sm:$0xf0] %v986
      %991 = vst [vmem:[#allocation3 + $0x8] sm:$0xf0] %v987
      %992 = vst [vmem:[#allocation3 + $0x10] sm:$0xf] %v969
      %993 = vst [vmem:[#allocation3 + $0x18] sm:$0xf] %v970
      %v994 = vld [vmem:[#allocation2] sm:$0xff]
      %v995 = vld [vmem:[#allocation2 + $0x8] sm:$0xf]
      %998 = vst [vmem:[#allocation1] ss:$2 sm:$0xff] %v994
      %s999 = scalar_lea.vmem [#allocation1], 16
      %1000 = vst [vmem:[%s999] ss:$2 sm:$0xff] %v995
      %v1001 = vld.sshfl [vmem:[#allocation1] sm:$0xff pattern:$0x75316420]
      %v1002 = vld.sshfl [vmem:[#allocation1 + $0x8] sm:$0xff pattern:$0x75316420]
      %v1003 = vld.sshfl [vmem:[#allocation1 + $0x10] sm:$0xff pattern:$0x75316420]
      %1004 = vrot.lane.b32.xlu0 %v1001, 110
      %v1005 = vpop.permute.xlu0 %1004
      %1006 = vrot.lane.b32.xlu0 %v1002, 110
      %v1007 = vpop.permute.xlu0 %1006
      %1008 = vrot.lane.b32.xlu0 %v1003, 110
      %v1009 = vpop.permute.xlu0 %1008
      %v1010 = vsel %vm296, %v1005, %v1007
      %v1011 = vsel %vm296, %v1007, %v1009
      %1014 = vst [vmem:[#allocation1] ss:$2 sm:$0xff] %v994
      %s1015 = scalar_lea.vmem [#allocation1], 16
      %1016 = vst [vmem:[%s1015] ss:$2 sm:$0xff] %v995
      %v1017 = vld.sshfl [vmem:[#allocation1] sm:$0xff pattern:$0x75316420]
      %v1018 = vld.sshfl [vmem:[#allocation1 + $0x8] sm:$0xff pattern:$0x75316420]
      %v1019 = vld.sshfl [vmem:[#allocation1 + $0x10] sm:$0xff pattern:$0x75316420]
      %1020 = vrot.lane.b32.xlu0 %v1017, 112
      %v1021 = vpop.permute.xlu0 %1020
      %1022 = vrot.lane.b32.xlu0 %v1018, 112
      %v1023 = vpop.permute.xlu0 %1022
      %1024 = vrot.lane.b32.xlu0 %v1019, 112
      %v1025 = vpop.permute.xlu0 %1024
      %v1026 = vsel %vm313, %v1021, %v1023
      %v1027 = vsel %vm313, %v1023, %v1025
      %v1030 = vsel %vm172, %v1010, %v1026
      %v1031 = vsel %vm173, %v1011, %v1027
      %1032 = vst [vmem:[#allocation1] ss:$2 sm:$0xff] %v994
      %s1033 = scalar_lea.vmem [#allocation1], 16
      %1034 = vst [vmem:[%s1033] ss:$2 sm:$0xff] %v995
      %v1035 = vld.sshfl [vmem:[#allocation1] sm:$0xff pattern:$0x75316420]
      %v1036 = vld.sshfl [vmem:[#allocation1 + $0x8] sm:$0xff pattern:$0x75316420]
      %v1037 = vld.sshfl [vmem:[#allocation1 + $0x10] sm:$0xff pattern:$0x75316420]
      %1038 = vrot.lane.b32.xlu0 %v1035, 112
      %v1039 = vpop.permute.xlu0 %1038
      %1040 = vrot.lane.b32.xlu0 %v1036, 112
      %v1041 = vpop.permute.xlu0 %1040
      %1042 = vrot.lane.b32.xlu0 %v1037, 112
      %v1043 = vpop.permute.xlu0 %1042
      %v1044 = vsel %vm313, %v1039, %v1041
      %v1045 = vsel %vm313, %v1041, %v1043
      %1048 = vst [vmem:[#allocation1] ss:$2 sm:$0xff] %v994
      %s1049 = scalar_lea.vmem [#allocation1], 16
      %1050 = vst [vmem:[%s1049] ss:$2 sm:$0xff] %v995
      %v1051 = vld.sshfl [vmem:[#allocation1] sm:$0xff pattern:$0x75316420]
      %v1052 = vld.sshfl [vmem:[#allocation1 + $0x8] sm:$0xff pattern:$0x75316420]
      %v1053 = vld.sshfl [vmem:[#allocation1 + $0x10] sm:$0xff pattern:$0x75316420]
      %1054 = vrot.lane.b32.xlu0 %v1051, 110
      %v1055 = vpop.permute.xlu0 %1054
      %1056 = vrot.lane.b32.xlu0 %v1052, 110
      %v1057 = vpop.permute.xlu0 %1056
      %1058 = vrot.lane.b32.xlu0 %v1053, 110
      %v1059 = vpop.permute.xlu0 %1058
      %v1060 = vsel %vm296, %v1055, %v1057
      %v1061 = vsel %vm296, %v1057, %v1059
      %v1064 = vsel %vm174, %v1044, %v1060
      %v1065 = vsel %vm175, %v1045, %v1061
      %v1068 = vrot.slane %v1030, 4
      %v1069 = vrot.slane %v1031, 4
      %1072 = vst [vmem:[#allocation3 + $0x10] sm:$0xf0] %v1068
      %1073 = vst [vmem:[#allocation3 + $0x18] sm:$0xf0] %v1069
      %1074 = vst [vmem:[#allocation1] ss:$2 sm:$0xff] %v994
      %s1075 = scalar_lea.vmem [#allocation1], 16
      %1076 = vst [vmem:[%s1075] ss:$2 sm:$0xff] %v995
      %v1077 = vld.sshfl [vmem:[#allocation1] sm:$0xff pattern:$0x75316420]
      %v1078 = vld.sshfl [vmem:[#allocation1 + $0x8] sm:$0xff pattern:$0x75316420]
      %v1079 = vld.sshfl [vmem:[#allocation1 + $0x10] sm:$0xff pattern:$0x75316420]
      %1080 = vrot.lane.b32.xlu0 %v1077, 111
      %v1081 = vpop.permute.xlu0 %1080
      %1082 = vrot.lane.b32.xlu0 %v1078, 111
      %v1083 = vpop.permute.xlu0 %1082
      %1084 = vrot.lane.b32.xlu0 %v1079, 111
      %v1085 = vpop.permute.xlu0 %1084
      %v1086 = vsel %vm374, %v1081, %v1083
      %v1087 = vsel %vm374, %v1083, %v1085
      %1090 = vst [vmem:[#allocation3 + $0x20] sm:$0xf] %v1086
      %1091 = vst [vmem:[#allocation3 + $0x28] sm:$0xf] %v1087
      %v1094 = vrot.slane %v1064, 4
      %v1095 = vrot.slane %v1065, 4
      %1098 = vst [vmem:[#allocation3 + $0x20] sm:$0xf0] %v1094
      %1099 = vst [vmem:[#allocation3 + $0x28] sm:$0xf0] %v1095
      %v1100 = vld [vmem:[#allocation2] sm:$0xff]
      %v1101 = vld [vmem:[#allocation2 + $0x8] sm:$0xf]
      %1104 = vst [vmem:[#allocation1] ss:$2 sm:$0xff] %v1100
      %s1105 = scalar_lea.vmem [#allocation1], 16
      %1106 = vst [vmem:[%s1105] ss:$2 sm:$0xff] %v1101
      %v1107 = vld.sshfl [vmem:[#allocation1] sm:$0xff pattern:$0x75316420]
      %v1108 = vld.sshfl [vmem:[#allocation1 + $0x8] sm:$0xff pattern:$0x75316420]
      %v1109 = vld.sshfl [vmem:[#allocation1 + $0x10] sm:$0xff pattern:$0x75316420]
      %1110 = vrot.lane.b32.xlu0 %v1107, 94
      %v1111 = vpop.permute.xlu0 %1110
      %1112 = vrot.lane.b32.xlu0 %v1108, 94
      %v1113 = vpop.permute.xlu0 %1112
      %1114 = vrot.lane.b32.xlu0 %v1109, 94
      %v1115 = vpop.permute.xlu0 %1114
      %v1116 = vsel %vm405, %v1111, %v1113
      %v1117 = vsel %vm405, %v1113, %v1115
      %1120 = vst [vmem:[#allocation1] ss:$2 sm:$0xff] %v1100
      %s1121 = scalar_lea.vmem [#allocation1], 16
      %1122 = vst [vmem:[%s1121] ss:$2 sm:$0xff] %v1101
      %v1123 = vld.sshfl [vmem:[#allocation1] sm:$0xff pattern:$0x75316420]
      %v1124 = vld.sshfl [vmem:[#allocation1 + $0x8] sm:$0xff pattern:$0x75316420]
      %v1125 = vld.sshfl [vmem:[#allocation1 + $0x10] sm:$0xff pattern:$0x75316420]
      %1126 = vrot.lane.b32.xlu0 %v1123, 96
      %v1127 = vpop.permute.xlu0 %1126
      %1128 = vrot.lane.b32.xlu0 %v1124, 96
      %v1129 = vpop.permute.xlu0 %1128
      %1130 = vrot.lane.b32.xlu0 %v1125, 96
      %v1131 = vpop.permute.xlu0 %1130
      %v1132 = vsel %vm422, %v1127, %v1129
      %v1133 = vsel %vm422, %v1129, %v1131
      %v1136 = vsel %vm172, %v1116, %v1132
      %v1137 = vsel %vm173, %v1117, %v1133
      %1138 = vst [vmem:[#allocation1] ss:$2 sm:$0xff] %v1100
      %s1139 = scalar_lea.vmem [#allocation1], 16
      %1140 = vst [vmem:[%s1139] ss:$2 sm:$0xff] %v1101
      %v1141 = vld.sshfl [vmem:[#allocation1] sm:$0xff pattern:$0x75316420]
      %v1142 = vld.sshfl [vmem:[#allocation1 + $0x8] sm:$0xff pattern:$0x75316420]
      %v1143 = vld.sshfl [vmem:[#allocation1 + $0x10] sm:$0xff pattern:$0x75316420]
      %1144 = vrot.lane.b32.xlu0 %v1141, 96
      %v1145 = vpop.permute.xlu0 %1144
      %1146 = vrot.lane.b32.xlu0 %v1142, 96
      %v1147 = vpop.permute.xlu0 %1146
      %1148 = vrot.lane.b32.xlu0 %v1143, 96
      %v1149 = vpop.permute.xlu0 %1148
      %v1150 = vsel %vm422, %v1145, %v1147
      %v1151 = vsel %vm422, %v1147, %v1149
      %1154 = vst [vmem:[#allocation1] ss:$2 sm:$0xff] %v1100
      %s1155 = scalar_lea.vmem [#allocation1], 16
      %1156 = vst [vmem:[%s1155] ss:$2 sm:$0xff] %v1101
      %v1157 = vld.sshfl [vmem:[#allocation1] sm:$0xff pattern:$0x75316420]
      %v1158 = vld.sshfl [vmem:[#allocation1 + $0x8] sm:$0xff pattern:$0x75316420]
      %v1159 = vld.sshfl [vmem:[#allocation1 + $0x10] sm:$0xff pattern:$0x75316420]
      %1160 = vrot.lane.b32.xlu0 %v1157, 94
      %v1161 = vpop.permute.xlu0 %1160
      %1162 = vrot.lane.b32.xlu0 %v1158, 94
      %v1163 = vpop.permute.xlu0 %1162
      %1164 = vrot.lane.b32.xlu0 %v1159, 94
      %v1165 = vpop.permute.xlu0 %1164
      %v1166 = vsel %vm405, %v1161, %v1163
      %v1167 = vsel %vm405, %v1163, %v1165
      %v1170 = vsel %vm174, %v1150, %v1166
      %v1171 = vsel %vm175, %v1151, %v1167
      %1172 = vst [vmem:[#allocation3 + $0x30] sm:$0xf] %v1136
      %1173 = vst [vmem:[#allocation3 + $0x38] sm:$0xf] %v1137
      %s1174 = scalar_lea.vmem [#allocation1], 1
      %1175 = vst [vmem:[%s1174] ss:$2 sm:$0xff] %v1100
      %s1176 = scalar_lea.vmem [#allocation1], 17
      %1177 = vst [vmem:[%s1176] ss:$2 sm:$0xff] %v1101
      %v1178 = vld.sshfl [vmem:[#allocation1] sm:$0xff pattern:$0x75316420]
      %v1179 = vld.sshfl [vmem:[#allocation1 + $0x8] sm:$0xff pattern:$0x75316420]
      %v1180 = vld.sshfl [vmem:[#allocation1 + $0x10] sm:$0xff pattern:$0x75316420]
      %1181 = vrot.lane.b32.xlu0 %v1178, 95
      %v1182 = vpop.permute.xlu0 %1181
      %1183 = vrot.lane.b32.xlu0 %v1179, 95
      %v1184 = vpop.permute.xlu0 %1183
      %1185 = vrot.lane.b32.xlu0 %v1180, 95
      %v1186 = vpop.permute.xlu0 %1185
      %v1187 = vsel %vm478, %v1182, %v1184
      %v1188 = vsel %vm478, %v1184, %v1186
      %1191 = vst [vmem:[#allocation3 + $0x30] sm:$0xf0] %v1187
      %1192 = vst [vmem:[#allocation3 + $0x38] sm:$0xf0] %v1188
      %1193 = vst [vmem:[#allocation3 + $0x40] sm:$0xf] %v1170
      %1194 = vst [vmem:[#allocation3 + $0x48] sm:$0xf] %v1171
      %s1195 = scalar_lea.vmem %s1, 4
      %v1196 = vld [vmem:[%s1195] sm:$0x3]
      %v1197 = vld [vmem:[#allocation3] sm:$0xff]
      %v1198 = vld [vmem:[#allocation3 + $0x8] sm:$0xff]
      %v1199 = vld [vmem:[#allocation3 + $0x10] sm:$0xff]
      %v1200 = vld [vmem:[#allocation3 + $0x18] sm:$0xff]
      %v1201 = vld [vmem:[#allocation3 + $0x20] sm:$0xff]
      %v1202 = vld [vmem:[#allocation3 + $0x28] sm:$0xff]
      %v1203 = vld [vmem:[#allocation3 + $0x30] sm:$0xff]
      %v1204 = vld [vmem:[#allocation3 + $0x38] sm:$0xff]
      %v1205 = vld [vmem:[#allocation3 + $0x40] sm:$0xf]
      %v1206 = vld [vmem:[#allocation3 + $0x48] sm:$0xf]
      %v1207 = vpack.c.bf16 %v1199, %v1197
      %v1208 = vpack.c.bf16 %v1200, %v1198
      %v1209 = vpack.c.bf16 %v1203, %v1201
      %v1210 = vpack.c.bf16 %v1204, %v1202
      %v1211 = vpack.c.bf16 %v1205, %v1205
      %v1212 = vpack.c.bf16 %v1206, %v1206
      %v1214 = vsel %vm504, %v1196, 0
      %v1217 = vsel %vm508, %v1211, 0
      %v1220 = vsel %vm508, %v1212, 0
      %1222 = vmatpush.bf16.msra.mxu0 0
      %1223 = vmatpush.bf16.msra.mxu0 0
      %1224 = vmatpush.bf16.msra.mxu0 0
      %1225 = vmatpush.bf16.msra.mxu0 0
      %1226 = vmatpush.bf16.msra.mxu0 0
      %1227 = vmatpush.bf16.msra.mxu0 %v1217
      %1228 = vmatpush.bf16.msra.mxu0 %v1209
      %1229 = vmatpush.bf16.msra.mxu0 %v1207
      %1230 = vmatmul.bf16.gmra.mxu0 %v1214
      %v1231 = vpop.f32.mrf.mxu0
      %v1232 = vadd.f32 0.0, %v1231
      %v1233 = vpop.f32.mrf.mxu0
      %1234 = vdwg.mxu0
      %1235 = vmatpush.bf16.msra.mxu0 0
      %1236 = vmatpush.bf16.msra.mxu0 0
      %1237 = vmatpush.bf16.msra.mxu0 0
      %1238 = vmatpush.bf16.msra.mxu0 0
      %1239 = vmatpush.bf16.msra.mxu0 0
      %1240 = vmatpush.bf16.msra.mxu0 %v1220
      %1241 = vmatpush.bf16.msra.mxu0 %v1210
      %1242 = vmatpush.bf16.msra.mxu0 %v1208
      %1243 = vmatmul.bf16.gmra.mxu0 %v1214
      %v1244 = vpop.f32.mrf.mxu0
      %v1245 = vadd.f32 0.0, %v1244
      %v1246 = vpop.f32.mrf.mxu0
      %1247 = vdwg.mxu0
      %vm1248 = vcmp.gt.f32.partialorder %v1232, 0.0
      %vm1249 = vcmp.gt.f32.partialorder %v1245, 0.0
      %v1250 = vmul.f32 %v1232, 0.01
      %v1251 = vmul.f32 %v1245, 0.01
      %v1252 = vsel %vm1248, %v1232, %v1250
      %v1253 = vsel %vm1249, %v1245, %v1251
      %v1256 = vrot.slane %v1253, 4
      %v1257 = vsel %vm550, %v1252, %v1256
      %1258 = vrot.lane.b32.xlu0 %v1257, 17
      %v1259 = vpop.permute.xlu0 %1258
      %v1260 = vrot.slane %v1259, 4
      %v1261 = vsel %vm184, %v1260, %v1259
      %1264 = vst.msk [vmem:[#allocation2] sm:$0xff] %vm190, %v1261
      %1265 = vst.msk [vmem:[#allocation2 + $0x8] sm:$0xf] %vm192, %v1260
      %1266 = vrot.lane.b32.xlu0 %v1252, 113
      %v1267 = vpop.permute.xlu0 %1266
      %1269 = vst.msk [vmem:[#allocation2] sm:$0xf] %vm197, %v1267
      %1270 = vrot.lane.b32.xlu0 %v1253, 49
      %v1271 = vpop.permute.xlu0 %1270
      %1273 = vst.msk [vmem:[#allocation2 + $0x8] sm:$0xf] %vm203, %v1271
      %v1274 = vld [vmem:[#allocation2] sm:$0xff]
      %v1275 = vld [vmem:[#allocation2 + $0x8] sm:$0xf]
      %1278 = vst [vmem:[#allocation1] ss:$2 sm:$0xff] %v1274
      %s1279 = scalar_lea.vmem [#allocation1], 16
      %1280 = vst [vmem:[%s1279] ss:$2 sm:$0xff] %v1275
      %v1281 = vld.sshfl [vmem:[#allocation1] sm:$0xff pattern:$0x75316420]
      %v1282 = vld.sshfl [vmem:[#allocation1 + $0x8] sm:$0xff pattern:$0x75316420]
      %v1283 = vld.sshfl [vmem:[#allocation1 + $0x10] sm:$0xff pattern:$0x75316420]
      %1284 = vrot.lane.b32.xlu0 %v1281, 126
      %v1285 = vpop.permute.xlu0 %1284
      %1286 = vrot.lane.b32.xlu0 %v1282, 126
      %v1287 = vpop.permute.xlu0 %1286
      %1288 = vrot.lane.b32.xlu0 %v1283, 126
      %v1289 = vpop.permute.xlu0 %1288
      %v1290 = vsel %vm221, %v1285, %v1287
      %v1291 = vsel %vm221, %v1287, %v1289
      %1294 = vst [vmem:[#allocation1] ss:$2 sm:$0xff] %v1274
      %v1295 = vld.sshfl [vmem:[#allocation1] sm:$0xff pattern:$0x75316420]
      %v1296 = vld.sshfl [vmem:[#allocation1 + $0x8] sm:$0xff pattern:$0x75316420]
      %v1299 = vsel %vm172, %v1290, %v1295
      %v1300 = vsel %vm173, %v1291, %v1296
      %1301 = vst [vmem:[#allocation1] ss:$2 sm:$0xff] %v1274
      %v1302 = vld.sshfl [vmem:[#allocation1] sm:$0xff pattern:$0x75316420]
      %v1303 = vld.sshfl [vmem:[#allocation1 + $0x8] sm:$0xff pattern:$0x75316420]
      %1306 = vst [vmem:[#allocation1] ss:$2 sm:$0xff] %v1274
      %s1307 = scalar_lea.vmem [#allocation1], 16
      %1308 = vst [vmem:[%s1307] ss:$2 sm:$0xff] %v1275
      %v1309 = vld.sshfl [vmem:[#allocation1] sm:$0xff pattern:$0x75316420]
      %v1310 = vld.sshfl [vmem:[#allocation1 + $0x8] sm:$0xff pattern:$0x75316420]
      %v1311 = vld.sshfl [vmem:[#allocation1 + $0x10] sm:$0xff pattern:$0x75316420]
      %1312 = vrot.lane.b32.xlu0 %v1309, 126
      %v1313 = vpop.permute.xlu0 %1312
      %1314 = vrot.lane.b32.xlu0 %v1310, 126
      %v1315 = vpop.permute.xlu0 %1314
      %1316 = vrot.lane.b32.xlu0 %v1311, 126
      %v1317 = vpop.permute.xlu0 %1316
      %v1318 = vsel %vm221, %v1313, %v1315
      %v1319 = vsel %vm221, %v1315, %v1317
      %v1322 = vsel %vm174, %v1302, %v1318
      %v1323 = vsel %vm175, %v1303, %v1319
      %1324 = vst [vmem:[#allocation3] sm:$0xf] %v1299
      %1325 = vst [vmem:[#allocation3 + $0x8] sm:$0xf] %v1300
      %s1326 = scalar_lea.vmem [#allocation1], 1
      %1327 = vst [vmem:[%s1326] ss:$2 sm:$0xff] %v1274
      %s1328 = scalar_lea.vmem [#allocation1], 17
      %1329 = vst [vmem:[%s1328] ss:$2 sm:$0xff] %v1275
      %v1330 = vld.sshfl [vmem:[#allocation1] sm:$0xff pattern:$0x75316420]
      %v1331 = vld.sshfl [vmem:[#allocation1 + $0x8] sm:$0xff pattern:$0x75316420]
      %v1332 = vld.sshfl [vmem:[#allocation1 + $0x10] sm:$0xff pattern:$0x75316420]
      %1333 = vrot.lane.b32.xlu0 %v1330, 127
      %v1334 = vpop.permute.xlu0 %1333
      %1335 = vrot.lane.b32.xlu0 %v1331, 127
      %v1336 = vpop.permute.xlu0 %1335
      %1337 = vrot.lane.b32.xlu0 %v1332, 127
      %v1338 = vpop.permute.xlu0 %1337
      %v1339 = vsel %vm271, %v1334, %v1336
      %v1340 = vsel %vm271, %v1336, %v1338
      %1343 = vst [vmem:[#allocation3] sm:$0xf0] %v1339
      %1344 = vst [vmem:[#allocation3 + $0x8] sm:$0xf0] %v1340
      %1345 = vst [vmem:[#allocation3 + $0x10] sm:$0xf] %v1322
      %1346 = vst [vmem:[#allocation3 + $0x18] sm:$0xf] %v1323
      %v1347 = vld [vmem:[#allocation2] sm:$0xff]
      %v1348 = vld [vmem:[#allocation2 + $0x8] sm:$0xf]
      %1351 = vst [vmem:[#allocation1] ss:$2 sm:$0xff] %v1347
      %s1352 = scalar_lea.vmem [#allocation1], 16
      %1353 = vst [vmem:[%s1352] ss:$2 sm:$0xff] %v1348
      %v1354 = vld.sshfl [vmem:[#allocation1] sm:$0xff pattern:$0x75316420]
      %v1355 = vld.sshfl [vmem:[#allocation1 + $0x8] sm:$0xff pattern:$0x75316420]
      %v1356 = vld.sshfl [vmem:[#allocation1 + $0x10] sm:$0xff pattern:$0x75316420]
      %1357 = vrot.lane.b32.xlu0 %v1354, 110
      %v1358 = vpop.permute.xlu0 %1357
      %1359 = vrot.lane.b32.xlu0 %v1355, 110
      %v1360 = vpop.permute.xlu0 %1359
      %1361 = vrot.lane.b32.xlu0 %v1356, 110
      %v1362 = vpop.permute.xlu0 %1361
      %v1363 = vsel %vm296, %v1358, %v1360
      %v1364 = vsel %vm296, %v1360, %v1362
      %1367 = vst [vmem:[#allocation1] ss:$2 sm:$0xff] %v1347
      %s1368 = scalar_lea.vmem [#allocation1], 16
      %1369 = vst [vmem:[%s1368] ss:$2 sm:$0xff] %v1348
      %v1370 = vld.sshfl [vmem:[#allocation1] sm:$0xff pattern:$0x75316420]
      %v1371 = vld.sshfl [vmem:[#allocation1 + $0x8] sm:$0xff pattern:$0x75316420]
      %v1372 = vld.sshfl [vmem:[#allocation1 + $0x10] sm:$0xff pattern:$0x75316420]
      %1373 = vrot.lane.b32.xlu0 %v1370, 112
      %v1374 = vpop.permute.xlu0 %1373
      %1375 = vrot.lane.b32.xlu0 %v1371, 112
      %v1376 = vpop.permute.xlu0 %1375
      %1377 = vrot.lane.b32.xlu0 %v1372, 112
      %v1378 = vpop.permute.xlu0 %1377
      %v1379 = vsel %vm313, %v1374, %v1376
      %v1380 = vsel %vm313, %v1376, %v1378
      %v1383 = vsel %vm172, %v1363, %v1379
      %v1384 = vsel %vm173, %v1364, %v1380
      %1385 = vst [vmem:[#allocation1] ss:$2 sm:$0xff] %v1347
      %s1386 = scalar_lea.vmem [#allocation1], 16
      %1387 = vst [vmem:[%s1386] ss:$2 sm:$0xff] %v1348
      %v1388 = vld.sshfl [vmem:[#allocation1] sm:$0xff pattern:$0x75316420]
      %v1389 = vld.sshfl [vmem:[#allocation1 + $0x8] sm:$0xff pattern:$0x75316420]
      %v1390 = vld.sshfl [vmem:[#allocation1 + $0x10] sm:$0xff pattern:$0x75316420]
      %1391 = vrot.lane.b32.xlu0 %v1388, 112
      %v1392 = vpop.permute.xlu0 %1391
      %1393 = vrot.lane.b32.xlu0 %v1389, 112
      %v1394 = vpop.permute.xlu0 %1393
      %1395 = vrot.lane.b32.xlu0 %v1390, 112
      %v1396 = vpop.permute.xlu0 %1395
      %v1397 = vsel %vm313, %v1392, %v1394
      %v1398 = vsel %vm313, %v1394, %v1396
      %1401 = vst [vmem:[#allocation1] ss:$2 sm:$0xff] %v1347
      %s1402 = scalar_lea.vmem [#allocation1], 16
      %1403 = vst [vmem:[%s1402] ss:$2 sm:$0xff] %v1348
      %v1404 = vld.sshfl [vmem:[#allocation1] sm:$0xff pattern:$0x75316420]
      %v1405 = vld.sshfl [vmem:[#allocation1 + $0x8] sm:$0xff pattern:$0x75316420]
      %v1406 = vld.sshfl [vmem:[#allocation1 + $0x10] sm:$0xff pattern:$0x75316420]
      %1407 = vrot.lane.b32.xlu0 %v1404, 110
      %v1408 = vpop.permute.xlu0 %1407
      %1409 = vrot.lane.b32.xlu0 %v1405, 110
      %v1410 = vpop.permute.xlu0 %1409
      %1411 = vrot.lane.b32.xlu0 %v1406, 110
      %v1412 = vpop.permute.xlu0 %1411
      %v1413 = vsel %vm296, %v1408, %v1410
      %v1414 = vsel %vm296, %v1410, %v1412
      %v1417 = vsel %vm174, %v1397, %v1413
      %v1418 = vsel %vm175, %v1398, %v1414
      %v1421 = vrot.slane %v1383, 4
      %v1422 = vrot.slane %v1384, 4
      %1425 = vst [vmem:[#allocation3 + $0x10] sm:$0xf0] %v1421
      %1426 = vst [vmem:[#allocation3 + $0x18] sm:$0xf0] %v1422
      %1427 = vst [vmem:[#allocation1] ss:$2 sm:$0xff] %v1347
      %s1428 = scalar_lea.vmem [#allocation1], 16
      %1429 = vst [vmem:[%s1428] ss:$2 sm:$0xff] %v1348
      %v1430 = vld.sshfl [vmem:[#allocation1] sm:$0xff pattern:$0x75316420]
      %v1431 = vld.sshfl [vmem:[#allocation1 + $0x8] sm:$0xff pattern:$0x75316420]
      %v1432 = vld.sshfl [vmem:[#allocation1 + $0x10] sm:$0xff pattern:$0x75316420]
      %1433 = vrot.lane.b32.xlu0 %v1430, 111
      %v1434 = vpop.permute.xlu0 %1433
      %1435 = vrot.lane.b32.xlu0 %v1431, 111
      %v1436 = vpop.permute.xlu0 %1435
      %1437 = vrot.lane.b32.xlu0 %v1432, 111
      %v1438 = vpop.permute.xlu0 %1437
      %v1439 = vsel %vm374, %v1434, %v1436
      %v1440 = vsel %vm374, %v1436, %v1438
      %1443 = vst [vmem:[#allocation3 + $0x20] sm:$0xf] %v1439
      %1444 = vst [vmem:[#allocation3 + $0x28] sm:$0xf] %v1440
      %v1447 = vrot.slane %v1417, 4
      %v1448 = vrot.slane %v1418, 4
      %1451 = vst [vmem:[#allocation3 + $0x20] sm:$0xf0] %v1447
      %1452 = vst [vmem:[#allocation3 + $0x28] sm:$0xf0] %v1448
      %v1453 = vld [vmem:[#allocation2] sm:$0xff]
      %v1454 = vld [vmem:[#allocation2 + $0x8] sm:$0xf]
      %1457 = vst [vmem:[#allocation1] ss:$2 sm:$0xff] %v1453
      %s1458 = scalar_lea.vmem [#allocation1], 16
      %1459 = vst [vmem:[%s1458] ss:$2 sm:$0xff] %v1454
      %v1460 = vld.sshfl [vmem:[#allocation1] sm:$0xff pattern:$0x75316420]
      %v1461 = vld.sshfl [vmem:[#allocation1 + $0x8] sm:$0xff pattern:$0x75316420]
      %v1462 = vld.sshfl [vmem:[#allocation1 + $0x10] sm:$0xff pattern:$0x75316420]
      %1463 = vrot.lane.b32.xlu0 %v1460, 94
      %v1464 = vpop.permute.xlu0 %1463
      %1465 = vrot.lane.b32.xlu0 %v1461, 94
      %v1466 = vpop.permute.xlu0 %1465
      %1467 = vrot.lane.b32.xlu0 %v1462, 94
      %v1468 = vpop.permute.xlu0 %1467
      %v1469 = vsel %vm405, %v1464, %v1466
      %v1470 = vsel %vm405, %v1466, %v1468
      %1473 = vst [vmem:[#allocation1] ss:$2 sm:$0xff] %v1453
      %s1474 = scalar_lea.vmem [#allocation1], 16
      %1475 = vst [vmem:[%s1474] ss:$2 sm:$0xff] %v1454
      %v1476 = vld.sshfl [vmem:[#allocation1] sm:$0xff pattern:$0x75316420]
      %v1477 = vld.sshfl [vmem:[#allocation1 + $0x8] sm:$0xff pattern:$0x75316420]
      %v1478 = vld.sshfl [vmem:[#allocation1 + $0x10] sm:$0xff pattern:$0x75316420]
      %1479 = vrot.lane.b32.xlu0 %v1476, 96
      %v1480 = vpop.permute.xlu0 %1479
      %1481 = vrot.lane.b32.xlu0 %v1477, 96
      %v1482 = vpop.permute.xlu0 %1481
      %1483 = vrot.lane.b32.xlu0 %v1478, 96
      %v1484 = vpop.permute.xlu0 %1483
      %v1485 = vsel %vm422, %v1480, %v1482
      %v1486 = vsel %vm422, %v1482, %v1484
      %v1489 = vsel %vm172, %v1469, %v1485
      %v1490 = vsel %vm173, %v1470, %v1486
      %1491 = vst [vmem:[#allocation1] ss:$2 sm:$0xff] %v1453
      %s1492 = scalar_lea.vmem [#allocation1], 16
      %1493 = vst [vmem:[%s1492] ss:$2 sm:$0xff] %v1454
      %v1494 = vld.sshfl [vmem:[#allocation1] sm:$0xff pattern:$0x75316420]
      %v1495 = vld.sshfl [vmem:[#allocation1 + $0x8] sm:$0xff pattern:$0x75316420]
      %v1496 = vld.sshfl [vmem:[#allocation1 + $0x10] sm:$0xff pattern:$0x75316420]
      %1497 = vrot.lane.b32.xlu0 %v1494, 96
      %v1498 = vpop.permute.xlu0 %1497
      %1499 = vrot.lane.b32.xlu0 %v1495, 96
      %v1500 = vpop.permute.xlu0 %1499
      %1501 = vrot.lane.b32.xlu0 %v1496, 96
      %v1502 = vpop.permute.xlu0 %1501
      %v1503 = vsel %vm422, %v1498, %v1500
      %v1504 = vsel %vm422, %v1500, %v1502
      %1507 = vst [vmem:[#allocation1] ss:$2 sm:$0xff] %v1453
      %s1508 = scalar_lea.vmem [#allocation1], 16
      %1509 = vst [vmem:[%s1508] ss:$2 sm:$0xff] %v1454
      %v1510 = vld.sshfl [vmem:[#allocation1] sm:$0xff pattern:$0x75316420]
      %v1511 = vld.sshfl [vmem:[#allocation1 + $0x8] sm:$0xff pattern:$0x75316420]
      %v1512 = vld.sshfl [vmem:[#allocation1 + $0x10] sm:$0xff pattern:$0x75316420]
      %1513 = vrot.lane.b32.xlu0 %v1510, 94
      %v1514 = vpop.permute.xlu0 %1513
      %1515 = vrot.lane.b32.xlu0 %v1511, 94
      %v1516 = vpop.permute.xlu0 %1515
      %1517 = vrot.lane.b32.xlu0 %v1512, 94
      %v1518 = vpop.permute.xlu0 %1517
      %v1519 = vsel %vm405, %v1514, %v1516
      %v1520 = vsel %vm405, %v1516, %v1518
      %v1523 = vsel %vm174, %v1503, %v1519
      %v1524 = vsel %vm175, %v1504, %v1520
      %1525 = vst [vmem:[#allocation3 + $0x30] sm:$0xf] %v1489
      %1526 = vst [vmem:[#allocation3 + $0x38] sm:$0xf] %v1490
      %s1527 = scalar_lea.vmem [#allocation1], 1
      %1528 = vst [vmem:[%s1527] ss:$2 sm:$0xff] %v1453
      %s1529 = scalar_lea.vmem [#allocation1], 17
      %1530 = vst [vmem:[%s1529] ss:$2 sm:$0xff] %v1454
      %v1531 = vld.sshfl [vmem:[#allocation1] sm:$0xff pattern:$0x75316420]
      %v1532 = vld.sshfl [vmem:[#allocation1 + $0x8] sm:$0xff pattern:$0x75316420]
      %v1533 = vld.sshfl [vmem:[#allocation1 + $0x10] sm:$0xff pattern:$0x75316420]
      %1534 = vrot.lane.b32.xlu0 %v1531, 95
      %v1535 = vpop.permute.xlu0 %1534
      %1536 = vrot.lane.b32.xlu0 %v1532, 95
      %v1537 = vpop.permute.xlu0 %1536
      %1538 = vrot.lane.b32.xlu0 %v1533, 95
      %v1539 = vpop.permute.xlu0 %1538
      %v1540 = vsel %vm478, %v1535, %v1537
      %v1541 = vsel %vm478, %v1537, %v1539
      %1544 = vst [vmem:[#allocation3 + $0x30] sm:$0xf0] %v1540
      %1545 = vst [vmem:[#allocation3 + $0x38] sm:$0xf0] %v1541
      %1546 = vst [vmem:[#allocation3 + $0x40] sm:$0xf] %v1523
      %1547 = vst [vmem:[#allocation3 + $0x48] sm:$0xf] %v1524
      %s1548 = scalar_lea.vmem %s1, 6
      %v1549 = vld [vmem:[%s1548] sm:$0x3]
      %v1550 = vld [vmem:[#allocation3] sm:$0xff]
      %v1551 = vld [vmem:[#allocation3 + $0x8] sm:$0xff]
      %v1552 = vld [vmem:[#allocation3 + $0x10] sm:$0xff]
      %v1553 = vld [vmem:[#allocation3 + $0x18] sm:$0xff]
      %v1554 = vld [vmem:[#allocation3 + $0x20] sm:$0xff]
      %v1555 = vld [vmem:[#allocation3 + $0x28] sm:$0xff]
      %v1556 = vld [vmem:[#allocation3 + $0x30] sm:$0xff]
      %v1557 = vld [vmem:[#allocation3 + $0x38] sm:$0xff]
      %v1558 = vld [vmem:[#allocation3 + $0x40] sm:$0xf]
      %v1559 = vld [vmem:[#allocation3 + $0x48] sm:$0xf]
      %v1560 = vpack.c.bf16 %v1552, %v1550
      %v1561 = vpack.c.bf16 %v1553, %v1551
      %v1562 = vpack.c.bf16 %v1556, %v1554
      %v1563 = vpack.c.bf16 %v1557, %v1555
      %v1564 = vpack.c.bf16 %v1558, %v1558
      %v1565 = vpack.c.bf16 %v1559, %v1559
      %v1567 = vsel %vm504, %v1549, 0
      %v1570 = vsel %vm508, %v1564, 0
      %v1573 = vsel %vm508, %v1565, 0
      %1575 = vmatpush.bf16.msra.mxu0 0
      %1576 = vmatpush.bf16.msra.mxu0 0
      %1577 = vmatpush.bf16.msra.mxu0 0
      %1578 = vmatpush.bf16.msra.mxu0 0
      %1579 = vmatpush.bf16.msra.mxu0 0
      %1580 = vmatpush.bf16.msra.mxu0 %v1570
      %1581 = vmatpush.bf16.msra.mxu0 %v1562
      %1582 = vmatpush.bf16.msra.mxu0 %v1560
      %1583 = vmatmul.bf16.gmra.mxu0 %v1567
      %v1584 = vpop.f32.mrf.mxu0
      %v1585 = vadd.f32 0.0, %v1584
      %v1586 = vpop.f32.mrf.mxu0
      %1587 = vdwg.mxu0
      %1588 = vmatpush.bf16.msra.mxu0 0
      %1589 = vmatpush.bf16.msra.mxu0 0
      %1590 = vmatpush.bf16.msra.mxu0 0
      %1591 = vmatpush.bf16.msra.mxu0 0
      %1592 = vmatpush.bf16.msra.mxu0 0
      %1593 = vmatpush.bf16.msra.mxu0 %v1573
      %1594 = vmatpush.bf16.msra.mxu0 %v1563
      %1595 = vmatpush.bf16.msra.mxu0 %v1561
      %1596 = vmatmul.bf16.gmra.mxu0 %v1567
      %v1597 = vpop.f32.mrf.mxu0
      %v1598 = vadd.f32 0.0, %v1597
      %v1599 = vpop.f32.mrf.mxu0
      %1600 = vdwg.mxu0
      %vm1601 = vcmp.gt.f32.partialorder %v1585, 0.0
      %vm1602 = vcmp.gt.f32.partialorder %v1598, 0.0
      %v1603 = vmul.f32 %v1585, 0.01
      %v1604 = vmul.f32 %v1598, 0.01
      %v1605 = vsel %vm1601, %v1585, %v1603
      %v1606 = vsel %vm1602, %v1598, %v1604
      %v1609 = vrot.slane %v1606, 4
      %v1610 = vsel %vm550, %v1605, %v1609
      %1611 = vrot.lane.b32.xlu0 %v1610, 17
      %v1612 = vpop.permute.xlu0 %1611
      %v1613 = vrot.slane %v1612, 4
      %v1614 = vsel %vm184, %v1613, %v1612
      %1617 = vst.msk [vmem:[#allocation2] sm:$0xff] %vm190, %v1614
      %1618 = vst.msk [vmem:[#allocation2 + $0x8] sm:$0xf] %vm192, %v1613
      %1619 = vrot.lane.b32.xlu0 %v1605, 113
      %v1620 = vpop.permute.xlu0 %1619
      %1622 = vst.msk [vmem:[#allocation2] sm:$0xf] %vm197, %v1620
      %1623 = vrot.lane.b32.xlu0 %v1606, 49
      %v1624 = vpop.permute.xlu0 %1623
      %1626 = vst.msk [vmem:[#allocation2 + $0x8] sm:$0xf] %vm203, %v1624
      %v1627 = vld [vmem:[#allocation2] sm:$0xff]
      %v1628 = vld [vmem:[#allocation2 + $0x8] sm:$0xf]
      %1631 = vst [vmem:[#allocation1] ss:$2 sm:$0xff] %v1627
      %s1632 = scalar_lea.vmem [#allocation1], 16
      %1633 = vst [vmem:[%s1632] ss:$2 sm:$0xff] %v1628
      %v1634 = vld.sshfl [vmem:[#allocation1] sm:$0xff pattern:$0x75316420]
      %v1635 = vld.sshfl [vmem:[#allocation1 + $0x8] sm:$0xff pattern:$0x75316420]
      %v1636 = vld.sshfl [vmem:[#allocation1 + $0x10] sm:$0xff pattern:$0x75316420]
      %1637 = vrot.lane.b32.xlu0 %v1634, 126
      %v1638 = vpop.permute.xlu0 %1637
      %1639 = vrot.lane.b32.xlu0 %v1635, 126
      %v1640 = vpop.permute.xlu0 %1639
      %1641 = vrot.lane.b32.xlu0 %v1636, 126
      %v1642 = vpop.permute.xlu0 %1641
      %v1643 = vsel %vm221, %v1638, %v1640
      %v1644 = vsel %vm221, %v1640, %v1642
      %1647 = vst [vmem:[#allocation1] ss:$2 sm:$0xff] %v1627
      %v1648 = vld.sshfl [vmem:[#allocation1] sm:$0xff pattern:$0x75316420]
      %v1649 = vld.sshfl [vmem:[#allocation1 + $0x8] sm:$0xff pattern:$0x75316420]
      %v1652 = vsel %vm172, %v1643, %v1648
      %v1653 = vsel %vm173, %v1644, %v1649
      %1654 = vst [vmem:[#allocation1] ss:$2 sm:$0xff] %v1627
      %v1655 = vld.sshfl [vmem:[#allocation1] sm:$0xff pattern:$0x75316420]
      %v1656 = vld.sshfl [vmem:[#allocation1 + $0x8] sm:$0xff pattern:$0x75316420]
      %1659 = vst [vmem:[#allocation1] ss:$2 sm:$0xff] %v1627
      %s1660 = scalar_lea.vmem [#allocation1], 16
      %1661 = vst [vmem:[%s1660] ss:$2 sm:$0xff] %v1628
      %v1662 = vld.sshfl [vmem:[#allocation1] sm:$0xff pattern:$0x75316420]
      %v1663 = vld.sshfl [vmem:[#allocation1 + $0x8] sm:$0xff pattern:$0x75316420]
      %v1664 = vld.sshfl [vmem:[#allocation1 + $0x10] sm:$0xff pattern:$0x75316420]
      %1665 = vrot.lane.b32.xlu0 %v1662, 126
      %v1666 = vpop.permute.xlu0 %1665
      %1667 = vrot.lane.b32.xlu0 %v1663, 126
      %v1668 = vpop.permute.xlu0 %1667
      %1669 = vrot.lane.b32.xlu0 %v1664, 126
      %v1670 = vpop.permute.xlu0 %1669
      %v1671 = vsel %vm221, %v1666, %v1668
      %v1672 = vsel %vm221, %v1668, %v1670
      %v1675 = vsel %vm174, %v1655, %v1671
      %v1676 = vsel %vm175, %v1656, %v1672
      %1677 = vst [vmem:[#allocation3] sm:$0xf] %v1652
      %1678 = vst [vmem:[#allocation3 + $0x8] sm:$0xf] %v1653
      %s1679 = scalar_lea.vmem [#allocation1], 1
      %1680 = vst [vmem:[%s1679] ss:$2 sm:$0xff] %v1627
      %s1681 = scalar_lea.vmem [#allocation1], 17
      %1682 = vst [vmem:[%s1681] ss:$2 sm:$0xff] %v1628
      %v1683 = vld.sshfl [vmem:[#allocation1] sm:$0xff pattern:$0x75316420]
      %v1684 = vld.sshfl [vmem:[#allocation1 + $0x8] sm:$0xff pattern:$0x75316420]
      %v1685 = vld.sshfl [vmem:[#allocation1 + $0x10] sm:$0xff pattern:$0x75316420]
      %1686 = vrot.lane.b32.xlu0 %v1683, 127
      %v1687 = vpop.permute.xlu0 %1686
      %1688 = vrot.lane.b32.xlu0 %v1684, 127
      %v1689 = vpop.permute.xlu0 %1688
      %1690 = vrot.lane.b32.xlu0 %v1685, 127
      %v1691 = vpop.permute.xlu0 %1690
      %v1692 = vsel %vm271, %v1687, %v1689
      %v1693 = vsel %vm271, %v1689, %v1691
      %1696 = vst [vmem:[#allocation3] sm:$0xf0] %v1692
      %1697 = vst [vmem:[#allocation3 + $0x8] sm:$0xf0] %v1693
      %1698 = vst [vmem:[#allocation3 + $0x10] sm:$0xf] %v1675
      %1699 = vst [vmem:[#allocation3 + $0x18] sm:$0xf] %v1676
      %v1700 = vld [vmem:[#allocation2] sm:$0xff]
      %v1701 = vld [vmem:[#allocation2 + $0x8] sm:$0xf]
      %1704 = vst [vmem:[#allocation1] ss:$2 sm:$0xff] %v1700
      %s1705 = scalar_lea.vmem [#allocation1], 16
      %1706 = vst [vmem:[%s1705] ss:$2 sm:$0xff] %v1701
      %v1707 = vld.sshfl [vmem:[#allocation1] sm:$0xff pattern:$0x75316420]
      %v1708 = vld.sshfl [vmem:[#allocation1 + $0x8] sm:$0xff pattern:$0x75316420]
      %v1709 = vld.sshfl [vmem:[#allocation1 + $0x10] sm:$0xff pattern:$0x75316420]
      %1710 = vrot.lane.b32.xlu0 %v1707, 110
      %v1711 = vpop.permute.xlu0 %1710
      %1712 = vrot.lane.b32.xlu0 %v1708, 110
      %v1713 = vpop.permute.xlu0 %1712
      %1714 = vrot.lane.b32.xlu0 %v1709, 110
      %v1715 = vpop.permute.xlu0 %1714
      %v1716 = vsel %vm296, %v1711, %v1713
      %v1717 = vsel %vm296, %v1713, %v1715
      %1720 = vst [vmem:[#allocation1] ss:$2 sm:$0xff] %v1700
      %s1721 = scalar_lea.vmem [#allocation1], 16
      %1722 = vst [vmem:[%s1721] ss:$2 sm:$0xff] %v1701
      %v1723 = vld.sshfl [vmem:[#allocation1] sm:$0xff pattern:$0x75316420]
      %v1724 = vld.sshfl [vmem:[#allocation1 + $0x8] sm:$0xff pattern:$0x75316420]
      %v1725 = vld.sshfl [vmem:[#allocation1 + $0x10] sm:$0xff pattern:$0x75316420]
      %1726 = vrot.lane.b32.xlu0 %v1723, 112
      %v1727 = vpop.permute.xlu0 %1726
      %1728 = vrot.lane.b32.xlu0 %v1724, 112
      %v1729 = vpop.permute.xlu0 %1728
      %1730 = vrot.lane.b32.xlu0 %v1725, 112
      %v1731 = vpop.permute.xlu0 %1730
      %v1732 = vsel %vm313, %v1727, %v1729
      %v1733 = vsel %vm313, %v1729, %v1731
      %v1736 = vsel %vm172, %v1716, %v1732
      %v1737 = vsel %vm173, %v1717, %v1733
      %1738 = vst [vmem:[#allocation1] ss:$2 sm:$0xff] %v1700
      %s1739 = scalar_lea.vmem [#allocation1], 16
      %1740 = vst [vmem:[%s1739] ss:$2 sm:$0xff] %v1701
      %v1741 = vld.sshfl [vmem:[#allocation1] sm:$0xff pattern:$0x75316420]
      %v1742 = vld.sshfl [vmem:[#allocation1 + $0x8] sm:$0xff pattern:$0x75316420]
      %v1743 = vld.sshfl [vmem:[#allocation1 + $0x10] sm:$0xff pattern:$0x75316420]
      %1744 = vrot.lane.b32.xlu0 %v1741, 112
      %v1745 = vpop.permute.xlu0 %1744
      %1746 = vrot.lane.b32.xlu0 %v1742, 112
      %v1747 = vpop.permute.xlu0 %1746
      %1748 = vrot.lane.b32.xlu0 %v1743, 112
      %v1749 = vpop.permute.xlu0 %1748
      %v1750 = vsel %vm313, %v1745, %v1747
      %v1751 = vsel %vm313, %v1747, %v1749
      %1754 = vst [vmem:[#allocation1] ss:$2 sm:$0xff] %v1700
      %s1755 = scalar_lea.vmem [#allocation1], 16
      %1756 = vst [vmem:[%s1755] ss:$2 sm:$0xff] %v1701
      %v1757 = vld.sshfl [vmem:[#allocation1] sm:$0xff pattern:$0x75316420]
      %v1758 = vld.sshfl [vmem:[#allocation1 + $0x8] sm:$0xff pattern:$0x75316420]
      %v1759 = vld.sshfl [vmem:[#allocation1 + $0x10] sm:$0xff pattern:$0x75316420]
      %1760 = vrot.lane.b32.xlu0 %v1757, 110
      %v1761 = vpop.permute.xlu0 %1760
      %1762 = vrot.lane.b32.xlu0 %v1758, 110
      %v1763 = vpop.permute.xlu0 %1762
      %1764 = vrot.lane.b32.xlu0 %v1759, 110
      %v1765 = vpop.permute.xlu0 %1764
      %v1766 = vsel %vm296, %v1761, %v1763
      %v1767 = vsel %vm296, %v1763, %v1765
      %v1770 = vsel %vm174, %v1750, %v1766
      %v1771 = vsel %vm175, %v1751, %v1767
      %v1774 = vrot.slane %v1736, 4
      %v1775 = vrot.slane %v1737, 4
      %1778 = vst [vmem:[#allocation3 + $0x10] sm:$0xf0] %v1774
      %1779 = vst [vmem:[#allocation3 + $0x18] sm:$0xf0] %v1775
      %1780 = vst [vmem:[#allocation1] ss:$2 sm:$0xff] %v1700
      %s1781 = scalar_lea.vmem [#allocation1], 16
      %1782 = vst [vmem:[%s1781] ss:$2 sm:$0xff] %v1701
      %v1783 = vld.sshfl [vmem:[#allocation1] sm:$0xff pattern:$0x75316420]
      %v1784 = vld.sshfl [vmem:[#allocation1 + $0x8] sm:$0xff pattern:$0x75316420]
      %v1785 = vld.sshfl [vmem:[#allocation1 + $0x10] sm:$0xff pattern:$0x75316420]
      %1786 = vrot.lane.b32.xlu0 %v1783, 111
      %v1787 = vpop.permute.xlu0 %1786
      %1788 = vrot.lane.b32.xlu0 %v1784, 111
      %v1789 = vpop.permute.xlu0 %1788
      %1790 = vrot.lane.b32.xlu0 %v1785, 111
      %v1791 = vpop.permute.xlu0 %1790
      %v1792 = vsel %vm374, %v1787, %v1789
      %v1793 = vsel %vm374, %v1789, %v1791
      %1796 = vst [vmem:[#allocation3 + $0x20] sm:$0xf] %v1792
      %1797 = vst [vmem:[#allocation3 + $0x28] sm:$0xf] %v1793
      %v1800 = vrot.slane %v1770, 4
      %v1801 = vrot.slane %v1771, 4
      %1804 = vst [vmem:[#allocation3 + $0x20] sm:$0xf0] %v1800
      %1805 = vst [vmem:[#allocation3 + $0x28] sm:$0xf0] %v1801
      %v1806 = vld [vmem:[#allocation2] sm:$0xff]
      %v1807 = vld [vmem:[#allocation2 + $0x8] sm:$0xf]
      %1810 = vst [vmem:[#allocation1] ss:$2 sm:$0xff] %v1806
      %s1811 = scalar_lea.vmem [#allocation1], 16
      %1812 = vst [vmem:[%s1811] ss:$2 sm:$0xff] %v1807
      %v1813 = vld.sshfl [vmem:[#allocation1] sm:$0xff pattern:$0x75316420]
      %v1814 = vld.sshfl [vmem:[#allocation1 + $0x8] sm:$0xff pattern:$0x75316420]
      %v1815 = vld.sshfl [vmem:[#allocation1 + $0x10] sm:$0xff pattern:$0x75316420]
      %1816 = vrot.lane.b32.xlu0 %v1813, 94
      %v1817 = vpop.permute.xlu0 %1816
      %1818 = vrot.lane.b32.xlu0 %v1814, 94
      %v1819 = vpop.permute.xlu0 %1818
      %1820 = vrot.lane.b32.xlu0 %v1815, 94
      %v1821 = vpop.permute.xlu0 %1820
      %v1822 = vsel %vm405, %v1817, %v1819
      %v1823 = vsel %vm405, %v1819, %v1821
      %1826 = vst [vmem:[#allocation1] ss:$2 sm:$0xff] %v1806
      %s1827 = scalar_lea.vmem [#allocation1], 16
      %1828 = vst [vmem:[%s1827] ss:$2 sm:$0xff] %v1807
      %v1829 = vld.sshfl [vmem:[#allocation1] sm:$0xff pattern:$0x75316420]
      %v1830 = vld.sshfl [vmem:[#allocation1 + $0x8] sm:$0xff pattern:$0x75316420]
      %v1831 = vld.sshfl [vmem:[#allocation1 + $0x10] sm:$0xff pattern:$0x75316420]
      %1832 = vrot.lane.b32.xlu0 %v1829, 96
      %v1833 = vpop.permute.xlu0 %1832
      %1834 = vrot.lane.b32.xlu0 %v1830, 96
      %v1835 = vpop.permute.xlu0 %1834
      %1836 = vrot.lane.b32.xlu0 %v1831, 96
      %v1837 = vpop.permute.xlu0 %1836
      %v1838 = vsel %vm422, %v1833, %v1835
      %v1839 = vsel %vm422, %v1835, %v1837
      %v1842 = vsel %vm172, %v1822, %v1838
      %v1843 = vsel %vm173, %v1823, %v1839
      %1844 = vst [vmem:[#allocation1] ss:$2 sm:$0xff] %v1806
      %s1845 = scalar_lea.vmem [#allocation1], 16
      %1846 = vst [vmem:[%s1845] ss:$2 sm:$0xff] %v1807
      %v1847 = vld.sshfl [vmem:[#allocation1] sm:$0xff pattern:$0x75316420]
      %v1848 = vld.sshfl [vmem:[#allocation1 + $0x8] sm:$0xff pattern:$0x75316420]
      %v1849 = vld.sshfl [vmem:[#allocation1 + $0x10] sm:$0xff pattern:$0x75316420]
      %1850 = vrot.lane.b32.xlu0 %v1847, 96
      %v1851 = vpop.permute.xlu0 %1850
      %1852 = vrot.lane.b32.xlu0 %v1848, 96
      %v1853 = vpop.permute.xlu0 %1852
      %1854 = vrot.lane.b32.xlu0 %v1849, 96
      %v1855 = vpop.permute.xlu0 %1854
      %v1856 = vsel %vm422, %v1851, %v1853
      %v1857 = vsel %vm422, %v1853, %v1855
      %1860 = vst [vmem:[#allocation1] ss:$2 sm:$0xff] %v1806
      %s1861 = scalar_lea.vmem [#allocation1], 16
      %1862 = vst [vmem:[%s1861] ss:$2 sm:$0xff] %v1807
      %v1863 = vld.sshfl [vmem:[#allocation1] sm:$0xff pattern:$0x75316420]
      %v1864 = vld.sshfl [vmem:[#allocation1 + $0x8] sm:$0xff pattern:$0x75316420]
      %v1865 = vld.sshfl [vmem:[#allocation1 + $0x10] sm:$0xff pattern:$0x75316420]
      %1866 = vrot.lane.b32.xlu0 %v1863, 94
      %v1867 = vpop.permute.xlu0 %1866
      %1868 = vrot.lane.b32.xlu0 %v1864, 94
      %v1869 = vpop.permute.xlu0 %1868
      %1870 = vrot.lane.b32.xlu0 %v1865, 94
      %v1871 = vpop.permute.xlu0 %1870
      %v1872 = vsel %vm405, %v1867, %v1869
      %v1873 = vsel %vm405, %v1869, %v1871
      %v1876 = vsel %vm174, %v1856, %v1872
      %v1877 = vsel %vm175, %v1857, %v1873
      %1878 = vst [vmem:[#allocation3 + $0x30] sm:$0xf] %v1842
      %1879 = vst [vmem:[#allocation3 + $0x38] sm:$0xf] %v1843
      %s1880 = scalar_lea.vmem [#allocation1], 1
      %1881 = vst [vmem:[%s1880] ss:$2 sm:$0xff] %v1806
      %s1882 = scalar_lea.vmem [#allocation1], 17
      %1883 = vst [vmem:[%s1882] ss:$2 sm:$0xff] %v1807
      %v1884 = vld.sshfl [vmem:[#allocation1] sm:$0xff pattern:$0x75316420]
      %v1885 = vld.sshfl [vmem:[#allocation1 + $0x8] sm:$0xff pattern:$0x75316420]
      %v1886 = vld.sshfl [vmem:[#allocation1 + $0x10] sm:$0xff pattern:$0x75316420]
      %1887 = vrot.lane.b32.xlu0 %v1884, 95
      %v1888 = vpop.permute.xlu0 %1887
      %1889 = vrot.lane.b32.xlu0 %v1885, 95
      %v1890 = vpop.permute.xlu0 %1889
      %1891 = vrot.lane.b32.xlu0 %v1886, 95
      %v1892 = vpop.permute.xlu0 %1891
      %v1893 = vsel %vm478, %v1888, %v1890
      %v1894 = vsel %vm478, %v1890, %v1892
      %1897 = vst [vmem:[#allocation3 + $0x30] sm:$0xf0] %v1893
      %1898 = vst [vmem:[#allocation3 + $0x38] sm:$0xf0] %v1894
      %1899 = vst [vmem:[#allocation3 + $0x40] sm:$0xf] %v1876
      %1900 = vst [vmem:[#allocation3 + $0x48] sm:$0xf] %v1877
      %s1901 = scalar_lea.vmem %s1, 8
      %v1902 = vld [vmem:[%s1901] sm:$0x3]
      %v1903 = vld [vmem:[#allocation3] sm:$0xff]
      %v1904 = vld [vmem:[#allocation3 + $0x8] sm:$0xff]
      %v1905 = vld [vmem:[#allocation3 + $0x10] sm:$0xff]
      %v1906 = vld [vmem:[#allocation3 + $0x18] sm:$0xff]
      %v1907 = vld [vmem:[#allocation3 + $0x20] sm:$0xff]
      %v1908 = vld [vmem:[#allocation3 + $0x28] sm:$0xff]
      %v1909 = vld [vmem:[#allocation3 + $0x30] sm:$0xff]
      %v1910 = vld [vmem:[#allocation3 + $0x38] sm:$0xff]
      %v1911 = vld [vmem:[#allocation3 + $0x40] sm:$0xf]
      %v1912 = vld [vmem:[#allocation3 + $0x48] sm:$0xf]
      %v1913 = vpack.c.bf16 %v1905, %v1903
      %v1914 = vpack.c.bf16 %v1906, %v1904
      %v1915 = vpack.c.bf16 %v1909, %v1907
      %v1916 = vpack.c.bf16 %v1910, %v1908
      %v1917 = vpack.c.bf16 %v1911, %v1911
      %v1918 = vpack.c.bf16 %v1912, %v1912
      %v1920 = vsel %vm504, %v1902, 0
      %v1923 = vsel %vm508, %v1917, 0
      %v1926 = vsel %vm508, %v1918, 0
      %1928 = vmatpush.bf16.msra.mxu0 0
      %1929 = vmatpush.bf16.msra.mxu0 0
      %1930 = vmatpush.bf16.msra.mxu0 0
      %1931 = vmatpush.bf16.msra.mxu0 0
      %1932 = vmatpush.bf16.msra.mxu0 0
      %1933 = vmatpush.bf16.msra.mxu0 %v1923
      %1934 = vmatpush.bf16.msra.mxu0 %v1915
      %1935 = vmatpush.bf16.msra.mxu0 %v1913
      %1936 = vmatmul.bf16.gmra.mxu0 %v1920
      %v1937 = vpop.f32.mrf.mxu0
      %v1938 = vadd.f32 0.0, %v1937
      %v1939 = vpop.f32.mrf.mxu0
      %1940 = vdwg.mxu0
      %1941 = vmatpush.bf16.msra.mxu0 0
      %1942 = vmatpush.bf16.msra.mxu0 0
      %1943 = vmatpush.bf16.msra.mxu0 0
      %1944 = vmatpush.bf16.msra.mxu0 0
      %1945 = vmatpush.bf16.msra.mxu0 0
      %1946 = vmatpush.bf16.msra.mxu0 %v1926
      %1947 = vmatpush.bf16.msra.mxu0 %v1916
      %1948 = vmatpush.bf16.msra.mxu0 %v1914
      %1949 = vmatmul.bf16.gmra.mxu0 %v1920
      %v1950 = vpop.f32.mrf.mxu0
      %v1951 = vadd.f32 0.0, %v1950
      %v1952 = vpop.f32.mrf.mxu0
      %1953 = vdwg.mxu0
      %vm1954 = vcmp.gt.f32.partialorder %v1938, 0.0
      %vm1955 = vcmp.gt.f32.partialorder %v1951, 0.0
      %v1956 = vmul.f32 %v1938, 0.01
      %v1957 = vmul.f32 %v1951, 0.01
      %v1958 = vsel %vm1954, %v1938, %v1956
      %v1959 = vsel %vm1955, %v1951, %v1957
      %v1962 = vrot.slane %v1959, 4
      %v1963 = vsel %vm550, %v1958, %v1962
      %1964 = vrot.lane.b32.xlu0 %v1963, 17
      %v1965 = vpop.permute.xlu0 %1964
      %v1966 = vrot.slane %v1965, 4
      %v1967 = vsel %vm184, %v1966, %v1965
      %1970 = vst.msk [vmem:[#allocation2] sm:$0xff] %vm190, %v1967
      %1971 = vst.msk [vmem:[#allocation2 + $0x8] sm:$0xf] %vm192, %v1966
      %1972 = vrot.lane.b32.xlu0 %v1958, 113
      %v1973 = vpop.permute.xlu0 %1972
      %1975 = vst.msk [vmem:[#allocation2] sm:$0xf] %vm197, %v1973
      %1976 = vrot.lane.b32.xlu0 %v1959, 49
      %v1977 = vpop.permute.xlu0 %1976
      %1979 = vst.msk [vmem:[#allocation2 + $0x8] sm:$0xf] %vm203, %v1977
      %v1980 = vld [vmem:[#allocation2] sm:$0xff]
      %v1981 = vld [vmem:[#allocation2 + $0x8] sm:$0xf]
      %1984 = vst [vmem:[#allocation1] ss:$2 sm:$0xff] %v1980
      %s1985 = scalar_lea.vmem [#allocation1], 16
      %1986 = vst [vmem:[%s1985] ss:$2 sm:$0xff] %v1981
      %v1987 = vld.sshfl [vmem:[#allocation1] sm:$0xff pattern:$0x75316420]
      %v1988 = vld.sshfl [vmem:[#allocation1 + $0x8] sm:$0xff pattern:$0x75316420]
      %v1989 = vld.sshfl [vmem:[#allocation1 + $0x10] sm:$0xff pattern:$0x75316420]
      %1990 = vrot.lane.b32.xlu0 %v1987, 126
      %v1991 = vpop.permute.xlu0 %1990
      %1992 = vrot.lane.b32.xlu0 %v1988, 126
      %v1993 = vpop.permute.xlu0 %1992
      %1994 = vrot.lane.b32.xlu0 %v1989, 126
      %v1995 = vpop.permute.xlu0 %1994
      %v1996 = vsel %vm221, %v1991, %v1993
      %v1997 = vsel %vm221, %v1993, %v1995
      %2000 = vst [vmem:[#allocation1] ss:$2 sm:$0xff] %v1980
      %v2001 = vld.sshfl [vmem:[#allocation1] sm:$0xff pattern:$0x75316420]
      %v2002 = vld.sshfl [vmem:[#allocation1 + $0x8] sm:$0xff pattern:$0x75316420]
      %v2005 = vsel %vm172, %v1996, %v2001
      %v2006 = vsel %vm173, %v1997, %v2002
      %2007 = vst [vmem:[#allocation1] ss:$2 sm:$0xff] %v1980
      %v2008 = vld.sshfl [vmem:[#allocation1] sm:$0xff pattern:$0x75316420]
      %v2009 = vld.sshfl [vmem:[#allocation1 + $0x8] sm:$0xff pattern:$0x75316420]
      %2012 = vst [vmem:[#allocation1] ss:$2 sm:$0xff] %v1980
      %s2013 = scalar_lea.vmem [#allocation1], 16
      %2014 = vst [vmem:[%s2013] ss:$2 sm:$0xff] %v1981
      %v2015 = vld.sshfl [vmem:[#allocation1] sm:$0xff pattern:$0x75316420]
      %v2016 = vld.sshfl [vmem:[#allocation1 + $0x8] sm:$0xff pattern:$0x75316420]
      %v2017 = vld.sshfl [vmem:[#allocation1 + $0x10] sm:$0xff pattern:$0x75316420]
      %2018 = vrot.lane.b32.xlu0 %v2015, 126
      %v2019 = vpop.permute.xlu0 %2018
      %2020 = vrot.lane.b32.xlu0 %v2016, 126
      %v2021 = vpop.permute.xlu0 %2020
      %2022 = vrot.lane.b32.xlu0 %v2017, 126
      %v2023 = vpop.permute.xlu0 %2022
      %v2024 = vsel %vm221, %v2019, %v2021
      %v2025 = vsel %vm221, %v2021, %v2023
      %v2028 = vsel %vm174, %v2008, %v2024
      %v2029 = vsel %vm175, %v2009, %v2025
      %2030 = vst [vmem:[#allocation3] sm:$0xf] %v2005
      %2031 = vst [vmem:[#allocation3 + $0x8] sm:$0xf] %v2006
      %s2032 = scalar_lea.vmem [#allocation1], 1
      %2033 = vst [vmem:[%s2032] ss:$2 sm:$0xff] %v1980
      %s2034 = scalar_lea.vmem [#allocation1], 17
      %2035 = vst [vmem:[%s2034] ss:$2 sm:$0xff] %v1981
      %v2036 = vld.sshfl [vmem:[#allocation1] sm:$0xff pattern:$0x75316420]
      %v2037 = vld.sshfl [vmem:[#allocation1 + $0x8] sm:$0xff pattern:$0x75316420]
      %v2038 = vld.sshfl [vmem:[#allocation1 + $0x10] sm:$0xff pattern:$0x75316420]
      %2039 = vrot.lane.b32.xlu0 %v2036, 127
      %v2040 = vpop.permute.xlu0 %2039
      %2041 = vrot.lane.b32.xlu0 %v2037, 127
      %v2042 = vpop.permute.xlu0 %2041
      %2043 = vrot.lane.b32.xlu0 %v2038, 127
      %v2044 = vpop.permute.xlu0 %2043
      %v2045 = vsel %vm271, %v2040, %v2042
      %v2046 = vsel %vm271, %v2042, %v2044
      %2049 = vst [vmem:[#allocation3] sm:$0xf0] %v2045
      %2050 = vst [vmem:[#allocation3 + $0x8] sm:$0xf0] %v2046
      %2051 = vst [vmem:[#allocation3 + $0x10] sm:$0xf] %v2028
      %2052 = vst [vmem:[#allocation3 + $0x18] sm:$0xf] %v2029
      %v2053 = vld [vmem:[#allocation2] sm:$0xff]
      %v2054 = vld [vmem:[#allocation2 + $0x8] sm:$0xf]
      %2057 = vst [vmem:[#allocation1] ss:$2 sm:$0xff] %v2053
      %s2058 = scalar_lea.vmem [#allocation1], 16
      %2059 = vst [vmem:[%s2058] ss:$2 sm:$0xff] %v2054
      %v2060 = vld.sshfl [vmem:[#allocation1] sm:$0xff pattern:$0x75316420]
      %v2061 = vld.sshfl [vmem:[#allocation1 + $0x8] sm:$0xff pattern:$0x75316420]
      %v2062 = vld.sshfl [vmem:[#allocation1 + $0x10] sm:$0xff pattern:$0x75316420]
      %2063 = vrot.lane.b32.xlu0 %v2060, 110
      %v2064 = vpop.permute.xlu0 %2063
      %2065 = vrot.lane.b32.xlu0 %v2061, 110
      %v2066 = vpop.permute.xlu0 %2065
      %2067 = vrot.lane.b32.xlu0 %v2062, 110
      %v2068 = vpop.permute.xlu0 %2067
      %v2069 = vsel %vm296, %v2064, %v2066
      %v2070 = vsel %vm296, %v2066, %v2068
      %2073 = vst [vmem:[#allocation1] ss:$2 sm:$0xff] %v2053
      %s2074 = scalar_lea.vmem [#allocation1], 16
      %2075 = vst [vmem:[%s2074] ss:$2 sm:$0xff] %v2054
      %v2076 = vld.sshfl [vmem:[#allocation1] sm:$0xff pattern:$0x75316420]
      %v2077 = vld.sshfl [vmem:[#allocation1 + $0x8] sm:$0xff pattern:$0x75316420]
      %v2078 = vld.sshfl [vmem:[#allocation1 + $0x10] sm:$0xff pattern:$0x75316420]
      %2079 = vrot.lane.b32.xlu0 %v2076, 112
      %v2080 = vpop.permute.xlu0 %2079
      %2081 = vrot.lane.b32.xlu0 %v2077, 112
      %v2082 = vpop.permute.xlu0 %2081
      %2083 = vrot.lane.b32.xlu0 %v2078, 112
      %v2084 = vpop.permute.xlu0 %2083
      %v2085 = vsel %vm313, %v2080, %v2082
      %v2086 = vsel %vm313, %v2082, %v2084
      %v2089 = vsel %vm172, %v2069, %v2085
      %v2090 = vsel %vm173, %v2070, %v2086
      %2091 = vst [vmem:[#allocation1] ss:$2 sm:$0xff] %v2053
      %s2092 = scalar_lea.vmem [#allocation1], 16
      %2093 = vst [vmem:[%s2092] ss:$2 sm:$0xff] %v2054
      %v2094 = vld.sshfl [vmem:[#allocation1] sm:$0xff pattern:$0x75316420]
      %v2095 = vld.sshfl [vmem:[#allocation1 + $0x8] sm:$0xff pattern:$0x75316420]
      %v2096 = vld.sshfl [vmem:[#allocation1 + $0x10] sm:$0xff pattern:$0x75316420]
      %2097 = vrot.lane.b32.xlu0 %v2094, 112
      %v2098 = vpop.permute.xlu0 %2097
      %2099 = vrot.lane.b32.xlu0 %v2095, 112
      %v2100 = vpop.permute.xlu0 %2099
      %2101 = vrot.lane.b32.xlu0 %v2096, 112
      %v2102 = vpop.permute.xlu0 %2101
      %v2103 = vsel %vm313, %v2098, %v2100
      %v2104 = vsel %vm313, %v2100, %v2102
      %2107 = vst [vmem:[#allocation1] ss:$2 sm:$0xff] %v2053
      %s2108 = scalar_lea.vmem [#allocation1], 16
      %2109 = vst [vmem:[%s2108] ss:$2 sm:$0xff] %v2054
      %v2110 = vld.sshfl [vmem:[#allocation1] sm:$0xff pattern:$0x75316420]
      %v2111 = vld.sshfl [vmem:[#allocation1 + $0x8] sm:$0xff pattern:$0x75316420]
      %v2112 = vld.sshfl [vmem:[#allocation1 + $0x10] sm:$0xff pattern:$0x75316420]
      %2113 = vrot.lane.b32.xlu0 %v2110, 110
      %v2114 = vpop.permute.xlu0 %2113
      %2115 = vrot.lane.b32.xlu0 %v2111, 110
      %v2116 = vpop.permute.xlu0 %2115
      %2117 = vrot.lane.b32.xlu0 %v2112, 110
      %v2118 = vpop.permute.xlu0 %2117
      %v2119 = vsel %vm296, %v2114, %v2116
      %v2120 = vsel %vm296, %v2116, %v2118
      %v2123 = vsel %vm174, %v2103, %v2119
      %v2124 = vsel %vm175, %v2104, %v2120
      %v2127 = vrot.slane %v2089, 4
      %v2128 = vrot.slane %v2090, 4
      %2131 = vst [vmem:[#allocation3 + $0x10] sm:$0xf0] %v2127
      %2132 = vst [vmem:[#allocation3 + $0x18] sm:$0xf0] %v2128
      %2133 = vst [vmem:[#allocation1] ss:$2 sm:$0xff] %v2053
      %s2134 = scalar_lea.vmem [#allocation1], 16
      %2135 = vst [vmem:[%s2134] ss:$2 sm:$0xff] %v2054
      %v2136 = vld.sshfl [vmem:[#allocation1] sm:$0xff pattern:$0x75316420]
      %v2137 = vld.sshfl [vmem:[#allocation1 + $0x8] sm:$0xff pattern:$0x75316420]
      %v2138 = vld.sshfl [vmem:[#allocation1 + $0x10] sm:$0xff pattern:$0x75316420]
      %2139 = vrot.lane.b32.xlu0 %v2136, 111
      %v2140 = vpop.permute.xlu0 %2139
      %2141 = vrot.lane.b32.xlu0 %v2137, 111
      %v2142 = vpop.permute.xlu0 %2141
      %2143 = vrot.lane.b32.xlu0 %v2138, 111
      %v2144 = vpop.permute.xlu0 %2143
      %v2145 = vsel %vm374, %v2140, %v2142
      %v2146 = vsel %vm374, %v2142, %v2144
      %2149 = vst [vmem:[#allocation3 + $0x20] sm:$0xf] %v2145
      %2150 = vst [vmem:[#allocation3 + $0x28] sm:$0xf] %v2146
      %v2153 = vrot.slane %v2123, 4
      %v2154 = vrot.slane %v2124, 4
      %2157 = vst [vmem:[#allocation3 + $0x20] sm:$0xf0] %v2153
      %2158 = vst [vmem:[#allocation3 + $0x28] sm:$0xf0] %v2154
      %v2159 = vld [vmem:[#allocation2] sm:$0xff]
      %v2160 = vld [vmem:[#allocation2 + $0x8] sm:$0xf]
      %2163 = vst [vmem:[#allocation1] ss:$2 sm:$0xff] %v2159
      %s2164 = scalar_lea.vmem [#allocation1], 16
      %2165 = vst [vmem:[%s2164] ss:$2 sm:$0xff] %v2160
      %v2166 = vld.sshfl [vmem:[#allocation1] sm:$0xff pattern:$0x75316420]
      %v2167 = vld.sshfl [vmem:[#allocation1 + $0x8] sm:$0xff pattern:$0x75316420]
      %v2168 = vld.sshfl [vmem:[#allocation1 + $0x10] sm:$0xff pattern:$0x75316420]
      %2169 = vrot.lane.b32.xlu0 %v2166, 94
      %v2170 = vpop.permute.xlu0 %2169
      %2171 = vrot.lane.b32.xlu0 %v2167, 94
      %v2172 = vpop.permute.xlu0 %2171
      %2173 = vrot.lane.b32.xlu0 %v2168, 94
      %v2174 = vpop.permute.xlu0 %2173
      %v2175 = vsel %vm405, %v2170, %v2172
      %v2176 = vsel %vm405, %v2172, %v2174
      %2179 = vst [vmem:[#allocation1] ss:$2 sm:$0xff] %v2159
      %s2180 = scalar_lea.vmem [#allocation1], 16
      %2181 = vst [vmem:[%s2180] ss:$2 sm:$0xff] %v2160
      %v2182 = vld.sshfl [vmem:[#allocation1] sm:$0xff pattern:$0x75316420]
      %v2183 = vld.sshfl [vmem:[#allocation1 + $0x8] sm:$0xff pattern:$0x75316420]
      %v2184 = vld.sshfl [vmem:[#allocation1 + $0x10] sm:$0xff pattern:$0x75316420]
      %2185 = vrot.lane.b32.xlu0 %v2182, 96
      %v2186 = vpop.permute.xlu0 %2185
      %2187 = vrot.lane.b32.xlu0 %v2183, 96
      %v2188 = vpop.permute.xlu0 %2187
      %2189 = vrot.lane.b32.xlu0 %v2184, 96
      %v2190 = vpop.permute.xlu0 %2189
      %v2191 = vsel %vm422, %v2186, %v2188
      %v2192 = vsel %vm422, %v2188, %v2190
      %v2195 = vsel %vm172, %v2175, %v2191
      %v2196 = vsel %vm173, %v2176, %v2192
      %2197 = vst [vmem:[#allocation1] ss:$2 sm:$0xff] %v2159
      %s2198 = scalar_lea.vmem [#allocation1], 16
      %2199 = vst [vmem:[%s2198] ss:$2 sm:$0xff] %v2160
      %v2200 = vld.sshfl [vmem:[#allocation1] sm:$0xff pattern:$0x75316420]
      %v2201 = vld.sshfl [vmem:[#allocation1 + $0x8] sm:$0xff pattern:$0x75316420]
      %v2202 = vld.sshfl [vmem:[#allocation1 + $0x10] sm:$0xff pattern:$0x75316420]
      %2203 = vrot.lane.b32.xlu0 %v2200, 96
      %v2204 = vpop.permute.xlu0 %2203
      %2205 = vrot.lane.b32.xlu0 %v2201, 96
      %v2206 = vpop.permute.xlu0 %2205
      %2207 = vrot.lane.b32.xlu0 %v2202, 96
      %v2208 = vpop.permute.xlu0 %2207
      %v2209 = vsel %vm422, %v2204, %v2206
      %v2210 = vsel %vm422, %v2206, %v2208
      %2213 = vst [vmem:[#allocation1] ss:$2 sm:$0xff] %v2159
      %s2214 = scalar_lea.vmem [#allocation1], 16
      %2215 = vst [vmem:[%s2214] ss:$2 sm:$0xff] %v2160
      %v2216 = vld.sshfl [vmem:[#allocation1] sm:$0xff pattern:$0x75316420]
      %v2217 = vld.sshfl [vmem:[#allocation1 + $0x8] sm:$0xff pattern:$0x75316420]
      %v2218 = vld.sshfl [vmem:[#allocation1 + $0x10] sm:$0xff pattern:$0x75316420]
      %2219 = vrot.lane.b32.xlu0 %v2216, 94
      %v2220 = vpop.permute.xlu0 %2219
      %2221 = vrot.lane.b32.xlu0 %v2217, 94
      %v2222 = vpop.permute.xlu0 %2221
      %2223 = vrot.lane.b32.xlu0 %v2218, 94
      %v2224 = vpop.permute.xlu0 %2223
      %v2225 = vsel %vm405, %v2220, %v2222
      %v2226 = vsel %vm405, %v2222, %v2224
      %v2229 = vsel %vm174, %v2209, %v2225
      %v2230 = vsel %vm175, %v2210, %v2226
      %2231 = vst [vmem:[#allocation3 + $0x30] sm:$0xf] %v2195
      %2232 = vst [vmem:[#allocation3 + $0x38] sm:$0xf] %v2196
      %s2233 = scalar_lea.vmem [#allocation1], 1
      %2234 = vst [vmem:[%s2233] ss:$2 sm:$0xff] %v2159
      %s2235 = scalar_lea.vmem [#allocation1], 17
      %2236 = vst [vmem:[%s2235] ss:$2 sm:$0xff] %v2160
      %v2237 = vld.sshfl [vmem:[#allocation1] sm:$0xff pattern:$0x75316420]
      %v2238 = vld.sshfl [vmem:[#allocation1 + $0x8] sm:$0xff pattern:$0x75316420]
      %v2239 = vld.sshfl [vmem:[#allocation1 + $0x10] sm:$0xff pattern:$0x75316420]
      %2240 = vrot.lane.b32.xlu0 %v2237, 95
      %v2241 = vpop.permute.xlu0 %2240
      %2242 = vrot.lane.b32.xlu0 %v2238, 95
      %v2243 = vpop.permute.xlu0 %2242
      %2244 = vrot.lane.b32.xlu0 %v2239, 95
      %v2245 = vpop.permute.xlu0 %2244
      %v2246 = vsel %vm478, %v2241, %v2243
      %v2247 = vsel %vm478, %v2243, %v2245
      %2250 = vst [vmem:[#allocation3 + $0x30] sm:$0xf0] %v2246
      %2251 = vst [vmem:[#allocation3 + $0x38] sm:$0xf0] %v2247
      %2252 = vst [vmem:[#allocation3 + $0x40] sm:$0xf] %v2229
      %2253 = vst [vmem:[#allocation3 + $0x48] sm:$0xf] %v2230
      %s2254 = scalar_lea.vmem %s1, 10
      %v2255 = vld [vmem:[%s2254] sm:$0x3]
      %v2256 = vld [vmem:[#allocation3] sm:$0xff]
      %v2257 = vld [vmem:[#allocation3 + $0x8] sm:$0xff]
      %v2258 = vld [vmem:[#allocation3 + $0x10] sm:$0xff]
      %v2259 = vld [vmem:[#allocation3 + $0x18] sm:$0xff]
      %v2260 = vld [vmem:[#allocation3 + $0x20] sm:$0xff]
      %v2261 = vld [vmem:[#allocation3 + $0x28] sm:$0xff]
      %v2262 = vld [vmem:[#allocation3 + $0x30] sm:$0xff]
      %v2263 = vld [vmem:[#allocation3 + $0x38] sm:$0xff]
      %v2264 = vld [vmem:[#allocation3 + $0x40] sm:$0xf]
      %v2265 = vld [vmem:[#allocation3 + $0x48] sm:$0xf]
      %v2266 = vpack.c.bf16 %v2258, %v2256
      %v2267 = vpack.c.bf16 %v2259, %v2257
      %v2268 = vpack.c.bf16 %v2262, %v2260
      %v2269 = vpack.c.bf16 %v2263, %v2261
      %v2270 = vpack.c.bf16 %v2264, %v2264
      %v2271 = vpack.c.bf16 %v2265, %v2265
      %v2273 = vsel %vm504, %v2255, 0
      %v2276 = vsel %vm508, %v2270, 0
      %v2279 = vsel %vm508, %v2271, 0
      %2281 = vmatpush.bf16.msra.mxu0 0
      %2282 = vmatpush.bf16.msra.mxu0 0
      %2283 = vmatpush.bf16.msra.mxu0 0
      %2284 = vmatpush.bf16.msra.mxu0 0
      %2285 = vmatpush.bf16.msra.mxu0 0
      %2286 = vmatpush.bf16.msra.mxu0 %v2276
      %2287 = vmatpush.bf16.msra.mxu0 %v2268
      %2288 = vmatpush.bf16.msra.mxu0 %v2266
      %2289 = vmatmul.bf16.gmra.mxu0 %v2273
      %v2290 = vpop.f32.mrf.mxu0
      %v2291 = vadd.f32 0.0, %v2290
      %v2292 = vpop.f32.mrf.mxu0
      %2293 = vdwg.mxu0
      %2294 = vmatpush.bf16.msra.mxu0 0
      %2295 = vmatpush.bf16.msra.mxu0 0
      %2296 = vmatpush.bf16.msra.mxu0 0
      %2297 = vmatpush.bf16.msra.mxu0 0
      %2298 = vmatpush.bf16.msra.mxu0 0
      %2299 = vmatpush.bf16.msra.mxu0 %v2279
      %2300 = vmatpush.bf16.msra.mxu0 %v2269
      %2301 = vmatpush.bf16.msra.mxu0 %v2267
      %2302 = vmatmul.bf16.gmra.mxu0 %v2273
      %v2303 = vpop.f32.mrf.mxu0
      %v2304 = vadd.f32 0.0, %v2303
      %v2305 = vpop.f32.mrf.mxu0
      %2306 = vdwg.mxu0
      %v2309 = vrot.slane %v2304, 4
      %v2310 = vsel %vm550, %v2291, %v2309
      %2312 = vst [vmem:[%s143] sm:$0xff] %v2310
      %p2313 = scmp.lt.s32.totalorder %s13, 1
      %s2314 = scalar_select %p2313, %s13, 1
      %s2315 = smul.addr %s2314, 2
      %s2316 = smul.addr %s2315, 4
      %s2317 = scalar_lea.vmem %s2, %s2316
      // Predicated region
      $region29: #{multi_conv_block_forward.1} parent=27 // pred_check
        %p2318 = pneg %p78
      $region30: #{multi_conv_block_forward.1} parent=27 // pred_check_branch
        %2320 = sbr.rel (%p2318) target = $region32
      $region31: #{multi_conv_block_forward.1} parent=27 // pred_region
        _
      $region32: #{multi_conv_block_forward.1} parent=27 // pred_fallthru
        _
    $region28: #{multi_conv_block_forward.1} parent=5 // pred_fallthru
      _
    %p2321 = scmp.le.s32.totalorder 2, %s8
    // Predicated region
    $region33: #{multi_conv_block_forward.1} parent=5 // pred_check
      %p2322 = pneg %p2321
    $region34: #{multi_conv_block_forward.1} parent=5 // pred_check_branch
      %2324 = sbr.rel (%p2322) target = $region36
    $region35: #{multi_conv_block_forward.1} parent=5 // pred_region
      %s2325 = ssub.s32 %s8, 2
      // Predicated region
      $region37: #{multi_conv_block_forward.1} parent=35 // pred_check
        %p2326 = pneg %p84
      $region38: #{multi_conv_block_forward.1} parent=35 // pred_check_branch
        %2328 = sbr.rel (%p2326) target = $region40
      $region39: #{multi_conv_block_forward.1} parent=35 // pred_region
        %p2329 = scmp.lt.s32.totalorder %s14, 1
        %s2330 = scalar_select %p2329, %s14, 1
        %s2331 = smul.addr %s2330, 2
        %s2332 = smul.addr %s2331, 4
        %s2333 = scalar_lea.vmem %s2, %s2332
      $region40: #{multi_conv_block_forward.1} parent=35 // pred_fallthru
        _
    $region36: #{multi_conv_block_forward.1} parent=5 // pred_fallthru
      _
  $region6: #{multi_conv_block_forward.1} parent=0 // loop_footer
    %s12 = sadd.s32 1, %s8
  $region7: #{multi_conv_block_forward.1} parent=0 // loop_footer_branch
    %7 = sbr.rel target = $region3
  $region8: #{multi_conv_block_forward.1} parent=0 // loop_exit
    _

</llo_original>
